<compile_context>
chip_gen: v7x
topology: tpu7x:2x2x1
jax: 0.10.0
libtpu: 0.0.40
codegen_flags: <defaults>
</compile_context>

<pallas_src>
import jax
import jax.numpy as jnp
from jax.experimental import pallas as pl
from jax.experimental.pallas import tpu as pltpu

BN_EPS = 1e-5


def fused_mul_conv1x1_bn_kernel(x_ref, gate_ref, w_ref, gamma_ref, beta_ref, o_ref):
    # x_ref    : (Cin, HW)        bf16
    # gate_ref : (Cin, 1)         bf16
    # w_ref    : (COUT_BLK, Cin)  bf16
    # gamma_ref/beta_ref : (COUT_BLK, 1) f32
    # o_ref    : (COUT_BLK, HW)   f32
    xg = x_ref[...] * gate_ref[...]                       # VPU broadcast multiply (bf16)
    y = jnp.dot(w_ref[...], xg,                           # MXU, f32 accumulation
                preferred_element_type=jnp.float32)       # (COUT_BLK, HW)

    # BatchNorm (training mode): per-output-channel batch stats over the spatial axis.
    # Single pass: mean and E[y^2] together; var = E[y^2] - mean^2 (fine with eps=1e-5).
    inv_hw = 1.0 / y.shape[1]
    mean = jnp.sum(y, axis=1, keepdims=True) * inv_hw
    mean_sq = jnp.sum(y * y, axis=1, keepdims=True) * inv_hw
    var = mean_sq - mean * mean

    # Fold BN into one scale/shift so the wide (COUT_BLK, HW) pass is a single mul+add.
    scale = jax.lax.rsqrt(var + BN_EPS) * gamma_ref[...]
    shift = beta_ref[...] - mean * scale
    o_ref[...] = y * scale + shift


def mul_conv1x1_bn(x_nchw, gate_nc11, w_oihw, gamma, beta, *, cout_block=128):
    N, Cin, H, W = x_nchw.shape
    Cout = w_oihw.shape[0]
    HW = H * W
    # TODO(synk): N > 1 needs a batch grid axis / (Cin, N*HW) layout plan; the module uses N=1.
    assert N == 1, "transpose-free (Cout, HW) formulation assumes batch size 1"

    # Layout glue: all reshapes below are contiguous (free); no transposes.
    x2 = x_nchw.reshape(Cin, HW).astype(jnp.bfloat16)        # (Cin, HW)
    g2 = gate_nc11.reshape(Cin, 1).astype(jnp.bfloat16)      # (Cin, 1)
    w2 = w_oihw.reshape(Cout, Cin).astype(jnp.bfloat16)      # (Cout, Cin)
    gamma2 = gamma.reshape(Cout, 1).astype(jnp.float32)
    beta2 = beta.reshape(Cout, 1).astype(jnp.float32)

    n_blk = pl.cdiv(Cout, cout_block)                        # ragged tail handled by Pallas

    cost = pl.CostEstimate(
        flops=2 * HW * Cin * Cout,
        transcendentals=Cout,
        bytes_accessed=(Cin * HW * 2 + Cin * 2 + Cout * Cin * 2
                        + 2 * Cout * 4 + Cout * HW * 4),
    )

    out = pl.pallas_call(
        fused_mul_conv1x1_bn_kernel,
        out_shape=jax.ShapeDtypeStruct((Cout, HW), jnp.float32),
        grid=(n_blk,),
        in_specs=[
            pl.BlockSpec((Cin, HW), lambda i: (0, 0)),          # x: resident across blocks
            pl.BlockSpec((Cin, 1), lambda i: (0, 0)),           # gate
            pl.BlockSpec((cout_block, Cin), lambda i: (i, 0)),  # weight block
            pl.BlockSpec((cout_block, 1), lambda i: (i, 0)),    # gamma block
            pl.BlockSpec((cout_block, 1), lambda i: (i, 0)),    # beta block
        ],
        out_specs=pl.BlockSpec((cout_block, HW), lambda i: (i, 0)),
        compiler_params=pltpu.CompilerParams(dimension_semantics=("parallel",)),
        cost_estimate=cost,
    )(x2, g2, w2, gamma2, beta2)

    # (Cout, HW) -> (1, Cout, H, W): contiguous reshape, free.
    return out.reshape(N, Cout, H, W)


def _reference_bf16(x_nchw, gate_nc11, w_oihw, gamma, beta):
    """Plain-JAX reference using the same bf16 input cast as the kernel (tight check)."""
    N, Cin, H, W = x_nchw.shape
    Cout = w_oihw.shape[0]
    xb = x_nchw.astype(jnp.bfloat16).reshape(Cin, H * W)
    gb = gate_nc11.astype(jnp.bfloat16).reshape(Cin, 1)
    wb = w_oihw.astype(jnp.bfloat16).reshape(Cout, Cin)
    y = jnp.dot(wb, xb * gb, preferred_element_type=jnp.float32)
    mean = jnp.mean(y, axis=1, keepdims=True)
    var = jnp.mean(jnp.square(y - mean), axis=1, keepdims=True)
    out = (y - mean) * jax.lax.rsqrt(var + BN_EPS) * gamma[:, None] + beta[:, None]
    return out.reshape(N, Cout, H, W)


def _reference_f32(x_nchw, gate_nc11, w_oihw, gamma, beta):
    """Full-precision reference of the original PyTorch forward (loose semantic check)."""
    N, Cin, H, W = x_nchw.shape
    Cout = w_oihw.shape[0]
    xg = (x_nchw * gate_nc11).reshape(Cin, H * W)
    y = jnp.dot(w_oihw.reshape(Cout, Cin), xg,
                preferred_element_type=jnp.float32,
                precision=jax.lax.Precision.HIGHEST)
    mean = jnp.mean(y, axis=1, keepdims=True)
    var = jnp.mean(jnp.square(y - mean), axis=1, keepdims=True)
    out = (y - mean) * jax.lax.rsqrt(var + BN_EPS) * gamma[:, None] + beta[:, None]
    return out.reshape(N, Cout, H, W)


if __name__ == "__main__":
    N, Cin, H, W, Cout = 1, 864, 14, 14, 200

    key = jax.random.PRNGKey(0)
    k1, k2, k3, k4, k5 = jax.random.split(key, 5)

    # Inputs as in the module: x344 (1, 864, 14, 14), x349 (1, 864, 1, 1).
    x344 = jax.random.normal(k1, (N, Cin, H, W), dtype=jnp.float32)
    x349 = jax.random.normal(k2, (N, Cin, 1, 1), dtype=jnp.float32)

    # Deterministic parameter init (shapes from the module __init__).
    w_conv = jax.random.normal(k3, (Cout, Cin, 1, 1), dtype=jnp.float32) / jnp.sqrt(
        jnp.float32(Cin)
    )
    bn_gamma = 1.0 + 0.1 * jax.random.normal(k4, (Cout,), dtype=jnp.float32)
    bn_beta = 0.1 * jax.random.normal(k5, (Cout,), dtype=jnp.float32)

    fn = jax.jit(mul_conv1x1_bn, static_argnames=("cout_block",))
    out = jax.block_until_ready(fn(x344, x349, w_conv, bn_gamma, bn_beta))
    assert out.shape == (N, Cout, H, W), out.shape

    # Tight check against a reference that uses the same bf16 input rounding.
    ref_b = jax.block_until_ready(_reference_bf16(x344, x349, w_conv, bn_gamma, bn_beta))
    err_b = float(jnp.max(jnp.abs(out - ref_b)))
    assert jnp.allclose(out, ref_b, rtol=2e-3, atol=2e-3), err_b

    # Loose check against the full-f32 semantics of the original PyTorch module.
    ref_f = jax.block_until_ready(_reference_f32(x344, x349, w_conv, bn_gamma, bn_beta))
    err_f = float(jnp.max(jnp.abs(out - ref_f)))
    assert jnp.allclose(out, ref_f, rtol=5e-2, atol=5e-2), err_f

    print("KERNEL_OK")
</pallas_src>

<mosaic_0001>
module attributes {stable_mosaic.version = 11 : i64} {
  func.func @fused_mul_conv1x1_bn_kernel(%arg0: i32, %arg1: memref<864x196xbf16, #tpu.memory_space<vmem>>, %arg2: memref<864x1xbf16, #tpu.memory_space<vmem>>, %arg3: memref<128x864xbf16, #tpu.memory_space<vmem>>, %arg4: memref<128x1xf32, #tpu.memory_space<vmem>>, %arg5: memref<128x1xf32, #tpu.memory_space<vmem>>, %arg6: memref<128x196xf32, #tpu.memory_space<vmem>>) attributes {dimension_semantics = [#tpu.dimension_semantics<parallel>], iteration_bounds = array<i64: 2>, scalar_prefetch = 0 : i64, scratch_operands = 0 : i64, tpu.core_type = #tpu.core_type<tc>, window_params = [{pipeline_mode = #tpu.pipeline_mode<synchronous>, transform_indices = @transform_0, window_bounds = array<i64: 864, 196>}, {pipeline_mode = #tpu.pipeline_mode<synchronous>, transform_indices = @transform_1, window_bounds = array<i64: 864, 1>}, {transform_indices = @transform_2, window_bounds = array<i64: 128, 864>}, {transform_indices = @transform_3, window_bounds = array<i64: 128, 1>}, {transform_indices = @transform_4, window_bounds = array<i64: 128, 1>}, {transform_indices = @transform_5, window_bounds = array<i64: 128, 196>}]} {
    %c0 = arith.constant 0 : index
    %c0_0 = arith.constant 0 : index
    %0 = vector.load %arg1[%c0, %c0_0] : memref<864x196xbf16, #tpu.memory_space<vmem>>, vector<864x196xbf16>
    %c0_1 = arith.constant 0 : index
    %c0_2 = arith.constant 0 : index
    %1 = vector.load %arg2[%c0_1, %c0_2] : memref<864x1xbf16, #tpu.memory_space<vmem>>, vector<864x1xbf16>
    %2 = vector.broadcast %1 : vector<864x1xbf16> to vector<864x196xbf16>
    %3 = arith.mulf %0, %2 : vector<864x196xbf16>
    %c0_3 = arith.constant 0 : index
    %c0_4 = arith.constant 0 : index
    %4 = vector.load %arg3[%c0_3, %c0_4] : memref<128x864xbf16, #tpu.memory_space<vmem>>, vector<128x864xbf16>
    %cst = arith.constant dense<0.000000e+00> : vector<128x196xf32>
    %5 = tpu.matmul %4, %3, %cst {dimension_numbers = #tpu.dot_dimension_numbers<[1], [0], [0], [1], [0, 0, 1, 1], [], []>} : vector<128x864xbf16>, vector<864x196xbf16>, vector<128x196xf32> -> vector<128x196xf32>
    %cst_5 = arith.constant dense<0.000000e+00> : vector<128xf32>
    %6 = vector.multi_reduction <add>, %5, %cst_5 [1] : vector<128x196xf32> to vector<128xf32>
    %7 = vector.shape_cast %6 : vector<128xf32> to vector<128x1xf32>
    %cst_6 = arith.constant 0.00510204071 : f32
    %8 = vector.broadcast %cst_6 : f32 to vector<128x1xf32>
    %9 = arith.mulf %7, %8 : vector<128x1xf32>
    %10 = arith.mulf %5, %5 : vector<128x196xf32>
    %cst_7 = arith.constant dense<0.000000e+00> : vector<128xf32>
    %11 = vector.multi_reduction <add>, %10, %cst_7 [1] : vector<128x196xf32> to vector<128xf32>
    %12 = vector.shape_cast %11 : vector<128xf32> to vector<128x1xf32>
    %cst_8 = arith.constant 0.00510204071 : f32
    %13 = vector.broadcast %cst_8 : f32 to vector<128x1xf32>
    %14 = arith.mulf %12, %13 : vector<128x1xf32>
    %15 = arith.mulf %9, %9 : vector<128x1xf32>
    %16 = arith.subf %14, %15 : vector<128x1xf32>
    %cst_9 = arith.constant 9.99999974E-6 : f32
    %17 = vector.broadcast %cst_9 : f32 to vector<128x1xf32>
    %18 = arith.addf %16, %17 : vector<128x1xf32>
    %19 = math.rsqrt %18 : vector<128x1xf32>
    %c0_10 = arith.constant 0 : index
    %c0_11 = arith.constant 0 : index
    %20 = vector.load %arg4[%c0_10, %c0_11] : memref<128x1xf32, #tpu.memory_space<vmem>>, vector<128x1xf32>
    %21 = arith.mulf %19, %20 : vector<128x1xf32>
    %c0_12 = arith.constant 0 : index
    %c0_13 = arith.constant 0 : index
    %22 = vector.load %arg5[%c0_12, %c0_13] : memref<128x1xf32, #tpu.memory_space<vmem>>, vector<128x1xf32>
    %23 = arith.mulf %9, %21 : vector<128x1xf32>
    %24 = arith.subf %22, %23 : vector<128x1xf32>
    %25 = vector.broadcast %21 : vector<128x1xf32> to vector<128x196xf32>
    %26 = arith.mulf %5, %25 : vector<128x196xf32>
    %27 = vector.broadcast %24 : vector<128x1xf32> to vector<128x196xf32>
    %28 = arith.addf %26, %27 : vector<128x196xf32>
    %c0_14 = arith.constant 0 : index
    %c0_15 = arith.constant 0 : index
    %29 = vector.load %arg6[%c0_14, %c0_15] : memref<128x196xf32, #tpu.memory_space<vmem>>, vector<128x196xf32>
    tpu.vector_store %arg6[%c0_14, %c0_15], %28 {strides = array<i32>} : memref<128x196xf32, #tpu.memory_space<vmem>>, vector<128x196xf32>,
    return
  }
  func.func @transform_0(%arg0: i32) -> (i32, i32) {
    %c0_i32 = arith.constant 0 : i32
    %c0_i32_0 = arith.constant 0 : i32
    %c0_i32_1 = arith.constant 0 : i32
    return %c0_i32, %c0_i32_0 : i32, i32
  }
  func.func @transform_1(%arg0: i32) -> (i32, i32) {
    %c0_i32 = arith.constant 0 : i32
    %c0_i32_0 = arith.constant 0 : i32
    %c0_i32_1 = arith.constant 0 : i32
    return %c0_i32, %c0_i32_0 : i32, i32
  }
  func.func @transform_2(%arg0: i32) -> (i32, i32) {
    %c0_i32 = arith.constant 0 : i32
    %c0_i32_0 = arith.constant 0 : i32
    return %arg0, %c0_i32 : i32, i32
  }
  func.func @transform_3(%arg0: i32) -> (i32, i32) {
    %c0_i32 = arith.constant 0 : i32
    %c0_i32_0 = arith.constant 0 : i32
    return %arg0, %c0_i32 : i32, i32
  }
  func.func @transform_4(%arg0: i32) -> (i32, i32) {
    %c0_i32 = arith.constant 0 : i32
    %c0_i32_0 = arith.constant 0 : i32
    return %arg0, %c0_i32 : i32, i32
  }
  func.func @transform_5(%arg0: i32) -> (i32, i32) {
    %c0_i32 = arith.constant 0 : i32
    %c0_i32_0 = arith.constant 0 : i32
    return %arg0, %c0_i32 : i32, i32
  }
}

</mosaic_0001>

<llo_original>
// kernel: mul_conv1x1_bn.1
$region0: #{mul_conv1x1_bn.1}
  #allocation0 [shape = 'u32[]', space=smem, size = 0x4, offset = 0x4, fixed_abs, tag = 'smem constant byte address 0x4 - core index']
  #allocation1 [shape = 'u32[144,128]{1,0:T(1,128)}', space=vmem, size = 0x12000, scoped, tag = 'internal scratch']
  %s0 = inlined_call_operand.vmem [shape: bf16[864,196], index: 0, kind: input, shape index: {}]
  %s1 = inlined_call_operand.vmem [shape: bf16[864,1], index: 1, kind: input, shape index: {}]
  %s2 = inlined_call_operand.vmem [shape: bf16[200,864], index: 2, kind: input, shape index: {}]
  %s3 = inlined_call_operand.vmem [shape: f32[200,1], index: 3, kind: input, shape index: {}]
  %s4 = inlined_call_operand.vmem [shape: f32[200,1], index: 4, kind: input, shape index: {}]
  %s5 = inlined_call_operand.vmem [shape: f32[200,196], index: 5, kind: output, shape index: {}]
  %s6 = sld [smem:[#allocation0]]
  $region79: #{mul_conv1x1_bn.1} parent=0
    _
  %s8 = ssub.s32 1, %s6
  %s9 = scalar_select 0, %s8, %s6
  $region1: #{mul_conv1x1_bn.1} parent=0
    #allocation2 [shape = 'u8[262144]{0}', space=vmem, size = 0x40000, scoped, tag = 'output window, operand 0']
    loop: start=0, step=1, limit=4
    $region2: #{mul_conv1x1_bn.1} parent=1 // loop_pre_header
      _
    $region3: #{mul_conv1x1_bn.1} parent=1 // loop_header
      %s11 = sphi 0, %s15
      %p12 = scmp.ge.s32.totalorder %s11, 4
      %s19 = sphi 0, %s19
      %s21 = sphi 0, %s19
      %s22 = sphi 0, %s21
      %s36 = sphi 0, %s22
      %s40 = sphi 0, %s40
      %s42 = sphi 0, %s40
      %s43 = sphi 0, %s42
      %s57 = sphi 0, %s43
      %s63 = sphi 0, %s65
      %s66 = sphi 0, %s63
      %s67 = sphi 0, %s66
      %s83 = sphi 0, %s67
      %s89 = sphi 0, %s91
      %s92 = sphi 0, %s89
      %s93 = sphi 0, %s92
      %s109 = sphi 0, %s93
      %s115 = sphi 0, %s117
      %s118 = sphi 0, %s115
      %s119 = sphi 0, %s118
      %s135 = sphi 0, %s119
      %s141 = sphi 0, %s143
      %s144 = sphi 0, %s141
      %s145 = sphi 0, %s144
      %s161 = sphi 0, %s145
    $region4: #{mul_conv1x1_bn.1} parent=1 // loop_header_branch
      %14 = sbr.rel (%p12) target = $region8
    $region5: #{mul_conv1x1_bn.1} parent=1 // loop_body
      %s16 = ssub.s32 %s11, 1
      %s17 = ssub.s32 %s11, 2
      %s18 = sadd.s32 %s11, 1
      %s20 = sadd.s32 %s19, 1
      %p23 = scmp.eq.s32.totalorder %s11, 1
      %p24 = scmp.ne.s32.totalorder %s19, %s21
      %p25 = scmp.eq.s32.totalorder %s11, 0
      %p26 = por %p24, %p25
      %p27 = scmp.ne.s32.totalorder %s19, %s21
      %p28 = scmp.eq.s32.totalorder %s16, 1
      %p29 = por %p27, %p28
      %p30 = scmp.ne.s32.totalorder %s21, %s22
      %p31 = scmp.eq.s32.totalorder %s16, 0
      %p32 = por %p30, %p31
      %p33 = scmp.ne.s32.totalorder %s21, %s22
      %p34 = scmp.eq.s32.totalorder %s17, 1
      %p35 = por %p33, %p34
      %p37 = scmp.ne.s32.totalorder %s22, %s36
      %p38 = scmp.eq.s32.totalorder %s17, 0
      %p39 = por %p37, %p38
      %s41 = sadd.s32 %s40, 1
      %p44 = scmp.eq.s32.totalorder %s11, 1
      %p45 = scmp.ne.s32.totalorder %s40, %s42
      %p46 = scmp.eq.s32.totalorder %s11, 0
      %p47 = por %p45, %p46
      %p48 = scmp.ne.s32.totalorder %s40, %s42
      %p49 = scmp.eq.s32.totalorder %s16, 1
      %p50 = por %p48, %p49
      %p51 = scmp.ne.s32.totalorder %s42, %s43
      %p52 = scmp.eq.s32.totalorder %s16, 0
      %p53 = por %p51, %p52
      %p54 = scmp.ne.s32.totalorder %s42, %s43
      %p55 = scmp.eq.s32.totalorder %s17, 1
      %p56 = por %p54, %p55
      %p58 = scmp.ne.s32.totalorder %s43, %s57
      %p59 = scmp.eq.s32.totalorder %s17, 0
      %p60 = por %p58, %p59
      %s61 = ssub.s32 %s11, %s18
      %p62 = scmp.eq.s32.totalorder %s61, 0
      %s64 = sadd.s32 %s63, 1
      %s65 = scalar_select %p62, %s63, %s64
      %p68 = pneg %p62
      %p69 = scmp.eq.s32.totalorder %s11, 1
      %p70 = por %p68, %p69
      %p71 = scmp.ne.s32.totalorder %s63, %s66
      %p72 = scmp.eq.s32.totalorder %s11, 0
      %p73 = por %p71, %p72
      %p74 = scmp.ne.s32.totalorder %s63, %s66
      %p75 = scmp.eq.s32.totalorder %s16, 1
      %p76 = por %p74, %p75
      %p77 = scmp.ne.s32.totalorder %s66, %s67
      %p78 = scmp.eq.s32.totalorder %s16, 0
      %p79 = por %p77, %p78
      %p80 = scmp.ne.s32.totalorder %s66, %s67
      %p81 = scmp.eq.s32.totalorder %s17, 1
      %p82 = por %p80, %p81
      %p84 = scmp.ne.s32.totalorder %s67, %s83
      %p85 = scmp.eq.s32.totalorder %s17, 0
      %p86 = por %p84, %p85
      %s87 = ssub.s32 %s11, %s18
      %p88 = scmp.eq.s32.totalorder %s87, 0
      %s90 = sadd.s32 %s89, 1
      %s91 = scalar_select %p88, %s89, %s90
      %p94 = pneg %p88
      %p95 = scmp.eq.s32.totalorder %s11, 1
      %p96 = por %p94, %p95
      %p97 = scmp.ne.s32.totalorder %s89, %s92
      %p98 = scmp.eq.s32.totalorder %s11, 0
      %p99 = por %p97, %p98
      %p100 = scmp.ne.s32.totalorder %s89, %s92
      %p101 = scmp.eq.s32.totalorder %s16, 1
      %p102 = por %p100, %p101
      %p103 = scmp.ne.s32.totalorder %s92, %s93
      %p104 = scmp.eq.s32.totalorder %s16, 0
      %p105 = por %p103, %p104
      %p106 = scmp.ne.s32.totalorder %s92, %s93
      %p107 = scmp.eq.s32.totalorder %s17, 1
      %p108 = por %p106, %p107
      %p110 = scmp.ne.s32.totalorder %s93, %s109
      %p111 = scmp.eq.s32.totalorder %s17, 0
      %p112 = por %p110, %p111
      %s113 = ssub.s32 %s11, %s18
      %p114 = scmp.eq.s32.totalorder %s113, 0
      %s116 = sadd.s32 %s115, 1
      %s117 = scalar_select %p114, %s115, %s116
      %p120 = pneg %p114
      %p121 = scmp.eq.s32.totalorder %s11, 1
      %p122 = por %p120, %p121
      %p123 = scmp.ne.s32.totalorder %s115, %s118
      %p124 = scmp.eq.s32.totalorder %s11, 0
      %p125 = por %p123, %p124
      %p126 = scmp.ne.s32.totalorder %s115, %s118
      %p127 = scmp.eq.s32.totalorder %s16, 1
      %p128 = por %p126, %p127
      %p129 = scmp.ne.s32.totalorder %s118, %s119
      %p130 = scmp.eq.s32.totalorder %s16, 0
      %p131 = por %p129, %p130
      %p132 = scmp.ne.s32.totalorder %s118, %s119
      %p133 = scmp.eq.s32.totalorder %s17, 1
      %p134 = por %p132, %p133
      %p136 = scmp.ne.s32.totalorder %s119, %s135
      %p137 = scmp.eq.s32.totalorder %s17, 0
      %p138 = por %p136, %p137
      %s139 = ssub.s32 %s11, %s18
      %p140 = scmp.eq.s32.totalorder %s139, 0
      %s142 = sadd.s32 %s141, 1
      %s143 = scalar_select %p140, %s141, %s142
      %p146 = pneg %p140
      %p147 = scmp.eq.s32.totalorder %s11, 1
      %p148 = por %p146, %p147
      %p149 = scmp.ne.s32.totalorder %s141, %s144
      %p150 = scmp.eq.s32.totalorder %s11, 0
      %p151 = por %p149, %p150
      %p152 = scmp.ne.s32.totalorder %s141, %s144
      %p153 = scmp.eq.s32.totalorder %s16, 1
      %p154 = por %p152, %p153
      %p155 = scmp.ne.s32.totalorder %s144, %s145
      %p156 = scmp.eq.s32.totalorder %s16, 0
      %p157 = por %p155, %p156
      %p158 = scmp.ne.s32.totalorder %s144, %s145
      %p159 = scmp.eq.s32.totalorder %s17, 1
      %p160 = por %p158, %p159
      %p162 = scmp.ne.s32.totalorder %s145, %s161
      %p163 = scmp.eq.s32.totalorder %s17, 0
      %p164 = por %p162, %p163
      %p165 = scmp.le.s32.totalorder 1, %s11
      %p166 = scmp.lt.s32.totalorder %s11, 3
      %p167 = pnand %p165, %p166
      %p168 = pneg %p167
      // Predicated region
      $region9: #{mul_conv1x1_bn.1} parent=5 // pred_check
        _
      $region10: #{mul_conv1x1_bn.1} parent=5 // pred_check_branch
        %170 = sbr.rel (%p167) target = $region12
      $region11: #{mul_conv1x1_bn.1} parent=5 // pred_region
        %s171 = ssub.s32 %s11, 1
        // Predicated region
        $region13: #{mul_conv1x1_bn.1} parent=11 // pred_check
          %p172 = pneg %p32
        $region14: #{mul_conv1x1_bn.1} parent=11 // pred_check_branch
          %174 = sbr.rel (%p172) target = $region16
        $region15: #{mul_conv1x1_bn.1} parent=11 // pred_region
          _
        $region16: #{mul_conv1x1_bn.1} parent=11 // pred_fallthru
          _
        // Predicated region
        $region17: #{mul_conv1x1_bn.1} parent=11 // pred_check
          %p175 = pneg %p53
        $region18: #{mul_conv1x1_bn.1} parent=11 // pred_check_branch
          %177 = sbr.rel (%p175) target = $region20
        $region19: #{mul_conv1x1_bn.1} parent=11 // pred_region
          _
        $region20: #{mul_conv1x1_bn.1} parent=11 // pred_fallthru
          _
      $region12: #{mul_conv1x1_bn.1} parent=5 // pred_fallthru
        _
      %p178 = scmp.lt.s32.totalorder %s11, 2
      // Predicated region
      $region21: #{mul_conv1x1_bn.1} parent=5 // pred_check
        %p179 = pneg %p178
      $region22: #{mul_conv1x1_bn.1} parent=5 // pred_check_branch
        %181 = sbr.rel (%p179) target = $region24
      $region23: #{mul_conv1x1_bn.1} parent=5 // pred_region
        // Predicated region
        $region25: #{mul_conv1x1_bn.1} parent=23 // pred_check
          %p182 = pneg %p73
        $region26: #{mul_conv1x1_bn.1} parent=23 // pred_check_branch
          %184 = sbr.rel (%p182) target = $region28
        $region27: #{mul_conv1x1_bn.1} parent=23 // pred_region
          %s185 = smul.u32 16, %s11
          %s186 = ssub.s32 25, %s185
          %p187 = scmp.lt.s32.totalorder %s186, 16
          %s188 = scalar_select %p187, %s186, 16
          %s189 = smul.u32 64, %s188
          %s190 = smul.u32 %s189, 7
          %p191 = scmp.lt.s32.totalorder %s185, 24
          %s192 = scalar_select %p191, %s185, 24
          %s193 = smul.addr %s192, 7
          %s194 = smul.addr %s193, 4
          %s195 = scalar_lea.vmem %s2, %s194
          %s196 = smul.u32 16, %s11
          %s197 = ssub.s32 25, %s196
          %p198 = scmp.lt.s32.totalorder %s197, 16
          %s199 = scalar_select %p198, %s197, 16
          %s200 = smul.u32 64, %s199
          %s201 = smul.u32 %s200, 7
        $region28: #{mul_conv1x1_bn.1} parent=23 // pred_fallthru
          _
        // Predicated region
        $region29: #{mul_conv1x1_bn.1} parent=23 // pred_check
          %p202 = pneg %p99
        $region30: #{mul_conv1x1_bn.1} parent=23 // pred_check_branch
          %204 = sbr.rel (%p202) target = $region32
        $region31: #{mul_conv1x1_bn.1} parent=23 // pred_region
          %s205 = smul.u32 16, %s11
          %s206 = ssub.s32 25, %s205
          %p207 = scmp.lt.s32.totalorder %s206, 16
          %s208 = scalar_select %p207, %s206, 16
          %s209 = smul.u32 128, %s208
          %p210 = scmp.lt.s32.totalorder %s205, 24
          %s211 = scalar_select %p210, %s205, 24
          %s212 = smul.addr %s211, 8
          %s213 = scalar_lea.vmem %s3, %s212
          %s214 = smul.u32 16, %s11
          %s215 = ssub.s32 25, %s214
          %p216 = scmp.lt.s32.totalorder %s215, 16
          %s217 = scalar_select %p216, %s215, 16
          %s218 = smul.u32 128, %s217
        $region32: #{mul_conv1x1_bn.1} parent=23 // pred_fallthru
          _
        // Predicated region
        $region33: #{mul_conv1x1_bn.1} parent=23 // pred_check
          %p219 = pneg %p125
        $region34: #{mul_conv1x1_bn.1} parent=23 // pred_check_branch
          %221 = sbr.rel (%p219) target = $region36
        $region35: #{mul_conv1x1_bn.1} parent=23 // pred_region
          %s222 = smul.u32 16, %s11
          %s223 = ssub.s32 25, %s222
          %p224 = scmp.lt.s32.totalorder %s223, 16
          %s225 = scalar_select %p224, %s223, 16
          %s226 = smul.u32 128, %s225
          %p227 = scmp.lt.s32.totalorder %s222, 24
          %s228 = scalar_select %p227, %s222, 24
          %s229 = smul.addr %s228, 8
          %s230 = scalar_lea.vmem %s4, %s229
          %s231 = smul.u32 16, %s11
          %s232 = ssub.s32 25, %s231
          %p233 = scmp.lt.s32.totalorder %s232, 16
          %s234 = scalar_select %p233, %s232, 16
          %s235 = smul.u32 128, %s234
        $region36: #{mul_conv1x1_bn.1} parent=23 // pred_fallthru
          _
      $region24: #{mul_conv1x1_bn.1} parent=5 // pred_fallthru
        _
      %p236 = scmp.le.s32.totalorder 1, %s11
      %p237 = scmp.lt.s32.totalorder %s11, 3
      %p238 = pnand %p236, %p237
      %p239 = pneg %p238
      // Predicated region
      $region37: #{mul_conv1x1_bn.1} parent=5 // pred_check
        _
      $region38: #{mul_conv1x1_bn.1} parent=5 // pred_check_branch
        %241 = sbr.rel (%p238) target = $region40
      $region39: #{mul_conv1x1_bn.1} parent=5 // pred_region
        %s242 = ssub.s32 %s11, 1
        %p243 = pneg %p32
        %p244 = pneg %p29
        %p245 = pneg %p53
        %p246 = pneg %p50
        %s247 = smul.u32 16, %s16
        %s248 = ssub.s32 25, %s247
        %p249 = scmp.lt.s32.totalorder %s248, 16
        %s250 = scalar_select %p249, %s248, 16
        %s251 = smul.u32 64, %s250
        %s252 = smul.u32 %s251, 7
        %p253 = scmp.lt.s32.totalorder %s247, 24
        %s254 = scalar_select %p253, %s247, 24
        %s255 = smul.addr %s254, 7
        %s256 = smul.addr %s255, 4
        %s257 = scalar_lea.vmem %s2, %s256
        %p258 = pneg %p79
        %p259 = pneg %p76
        %s260 = smul.u32 16, %s16
        %s261 = ssub.s32 25, %s260
        %p262 = scmp.lt.s32.totalorder %s261, 16
        %s263 = scalar_select %p262, %s261, 16
        %s264 = smul.u32 128, %s263
        %p265 = scmp.lt.s32.totalorder %s260, 24
        %s266 = scalar_select %p265, %s260, 24
        %s267 = smul.addr %s266, 8
        %s268 = scalar_lea.vmem %s3, %s267
        %p269 = pneg %p105
        %p270 = pneg %p102
        %s271 = smul.u32 16, %s16
        %s272 = ssub.s32 25, %s271
        %p273 = scmp.lt.s32.totalorder %s272, 16
        %s274 = scalar_select %p273, %s272, 16
        %s275 = smul.u32 128, %s274
        %p276 = scmp.lt.s32.totalorder %s271, 24
        %s277 = scalar_select %p276, %s271, 24
        %s278 = smul.addr %s277, 8
        %s279 = scalar_lea.vmem %s4, %s278
        %p280 = pneg %p131
        %p281 = pneg %p128
        %p282 = pneg %p157
        %p283 = pneg %p154
        %s284 = sand.u32 %s144, 1
        %s285 = sand.u32 %s144, 1
        %s286 = smul.addr %s285, 256
        %s287 = scalar_lea.vmem [#allocation2], %s286
        %s288 = smul.u32 16, %s16
        %s289 = ssub.s32 25, %s288
        %p290 = scmp.lt.s32.totalorder %s289, 16
        %s291 = scalar_select %p290, %s289, 16
        %s292 = smul.u32 64, %s291
        %s293 = smul.u32 %s292, 7
        %p294 = scmp.lt.s32.totalorder %s288, 24
        %s295 = scalar_select %p294, %s288, 24
        %s296 = smul.addr %s295, 7
        %s297 = smul.addr %s296, 4
        %s298 = scalar_lea.vmem %s2, %s297
        %s299 = smul.u32 16, %s16
        %s300 = ssub.s32 25, %s299
        %p301 = scmp.lt.s32.totalorder %s300, 16
        %s302 = scalar_select %p301, %s300, 16
        %s303 = smul.u32 64, %s302
        %s304 = smul.u32 %s303, 7
        %s305 = smul.u32 16, %s16
        %s306 = ssub.s32 25, %s305
        %p307 = scmp.lt.s32.totalorder %s306, 16
        %s308 = scalar_select %p307, %s306, 16
        %s309 = smul.u32 128, %s308
        %p310 = scmp.lt.s32.totalorder %s305, 24
        %s311 = scalar_select %p310, %s305, 24
        %s312 = smul.addr %s311, 8
        %s313 = scalar_lea.vmem %s3, %s312
        %s314 = smul.u32 16, %s16
        %s315 = ssub.s32 25, %s314
        %p316 = scmp.lt.s32.totalorder %s315, 16
        %s317 = scalar_select %p316, %s315, 16
        %s318 = smul.u32 128, %s317
        %s319 = smul.u32 16, %s16
        %s320 = ssub.s32 25, %s319
        %p321 = scmp.lt.s32.totalorder %s320, 16
        %s322 = scalar_select %p321, %s320, 16
        %s323 = smul.u32 128, %s322
        %p324 = scmp.lt.s32.totalorder %s319, 24
        %s325 = scalar_select %p324, %s319, 24
        %s326 = smul.addr %s325, 8
        %s327 = scalar_lea.vmem %s4, %s326
        %s328 = smul.u32 16, %s16
        %s329 = ssub.s32 25, %s328
        %p330 = scmp.lt.s32.totalorder %s329, 16
        %s331 = scalar_select %p330, %s329, 16
        %s332 = smul.u32 128, %s331
        %s333 = smul.u32 16, %s16
        %s334 = ssub.s32 25, %s333
        %p335 = scmp.lt.s32.totalorder %s334, 16
        %s336 = scalar_select %p335, %s334, 16
        %s337 = smul.u32 128, %s336
        %s338 = smul.u32 %s337, 2
        %v340 = vld [vmem:[%s0] sm:$0xff]
        %v341 = vld [vmem:[%s0 + $0x8] sm:$0xff]
        %v342 = vld [vmem:[%s0 + $0x10] sm:$0xff]
        %v343 = vld [vmem:[%s0 + $0x18] sm:$0xff]
        %v344 = vld [vmem:[%s0 + $0x20] sm:$0xff]
        %v345 = vld [vmem:[%s0 + $0x28] sm:$0xff]
        %v346 = vld [vmem:[%s0 + $0x30] sm:$0xff]
        %v347 = vld [vmem:[%s0 + $0x38] sm:$0xff]
        %v348 = vld [vmem:[%s0 + $0x40] sm:$0xff]
        %v349 = vld [vmem:[%s0 + $0x48] sm:$0xff]
        %v350 = vld [vmem:[%s0 + $0x50] sm:$0xff]
        %v351 = vld [vmem:[%s0 + $0x58] sm:$0xff]
        %v352 = vld [vmem:[%s0 + $0x60] sm:$0xff]
        %v353 = vld [vmem:[%s0 + $0x68] sm:$0xff]
        %v354 = vld [vmem:[%s0 + $0x70] sm:$0xff]
        %v355 = vld [vmem:[%s0 + $0x78] sm:$0xff]
        %v356 = vld [vmem:[%s0 + $0x80] sm:$0xff]
        %v357 = vld [vmem:[%s0 + $0x88] sm:$0xff]
        %v358 = vld [vmem:[%s0 + $0x90] sm:$0xff]
        %v359 = vld [vmem:[%s0 + $0x98] sm:$0xff]
        %v360 = vld [vmem:[%s0 + $0xa0] sm:$0xff]
        %v361 = vld [vmem:[%s0 + $0xa8] sm:$0xff]
        %v362 = vld [vmem:[%s0 + $0xb0] sm:$0xff]
        %v363 = vld [vmem:[%s0 + $0xb8] sm:$0xff]
        %v364 = vld [vmem:[%s0 + $0xc0] sm:$0xff]
        %v365 = vld [vmem:[%s0 + $0xc8] sm:$0xff]
        %v366 = vld [vmem:[%s0 + $0xd0] sm:$0xff]
        %v367 = vld [vmem:[%s0 + $0xd8] sm:$0xff]
        %v368 = vld [vmem:[%s0 + $0xe0] sm:$0xff]
        %v369 = vld [vmem:[%s0 + $0xe8] sm:$0xff]
        %v370 = vld [vmem:[%s0 + $0xf0] sm:$0xff]
        %v371 = vld [vmem:[%s0 + $0xf8] sm:$0xff]
        %v372 = vld [vmem:[%s0 + $0x100] sm:$0xff]
        %v373 = vld [vmem:[%s0 + $0x108] sm:$0xff]
        %v374 = vld [vmem:[%s0 + $0x110] sm:$0xff]
        %v375 = vld [vmem:[%s0 + $0x118] sm:$0xff]
        %v376 = vld [vmem:[%s0 + $0x120] sm:$0xff]
        %v377 = vld [vmem:[%s0 + $0x128] sm:$0xff]
        %v378 = vld [vmem:[%s0 + $0x130] sm:$0xff]
        %v379 = vld [vmem:[%s0 + $0x138] sm:$0xff]
        %v380 = vld [vmem:[%s0 + $0x140] sm:$0xff]
        %v381 = vld [vmem:[%s0 + $0x148] sm:$0xff]
        %v382 = vld [vmem:[%s0 + $0x150] sm:$0xff]
        %v383 = vld [vmem:[%s0 + $0x158] sm:$0xff]
        %v384 = vld [vmem:[%s0 + $0x160] sm:$0xff]
        %v385 = vld [vmem:[%s0 + $0x168] sm:$0xff]
        %v386 = vld [vmem:[%s0 + $0x170] sm:$0xff]
        %v387 = vld [vmem:[%s0 + $0x178] sm:$0xff]
        %v388 = vld [vmem:[%s0 + $0x180] sm:$0xff]
        %v389 = vld [vmem:[%s0 + $0x188] sm:$0xff]
        %v390 = vld [vmem:[%s0 + $0x190] sm:$0xff]
        %v391 = vld [vmem:[%s0 + $0x198] sm:$0xff]
        %v392 = vld [vmem:[%s0 + $0x1a0] sm:$0xff]
        %v393 = vld [vmem:[%s0 + $0x1a8] sm:$0xff]
        %v394 = vld [vmem:[%s0 + $0x1b0] sm:$0xff]
        %v395 = vld [vmem:[%s0 + $0x1b8] sm:$0xff]
        %v396 = vld [vmem:[%s0 + $0x1c0] sm:$0xff]
        %v397 = vld [vmem:[%s0 + $0x1c8] sm:$0xff]
        %v398 = vld [vmem:[%s0 + $0x1d0] sm:$0xff]
        %v399 = vld [vmem:[%s0 + $0x1d8] sm:$0xff]
        %v400 = vld [vmem:[%s0 + $0x1e0] sm:$0xff]
        %v401 = vld [vmem:[%s0 + $0x1e8] sm:$0xff]
        %v402 = vld [vmem:[%s0 + $0x1f0] sm:$0xff]
        %v403 = vld [vmem:[%s0 + $0x1f8] sm:$0xff]
        %v404 = vld [vmem:[%s0 + $0x200] sm:$0xff]
        %v405 = vld [vmem:[%s0 + $0x208] sm:$0xff]
        %v406 = vld [vmem:[%s0 + $0x210] sm:$0xff]
        %v407 = vld [vmem:[%s0 + $0x218] sm:$0xff]
        %v408 = vld [vmem:[%s0 + $0x220] sm:$0xff]
        %v409 = vld [vmem:[%s0 + $0x228] sm:$0xff]
        %v410 = vld [vmem:[%s0 + $0x230] sm:$0xff]
        %v411 = vld [vmem:[%s0 + $0x238] sm:$0xff]
        %v412 = vld [vmem:[%s0 + $0x240] sm:$0xff]
        %v413 = vld [vmem:[%s0 + $0x248] sm:$0xff]
        %v414 = vld [vmem:[%s0 + $0x250] sm:$0xff]
        %v415 = vld [vmem:[%s0 + $0x258] sm:$0xff]
        %v416 = vld [vmem:[%s0 + $0x260] sm:$0xff]
        %v417 = vld [vmem:[%s0 + $0x268] sm:$0xff]
        %v418 = vld [vmem:[%s0 + $0x270] sm:$0xff]
        %v419 = vld [vmem:[%s0 + $0x278] sm:$0xff]
        %v420 = vld [vmem:[%s0 + $0x280] sm:$0xff]
        %v421 = vld [vmem:[%s0 + $0x288] sm:$0xff]
        %v422 = vld [vmem:[%s0 + $0x290] sm:$0xff]
        %v423 = vld [vmem:[%s0 + $0x298] sm:$0xff]
        %v424 = vld [vmem:[%s0 + $0x2a0] sm:$0xff]
        %v425 = vld [vmem:[%s0 + $0x2a8] sm:$0xff]
        %v426 = vld [vmem:[%s0 + $0x2b0] sm:$0xff]
        %v427 = vld [vmem:[%s0 + $0x2b8] sm:$0xff]
        %v428 = vld [vmem:[%s0 + $0x2c0] sm:$0xff]
        %v429 = vld [vmem:[%s0 + $0x2c8] sm:$0xff]
        %v430 = vld [vmem:[%s0 + $0x2d0] sm:$0xff]
        %v431 = vld [vmem:[%s0 + $0x2d8] sm:$0xff]
        %v432 = vld [vmem:[%s0 + $0x2e0] sm:$0xff]
        %v433 = vld [vmem:[%s0 + $0x2e8] sm:$0xff]
        %v434 = vld [vmem:[%s0 + $0x2f0] sm:$0xff]
        %v435 = vld [vmem:[%s0 + $0x2f8] sm:$0xff]
        %v436 = vld [vmem:[%s0 + $0x300] sm:$0xff]
        %v437 = vld [vmem:[%s0 + $0x308] sm:$0xff]
        %v438 = vld [vmem:[%s0 + $0x310] sm:$0xff]
        %v439 = vld [vmem:[%s0 + $0x318] sm:$0xff]
        %v440 = vld [vmem:[%s0 + $0x320] sm:$0xff]
        %v441 = vld [vmem:[%s0 + $0x328] sm:$0xff]
        %v442 = vld [vmem:[%s0 + $0x330] sm:$0xff]
        %v443 = vld [vmem:[%s0 + $0x338] sm:$0xff]
        %v444 = vld [vmem:[%s0 + $0x340] sm:$0xff]
        %v445 = vld [vmem:[%s0 + $0x348] sm:$0xff]
        %v446 = vld [vmem:[%s0 + $0x350] sm:$0xff]
        %v447 = vld [vmem:[%s0 + $0x358] sm:$0xff]
        %v448 = vld [vmem:[%s1] sm:$0xf]
        %v449 = vld [vmem:[%s1 + $0x4] sm:$0xf]
        %v450 = vld [vmem:[%s1 + $0x8] sm:$0xf]
        %v451 = vld [vmem:[%s1 + $0xc] sm:$0xf]
        %v452 = vld [vmem:[%s1 + $0x10] sm:$0xf]
        %v453 = vld [vmem:[%s1 + $0x14] sm:$0xf]
        %v454 = vld [vmem:[%s1 + $0x18] sm:$0xf]
        %v455 = vld [vmem:[%s1 + $0x1c] sm:$0xf]
        %v456 = vld [vmem:[%s1 + $0x20] sm:$0xf]
        %v457 = vld [vmem:[%s1 + $0x24] sm:$0xf]
        %v458 = vld [vmem:[%s1 + $0x28] sm:$0xf]
        %v459 = vld [vmem:[%s1 + $0x2c] sm:$0xf]
        %v460 = vld [vmem:[%s1 + $0x30] sm:$0xf]
        %v461 = vld [vmem:[%s1 + $0x34] sm:$0xf]
        %v462 = vld [vmem:[%s1 + $0x38] sm:$0xf]
        %v463 = vld [vmem:[%s1 + $0x3c] sm:$0xf]
        %v464 = vld [vmem:[%s1 + $0x40] sm:$0xf]
        %v465 = vld [vmem:[%s1 + $0x44] sm:$0xf]
        %v466 = vld [vmem:[%s1 + $0x48] sm:$0xf]
        %v467 = vld [vmem:[%s1 + $0x4c] sm:$0xf]
        %v468 = vld [vmem:[%s1 + $0x50] sm:$0xf]
        %v469 = vld [vmem:[%s1 + $0x54] sm:$0xf]
        %v470 = vld [vmem:[%s1 + $0x58] sm:$0xf]
        %v471 = vld [vmem:[%s1 + $0x5c] sm:$0xf]
        %v472 = vld [vmem:[%s1 + $0x60] sm:$0xf]
        %v473 = vld [vmem:[%s1 + $0x64] sm:$0xf]
        %v474 = vld [vmem:[%s1 + $0x68] sm:$0xf]
        %v475 = vld [vmem:[%s1 + $0x6c] sm:$0xf]
        %v476 = vld [vmem:[%s1 + $0x70] sm:$0xf]
        %v477 = vld [vmem:[%s1 + $0x74] sm:$0xf]
        %v478 = vld [vmem:[%s1 + $0x78] sm:$0xf]
        %v479 = vld [vmem:[%s1 + $0x7c] sm:$0xf]
        %v480 = vld [vmem:[%s1 + $0x80] sm:$0xf]
        %v481 = vld [vmem:[%s1 + $0x84] sm:$0xf]
        %v482 = vld [vmem:[%s1 + $0x88] sm:$0xf]
        %v483 = vld [vmem:[%s1 + $0x8c] sm:$0xf]
        %v484 = vld [vmem:[%s1 + $0x90] sm:$0xf]
        %v485 = vld [vmem:[%s1 + $0x94] sm:$0xf]
        %v486 = vld [vmem:[%s1 + $0x98] sm:$0xf]
        %v487 = vld [vmem:[%s1 + $0x9c] sm:$0xf]
        %v488 = vld [vmem:[%s1 + $0xa0] sm:$0xf]
        %v489 = vld [vmem:[%s1 + $0xa4] sm:$0xf]
        %v490 = vld [vmem:[%s1 + $0xa8] sm:$0xf]
        %v491 = vld [vmem:[%s1 + $0xac] sm:$0xf]
        %v492 = vld [vmem:[%s1 + $0xb0] sm:$0xf]
        %v493 = vld [vmem:[%s1 + $0xb4] sm:$0xf]
        %v494 = vld [vmem:[%s1 + $0xb8] sm:$0xf]
        %v495 = vld [vmem:[%s1 + $0xbc] sm:$0xf]
        %v496 = vld [vmem:[%s1 + $0xc0] sm:$0xf]
        %v497 = vld [vmem:[%s1 + $0xc4] sm:$0xf]
        %v498 = vld [vmem:[%s1 + $0xc8] sm:$0xf]
        %v499 = vld [vmem:[%s1 + $0xcc] sm:$0xf]
        %v500 = vld [vmem:[%s1 + $0xd0] sm:$0xf]
        %v501 = vld [vmem:[%s1 + $0xd4] sm:$0xf]
        %v502 = vld [vmem:[%s1 + $0xd8] sm:$0xf]
        %v503 = vld [vmem:[%s1 + $0xdc] sm:$0xf]
        %v504 = vld [vmem:[%s1 + $0xe0] sm:$0xf]
        %v505 = vld [vmem:[%s1 + $0xe4] sm:$0xf]
        %v506 = vld [vmem:[%s1 + $0xe8] sm:$0xf]
        %v507 = vld [vmem:[%s1 + $0xec] sm:$0xf]
        %v508 = vld [vmem:[%s1 + $0xf0] sm:$0xf]
        %v509 = vld [vmem:[%s1 + $0xf4] sm:$0xf]
        %v510 = vld [vmem:[%s1 + $0xf8] sm:$0xf]
        %v511 = vld [vmem:[%s1 + $0xfc] sm:$0xf]
        %v512 = vld [vmem:[%s1 + $0x100] sm:$0xf]
        %v513 = vld [vmem:[%s1 + $0x104] sm:$0xf]
        %v514 = vld [vmem:[%s1 + $0x108] sm:$0xf]
        %v515 = vld [vmem:[%s1 + $0x10c] sm:$0xf]
        %v516 = vld [vmem:[%s1 + $0x110] sm:$0xf]
        %v517 = vld [vmem:[%s1 + $0x114] sm:$0xf]
        %v518 = vld [vmem:[%s1 + $0x118] sm:$0xf]
        %v519 = vld [vmem:[%s1 + $0x11c] sm:$0xf]
        %v520 = vld [vmem:[%s1 + $0x120] sm:$0xf]
        %v521 = vld [vmem:[%s1 + $0x124] sm:$0xf]
        %v522 = vld [vmem:[%s1 + $0x128] sm:$0xf]
        %v523 = vld [vmem:[%s1 + $0x12c] sm:$0xf]
        %v524 = vld [vmem:[%s1 + $0x130] sm:$0xf]
        %v525 = vld [vmem:[%s1 + $0x134] sm:$0xf]
        %v526 = vld [vmem:[%s1 + $0x138] sm:$0xf]
        %v527 = vld [vmem:[%s1 + $0x13c] sm:$0xf]
        %v528 = vld [vmem:[%s1 + $0x140] sm:$0xf]
        %v529 = vld [vmem:[%s1 + $0x144] sm:$0xf]
        %v530 = vld [vmem:[%s1 + $0x148] sm:$0xf]
        %v531 = vld [vmem:[%s1 + $0x14c] sm:$0xf]
        %v532 = vld [vmem:[%s1 + $0x150] sm:$0xf]
        %v533 = vld [vmem:[%s1 + $0x154] sm:$0xf]
        %v534 = vld [vmem:[%s1 + $0x158] sm:$0xf]
        %v535 = vld [vmem:[%s1 + $0x15c] sm:$0xf]
        %v536 = vld [vmem:[%s1 + $0x160] sm:$0xf]
        %v537 = vld [vmem:[%s1 + $0x164] sm:$0xf]
        %v538 = vld [vmem:[%s1 + $0x168] sm:$0xf]
        %v539 = vld [vmem:[%s1 + $0x16c] sm:$0xf]
        %v540 = vld [vmem:[%s1 + $0x170] sm:$0xf]
        %v541 = vld [vmem:[%s1 + $0x174] sm:$0xf]
        %v542 = vld [vmem:[%s1 + $0x178] sm:$0xf]
        %v543 = vld [vmem:[%s1 + $0x17c] sm:$0xf]
        %v544 = vld [vmem:[%s1 + $0x180] sm:$0xf]
        %v545 = vld [vmem:[%s1 + $0x184] sm:$0xf]
        %v546 = vld [vmem:[%s1 + $0x188] sm:$0xf]
        %v547 = vld [vmem:[%s1 + $0x18c] sm:$0xf]
        %v548 = vld [vmem:[%s1 + $0x190] sm:$0xf]
        %v549 = vld [vmem:[%s1 + $0x194] sm:$0xf]
        %v550 = vld [vmem:[%s1 + $0x198] sm:$0xf]
        %v551 = vld [vmem:[%s1 + $0x19c] sm:$0xf]
        %v552 = vld [vmem:[%s1 + $0x1a0] sm:$0xf]
        %v553 = vld [vmem:[%s1 + $0x1a4] sm:$0xf]
        %v554 = vld [vmem:[%s1 + $0x1a8] sm:$0xf]
        %v555 = vld [vmem:[%s1 + $0x1ac] sm:$0xf]
        %557 = vset.pattern.permute.xlu0 0
        %558 = vperm.xlu0 %557, %v448
        %v559 = vpop.permute.xlu0 %558
        %v562 = vunpack.c.l.s4 839922192
        %v563 = vunpack.c.0.s8 %v562
        %v564 = vlaneseq
        %v565 = vshrl.u32 %v564, 7
        %v566 = vsub.s32 %v563, %v565
        %v567 = vrot.slane %v559, %v566
        %569 = vset.pattern.permute.xlu0 0
        %570 = vperm.xlu0 %569, %v449
        %v571 = vpop.permute.xlu0 %570
        %v574 = vunpack.c.l.s4 839922192
        %v575 = vunpack.c.0.s8 %v574
        %v576 = vlaneseq
        %v577 = vshrl.u32 %v576, 7
        %v578 = vsub.s32 %v575, %v577
        %v579 = vrot.slane %v571, %v578
        %581 = vset.pattern.permute.xlu0 0
        %582 = vperm.xlu0 %581, %v450
        %v583 = vpop.permute.xlu0 %582
        %v586 = vunpack.c.l.s4 839922192
        %v587 = vunpack.c.0.s8 %v586
        %v588 = vlaneseq
        %v589 = vshrl.u32 %v588, 7
        %v590 = vsub.s32 %v587, %v589
        %v591 = vrot.slane %v583, %v590
        %593 = vset.pattern.permute.xlu0 0
        %594 = vperm.xlu0 %593, %v451
        %v595 = vpop.permute.xlu0 %594
        %v598 = vunpack.c.l.s4 839922192
        %v599 = vunpack.c.0.s8 %v598
        %v600 = vlaneseq
        %v601 = vshrl.u32 %v600, 7
        %v602 = vsub.s32 %v599, %v601
        %v603 = vrot.slane %v595, %v602
        %605 = vset.pattern.permute.xlu0 0
        %606 = vperm.xlu0 %605, %v452
        %v607 = vpop.permute.xlu0 %606
        %v610 = vunpack.c.l.s4 839922192
        %v611 = vunpack.c.0.s8 %v610
        %v612 = vlaneseq
        %v613 = vshrl.u32 %v612, 7
        %v614 = vsub.s32 %v611, %v613
        %v615 = vrot.slane %v607, %v614
        %617 = vset.pattern.permute.xlu0 0
        %618 = vperm.xlu0 %617, %v453
        %v619 = vpop.permute.xlu0 %618
        %v622 = vunpack.c.l.s4 839922192
        %v623 = vunpack.c.0.s8 %v622
        %v624 = vlaneseq
        %v625 = vshrl.u32 %v624, 7
        %v626 = vsub.s32 %v623, %v625
        %v627 = vrot.slane %v619, %v626
        %629 = vset.pattern.permute.xlu0 0
        %630 = vperm.xlu0 %629, %v454
        %v631 = vpop.permute.xlu0 %630
        %v634 = vunpack.c.l.s4 839922192
        %v635 = vunpack.c.0.s8 %v634
        %v636 = vlaneseq
        %v637 = vshrl.u32 %v636, 7
        %v638 = vsub.s32 %v635, %v637
        %v639 = vrot.slane %v631, %v638
        %641 = vset.pattern.permute.xlu0 0
        %642 = vperm.xlu0 %641, %v455
        %v643 = vpop.permute.xlu0 %642
        %v646 = vunpack.c.l.s4 839922192
        %v647 = vunpack.c.0.s8 %v646
        %v648 = vlaneseq
        %v649 = vshrl.u32 %v648, 7
        %v650 = vsub.s32 %v647, %v649
        %v651 = vrot.slane %v643, %v650
        %653 = vset.pattern.permute.xlu0 0
        %654 = vperm.xlu0 %653, %v456
        %v655 = vpop.permute.xlu0 %654
        %v658 = vunpack.c.l.s4 839922192
        %v659 = vunpack.c.0.s8 %v658
        %v660 = vlaneseq
        %v661 = vshrl.u32 %v660, 7
        %v662 = vsub.s32 %v659, %v661
        %v663 = vrot.slane %v655, %v662
        %665 = vset.pattern.permute.xlu0 0
        %666 = vperm.xlu0 %665, %v457
        %v667 = vpop.permute.xlu0 %666
        %v670 = vunpack.c.l.s4 839922192
        %v671 = vunpack.c.0.s8 %v670
        %v672 = vlaneseq
        %v673 = vshrl.u32 %v672, 7
        %v674 = vsub.s32 %v671, %v673
        %v675 = vrot.slane %v667, %v674
        %677 = vset.pattern.permute.xlu0 0
        %678 = vperm.xlu0 %677, %v458
        %v679 = vpop.permute.xlu0 %678
        %v682 = vunpack.c.l.s4 839922192
        %v683 = vunpack.c.0.s8 %v682
        %v684 = vlaneseq
        %v685 = vshrl.u32 %v684, 7
        %v686 = vsub.s32 %v683, %v685
        %v687 = vrot.slane %v679, %v686
        %689 = vset.pattern.permute.xlu0 0
        %690 = vperm.xlu0 %689, %v459
        %v691 = vpop.permute.xlu0 %690
        %v694 = vunpack.c.l.s4 839922192
        %v695 = vunpack.c.0.s8 %v694
        %v696 = vlaneseq
        %v697 = vshrl.u32 %v696, 7
        %v698 = vsub.s32 %v695, %v697
        %v699 = vrot.slane %v691, %v698
        %701 = vset.pattern.permute.xlu0 0
        %702 = vperm.xlu0 %701, %v460
        %v703 = vpop.permute.xlu0 %702
        %v706 = vunpack.c.l.s4 839922192
        %v707 = vunpack.c.0.s8 %v706
        %v708 = vlaneseq
        %v709 = vshrl.u32 %v708, 7
        %v710 = vsub.s32 %v707, %v709
        %v711 = vrot.slane %v703, %v710
        %713 = vset.pattern.permute.xlu0 0
        %714 = vperm.xlu0 %713, %v461
        %v715 = vpop.permute.xlu0 %714
        %v718 = vunpack.c.l.s4 839922192
        %v719 = vunpack.c.0.s8 %v718
        %v720 = vlaneseq
        %v721 = vshrl.u32 %v720, 7
        %v722 = vsub.s32 %v719, %v721
        %v723 = vrot.slane %v715, %v722
        %725 = vset.pattern.permute.xlu0 0
        %726 = vperm.xlu0 %725, %v462
        %v727 = vpop.permute.xlu0 %726
        %v730 = vunpack.c.l.s4 839922192
        %v731 = vunpack.c.0.s8 %v730
        %v732 = vlaneseq
        %v733 = vshrl.u32 %v732, 7
        %v734 = vsub.s32 %v731, %v733
        %v735 = vrot.slane %v727, %v734
        %737 = vset.pattern.permute.xlu0 0
        %738 = vperm.xlu0 %737, %v463
        %v739 = vpop.permute.xlu0 %738
        %v742 = vunpack.c.l.s4 839922192
        %v743 = vunpack.c.0.s8 %v742
        %v744 = vlaneseq
        %v745 = vshrl.u32 %v744, 7
        %v746 = vsub.s32 %v743, %v745
        %v747 = vrot.slane %v739, %v746
        %749 = vset.pattern.permute.xlu0 0
        %750 = vperm.xlu0 %749, %v464
        %v751 = vpop.permute.xlu0 %750
        %v754 = vunpack.c.l.s4 839922192
        %v755 = vunpack.c.0.s8 %v754
        %v756 = vlaneseq
        %v757 = vshrl.u32 %v756, 7
        %v758 = vsub.s32 %v755, %v757
        %v759 = vrot.slane %v751, %v758
        %761 = vset.pattern.permute.xlu0 0
        %762 = vperm.xlu0 %761, %v465
        %v763 = vpop.permute.xlu0 %762
        %v766 = vunpack.c.l.s4 839922192
        %v767 = vunpack.c.0.s8 %v766
        %v768 = vlaneseq
        %v769 = vshrl.u32 %v768, 7
        %v770 = vsub.s32 %v767, %v769
        %v771 = vrot.slane %v763, %v770
        %773 = vset.pattern.permute.xlu0 0
        %774 = vperm.xlu0 %773, %v466
        %v775 = vpop.permute.xlu0 %774
        %v778 = vunpack.c.l.s4 839922192
        %v779 = vunpack.c.0.s8 %v778
        %v780 = vlaneseq
        %v781 = vshrl.u32 %v780, 7
        %v782 = vsub.s32 %v779, %v781
        %v783 = vrot.slane %v775, %v782
        %785 = vset.pattern.permute.xlu0 0
        %786 = vperm.xlu0 %785, %v467
        %v787 = vpop.permute.xlu0 %786
        %v790 = vunpack.c.l.s4 839922192
        %v791 = vunpack.c.0.s8 %v790
        %v792 = vlaneseq
        %v793 = vshrl.u32 %v792, 7
        %v794 = vsub.s32 %v791, %v793
        %v795 = vrot.slane %v787, %v794
        %797 = vset.pattern.permute.xlu0 0
        %798 = vperm.xlu0 %797, %v468
        %v799 = vpop.permute.xlu0 %798
        %v802 = vunpack.c.l.s4 839922192
        %v803 = vunpack.c.0.s8 %v802
        %v804 = vlaneseq
        %v805 = vshrl.u32 %v804, 7
        %v806 = vsub.s32 %v803, %v805
        %v807 = vrot.slane %v799, %v806
        %809 = vset.pattern.permute.xlu0 0
        %810 = vperm.xlu0 %809, %v469
        %v811 = vpop.permute.xlu0 %810
        %v814 = vunpack.c.l.s4 839922192
        %v815 = vunpack.c.0.s8 %v814
        %v816 = vlaneseq
        %v817 = vshrl.u32 %v816, 7
        %v818 = vsub.s32 %v815, %v817
        %v819 = vrot.slane %v811, %v818
        %821 = vset.pattern.permute.xlu0 0
        %822 = vperm.xlu0 %821, %v470
        %v823 = vpop.permute.xlu0 %822
        %v826 = vunpack.c.l.s4 839922192
        %v827 = vunpack.c.0.s8 %v826
        %v828 = vlaneseq
        %v829 = vshrl.u32 %v828, 7
        %v830 = vsub.s32 %v827, %v829
        %v831 = vrot.slane %v823, %v830
        %833 = vset.pattern.permute.xlu0 0
        %834 = vperm.xlu0 %833, %v471
        %v835 = vpop.permute.xlu0 %834
        %v838 = vunpack.c.l.s4 839922192
        %v839 = vunpack.c.0.s8 %v838
        %v840 = vlaneseq
        %v841 = vshrl.u32 %v840, 7
        %v842 = vsub.s32 %v839, %v841
        %v843 = vrot.slane %v835, %v842
        %845 = vset.pattern.permute.xlu0 0
        %846 = vperm.xlu0 %845, %v472
        %v847 = vpop.permute.xlu0 %846
        %v850 = vunpack.c.l.s4 839922192
        %v851 = vunpack.c.0.s8 %v850
        %v852 = vlaneseq
        %v853 = vshrl.u32 %v852, 7
        %v854 = vsub.s32 %v851, %v853
        %v855 = vrot.slane %v847, %v854
        %857 = vset.pattern.permute.xlu0 0
        %858 = vperm.xlu0 %857, %v473
        %v859 = vpop.permute.xlu0 %858
        %v862 = vunpack.c.l.s4 839922192
        %v863 = vunpack.c.0.s8 %v862
        %v864 = vlaneseq
        %v865 = vshrl.u32 %v864, 7
        %v866 = vsub.s32 %v863, %v865
        %v867 = vrot.slane %v859, %v866
        %869 = vset.pattern.permute.xlu0 0
        %870 = vperm.xlu0 %869, %v474
        %v871 = vpop.permute.xlu0 %870
        %v874 = vunpack.c.l.s4 839922192
        %v875 = vunpack.c.0.s8 %v874
        %v876 = vlaneseq
        %v877 = vshrl.u32 %v876, 7
        %v878 = vsub.s32 %v875, %v877
        %v879 = vrot.slane %v871, %v878
        %881 = vset.pattern.permute.xlu0 0
        %882 = vperm.xlu0 %881, %v475
        %v883 = vpop.permute.xlu0 %882
        %v886 = vunpack.c.l.s4 839922192
        %v887 = vunpack.c.0.s8 %v886
        %v888 = vlaneseq
        %v889 = vshrl.u32 %v888, 7
        %v890 = vsub.s32 %v887, %v889
        %v891 = vrot.slane %v883, %v890
        %893 = vset.pattern.permute.xlu0 0
        %894 = vperm.xlu0 %893, %v476
        %v895 = vpop.permute.xlu0 %894
        %v898 = vunpack.c.l.s4 839922192
        %v899 = vunpack.c.0.s8 %v898
        %v900 = vlaneseq
        %v901 = vshrl.u32 %v900, 7
        %v902 = vsub.s32 %v899, %v901
        %v903 = vrot.slane %v895, %v902
        %905 = vset.pattern.permute.xlu0 0
        %906 = vperm.xlu0 %905, %v477
        %v907 = vpop.permute.xlu0 %906
        %v910 = vunpack.c.l.s4 839922192
        %v911 = vunpack.c.0.s8 %v910
        %v912 = vlaneseq
        %v913 = vshrl.u32 %v912, 7
        %v914 = vsub.s32 %v911, %v913
        %v915 = vrot.slane %v907, %v914
        %917 = vset.pattern.permute.xlu0 0
        %918 = vperm.xlu0 %917, %v478
        %v919 = vpop.permute.xlu0 %918
        %v922 = vunpack.c.l.s4 839922192
        %v923 = vunpack.c.0.s8 %v922
        %v924 = vlaneseq
        %v925 = vshrl.u32 %v924, 7
        %v926 = vsub.s32 %v923, %v925
        %v927 = vrot.slane %v919, %v926
        %929 = vset.pattern.permute.xlu0 0
        %930 = vperm.xlu0 %929, %v479
        %v931 = vpop.permute.xlu0 %930
        %v934 = vunpack.c.l.s4 839922192
        %v935 = vunpack.c.0.s8 %v934
        %v936 = vlaneseq
        %v937 = vshrl.u32 %v936, 7
        %v938 = vsub.s32 %v935, %v937
        %v939 = vrot.slane %v931, %v938
        %941 = vset.pattern.permute.xlu0 0
        %942 = vperm.xlu0 %941, %v480
        %v943 = vpop.permute.xlu0 %942
        %v946 = vunpack.c.l.s4 839922192
        %v947 = vunpack.c.0.s8 %v946
        %v948 = vlaneseq
        %v949 = vshrl.u32 %v948, 7
        %v950 = vsub.s32 %v947, %v949
        %v951 = vrot.slane %v943, %v950
        %953 = vset.pattern.permute.xlu0 0
        %954 = vperm.xlu0 %953, %v481
        %v955 = vpop.permute.xlu0 %954
        %v958 = vunpack.c.l.s4 839922192
        %v959 = vunpack.c.0.s8 %v958
        %v960 = vlaneseq
        %v961 = vshrl.u32 %v960, 7
        %v962 = vsub.s32 %v959, %v961
        %v963 = vrot.slane %v955, %v962
        %965 = vset.pattern.permute.xlu0 0
        %966 = vperm.xlu0 %965, %v482
        %v967 = vpop.permute.xlu0 %966
        %v970 = vunpack.c.l.s4 839922192
        %v971 = vunpack.c.0.s8 %v970
        %v972 = vlaneseq
        %v973 = vshrl.u32 %v972, 7
        %v974 = vsub.s32 %v971, %v973
        %v975 = vrot.slane %v967, %v974
        %977 = vset.pattern.permute.xlu0 0
        %978 = vperm.xlu0 %977, %v483
        %v979 = vpop.permute.xlu0 %978
        %v982 = vunpack.c.l.s4 839922192
        %v983 = vunpack.c.0.s8 %v982
        %v984 = vlaneseq
        %v985 = vshrl.u32 %v984, 7
        %v986 = vsub.s32 %v983, %v985
        %v987 = vrot.slane %v979, %v986
        %989 = vset.pattern.permute.xlu0 0
        %990 = vperm.xlu0 %989, %v484
        %v991 = vpop.permute.xlu0 %990
        %v994 = vunpack.c.l.s4 839922192
        %v995 = vunpack.c.0.s8 %v994
        %v996 = vlaneseq
        %v997 = vshrl.u32 %v996, 7
        %v998 = vsub.s32 %v995, %v997
        %v999 = vrot.slane %v991, %v998
        %1001 = vset.pattern.permute.xlu0 0
        %1002 = vperm.xlu0 %1001, %v485
        %v1003 = vpop.permute.xlu0 %1002
        %v1006 = vunpack.c.l.s4 839922192
        %v1007 = vunpack.c.0.s8 %v1006
        %v1008 = vlaneseq
        %v1009 = vshrl.u32 %v1008, 7
        %v1010 = vsub.s32 %v1007, %v1009
        %v1011 = vrot.slane %v1003, %v1010
        %1013 = vset.pattern.permute.xlu0 0
        %1014 = vperm.xlu0 %1013, %v486
        %v1015 = vpop.permute.xlu0 %1014
        %v1018 = vunpack.c.l.s4 839922192
        %v1019 = vunpack.c.0.s8 %v1018
        %v1020 = vlaneseq
        %v1021 = vshrl.u32 %v1020, 7
        %v1022 = vsub.s32 %v1019, %v1021
        %v1023 = vrot.slane %v1015, %v1022
        %1025 = vset.pattern.permute.xlu0 0
        %1026 = vperm.xlu0 %1025, %v487
        %v1027 = vpop.permute.xlu0 %1026
        %v1030 = vunpack.c.l.s4 839922192
        %v1031 = vunpack.c.0.s8 %v1030
        %v1032 = vlaneseq
        %v1033 = vshrl.u32 %v1032, 7
        %v1034 = vsub.s32 %v1031, %v1033
        %v1035 = vrot.slane %v1027, %v1034
        %1037 = vset.pattern.permute.xlu0 0
        %1038 = vperm.xlu0 %1037, %v488
        %v1039 = vpop.permute.xlu0 %1038
        %v1042 = vunpack.c.l.s4 839922192
        %v1043 = vunpack.c.0.s8 %v1042
        %v1044 = vlaneseq
        %v1045 = vshrl.u32 %v1044, 7
        %v1046 = vsub.s32 %v1043, %v1045
        %v1047 = vrot.slane %v1039, %v1046
        %1049 = vset.pattern.permute.xlu0 0
        %1050 = vperm.xlu0 %1049, %v489
        %v1051 = vpop.permute.xlu0 %1050
        %v1054 = vunpack.c.l.s4 839922192
        %v1055 = vunpack.c.0.s8 %v1054
        %v1056 = vlaneseq
        %v1057 = vshrl.u32 %v1056, 7
        %v1058 = vsub.s32 %v1055, %v1057
        %v1059 = vrot.slane %v1051, %v1058
        %1061 = vset.pattern.permute.xlu0 0
        %1062 = vperm.xlu0 %1061, %v490
        %v1063 = vpop.permute.xlu0 %1062
        %v1066 = vunpack.c.l.s4 839922192
        %v1067 = vunpack.c.0.s8 %v1066
        %v1068 = vlaneseq
        %v1069 = vshrl.u32 %v1068, 7
        %v1070 = vsub.s32 %v1067, %v1069
        %v1071 = vrot.slane %v1063, %v1070
        %1073 = vset.pattern.permute.xlu0 0
        %1074 = vperm.xlu0 %1073, %v491
        %v1075 = vpop.permute.xlu0 %1074
        %v1078 = vunpack.c.l.s4 839922192
        %v1079 = vunpack.c.0.s8 %v1078
        %v1080 = vlaneseq
        %v1081 = vshrl.u32 %v1080, 7
        %v1082 = vsub.s32 %v1079, %v1081
        %v1083 = vrot.slane %v1075, %v1082
        %1085 = vset.pattern.permute.xlu0 0
        %1086 = vperm.xlu0 %1085, %v492
        %v1087 = vpop.permute.xlu0 %1086
        %v1090 = vunpack.c.l.s4 839922192
        %v1091 = vunpack.c.0.s8 %v1090
        %v1092 = vlaneseq
        %v1093 = vshrl.u32 %v1092, 7
        %v1094 = vsub.s32 %v1091, %v1093
        %v1095 = vrot.slane %v1087, %v1094
        %1097 = vset.pattern.permute.xlu0 0
        %1098 = vperm.xlu0 %1097, %v493
        %v1099 = vpop.permute.xlu0 %1098
        %v1102 = vunpack.c.l.s4 839922192
        %v1103 = vunpack.c.0.s8 %v1102
        %v1104 = vlaneseq
        %v1105 = vshrl.u32 %v1104, 7
        %v1106 = vsub.s32 %v1103, %v1105
        %v1107 = vrot.slane %v1099, %v1106
        %1109 = vset.pattern.permute.xlu0 0
        %1110 = vperm.xlu0 %1109, %v494
        %v1111 = vpop.permute.xlu0 %1110
        %v1114 = vunpack.c.l.s4 839922192
        %v1115 = vunpack.c.0.s8 %v1114
        %v1116 = vlaneseq
        %v1117 = vshrl.u32 %v1116, 7
        %v1118 = vsub.s32 %v1115, %v1117
        %v1119 = vrot.slane %v1111, %v1118
        %1121 = vset.pattern.permute.xlu0 0
        %1122 = vperm.xlu0 %1121, %v495
        %v1123 = vpop.permute.xlu0 %1122
        %v1126 = vunpack.c.l.s4 839922192
        %v1127 = vunpack.c.0.s8 %v1126
        %v1128 = vlaneseq
        %v1129 = vshrl.u32 %v1128, 7
        %v1130 = vsub.s32 %v1127, %v1129
        %v1131 = vrot.slane %v1123, %v1130
        %1133 = vset.pattern.permute.xlu0 0
        %1134 = vperm.xlu0 %1133, %v496
        %v1135 = vpop.permute.xlu0 %1134
        %v1138 = vunpack.c.l.s4 839922192
        %v1139 = vunpack.c.0.s8 %v1138
        %v1140 = vlaneseq
        %v1141 = vshrl.u32 %v1140, 7
        %v1142 = vsub.s32 %v1139, %v1141
        %v1143 = vrot.slane %v1135, %v1142
        %1145 = vset.pattern.permute.xlu0 0
        %1146 = vperm.xlu0 %1145, %v497
        %v1147 = vpop.permute.xlu0 %1146
        %v1150 = vunpack.c.l.s4 839922192
        %v1151 = vunpack.c.0.s8 %v1150
        %v1152 = vlaneseq
        %v1153 = vshrl.u32 %v1152, 7
        %v1154 = vsub.s32 %v1151, %v1153
        %v1155 = vrot.slane %v1147, %v1154
        %1157 = vset.pattern.permute.xlu0 0
        %1158 = vperm.xlu0 %1157, %v498
        %v1159 = vpop.permute.xlu0 %1158
        %v1162 = vunpack.c.l.s4 839922192
        %v1163 = vunpack.c.0.s8 %v1162
        %v1164 = vlaneseq
        %v1165 = vshrl.u32 %v1164, 7
        %v1166 = vsub.s32 %v1163, %v1165
        %v1167 = vrot.slane %v1159, %v1166
        %1169 = vset.pattern.permute.xlu0 0
        %1170 = vperm.xlu0 %1169, %v499
        %v1171 = vpop.permute.xlu0 %1170
        %v1174 = vunpack.c.l.s4 839922192
        %v1175 = vunpack.c.0.s8 %v1174
        %v1176 = vlaneseq
        %v1177 = vshrl.u32 %v1176, 7
        %v1178 = vsub.s32 %v1175, %v1177
        %v1179 = vrot.slane %v1171, %v1178
        %1181 = vset.pattern.permute.xlu0 0
        %1182 = vperm.xlu0 %1181, %v500
        %v1183 = vpop.permute.xlu0 %1182
        %v1186 = vunpack.c.l.s4 839922192
        %v1187 = vunpack.c.0.s8 %v1186
        %v1188 = vlaneseq
        %v1189 = vshrl.u32 %v1188, 7
        %v1190 = vsub.s32 %v1187, %v1189
        %v1191 = vrot.slane %v1183, %v1190
        %1193 = vset.pattern.permute.xlu0 0
        %1194 = vperm.xlu0 %1193, %v501
        %v1195 = vpop.permute.xlu0 %1194
        %v1198 = vunpack.c.l.s4 839922192
        %v1199 = vunpack.c.0.s8 %v1198
        %v1200 = vlaneseq
        %v1201 = vshrl.u32 %v1200, 7
        %v1202 = vsub.s32 %v1199, %v1201
        %v1203 = vrot.slane %v1195, %v1202
        %1205 = vset.pattern.permute.xlu0 0
        %1206 = vperm.xlu0 %1205, %v502
        %v1207 = vpop.permute.xlu0 %1206
        %v1210 = vunpack.c.l.s4 839922192
        %v1211 = vunpack.c.0.s8 %v1210
        %v1212 = vlaneseq
        %v1213 = vshrl.u32 %v1212, 7
        %v1214 = vsub.s32 %v1211, %v1213
        %v1215 = vrot.slane %v1207, %v1214
        %1217 = vset.pattern.permute.xlu0 0
        %1218 = vperm.xlu0 %1217, %v503
        %v1219 = vpop.permute.xlu0 %1218
        %v1222 = vunpack.c.l.s4 839922192
        %v1223 = vunpack.c.0.s8 %v1222
        %v1224 = vlaneseq
        %v1225 = vshrl.u32 %v1224, 7
        %v1226 = vsub.s32 %v1223, %v1225
        %v1227 = vrot.slane %v1219, %v1226
        %1229 = vset.pattern.permute.xlu0 0
        %1230 = vperm.xlu0 %1229, %v504
        %v1231 = vpop.permute.xlu0 %1230
        %v1234 = vunpack.c.l.s4 839922192
        %v1235 = vunpack.c.0.s8 %v1234
        %v1236 = vlaneseq
        %v1237 = vshrl.u32 %v1236, 7
        %v1238 = vsub.s32 %v1235, %v1237
        %v1239 = vrot.slane %v1231, %v1238
        %1241 = vset.pattern.permute.xlu0 0
        %1242 = vperm.xlu0 %1241, %v505
        %v1243 = vpop.permute.xlu0 %1242
        %v1246 = vunpack.c.l.s4 839922192
        %v1247 = vunpack.c.0.s8 %v1246
        %v1248 = vlaneseq
        %v1249 = vshrl.u32 %v1248, 7
        %v1250 = vsub.s32 %v1247, %v1249
        %v1251 = vrot.slane %v1243, %v1250
        %1253 = vset.pattern.permute.xlu0 0
        %1254 = vperm.xlu0 %1253, %v506
        %v1255 = vpop.permute.xlu0 %1254
        %v1258 = vunpack.c.l.s4 839922192
        %v1259 = vunpack.c.0.s8 %v1258
        %v1260 = vlaneseq
        %v1261 = vshrl.u32 %v1260, 7
        %v1262 = vsub.s32 %v1259, %v1261
        %v1263 = vrot.slane %v1255, %v1262
        %1265 = vset.pattern.permute.xlu0 0
        %1266 = vperm.xlu0 %1265, %v507
        %v1267 = vpop.permute.xlu0 %1266
        %v1270 = vunpack.c.l.s4 839922192
        %v1271 = vunpack.c.0.s8 %v1270
        %v1272 = vlaneseq
        %v1273 = vshrl.u32 %v1272, 7
        %v1274 = vsub.s32 %v1271, %v1273
        %v1275 = vrot.slane %v1267, %v1274
        %1277 = vset.pattern.permute.xlu0 0
        %1278 = vperm.xlu0 %1277, %v508
        %v1279 = vpop.permute.xlu0 %1278
        %v1282 = vunpack.c.l.s4 839922192
        %v1283 = vunpack.c.0.s8 %v1282
        %v1284 = vlaneseq
        %v1285 = vshrl.u32 %v1284, 7
        %v1286 = vsub.s32 %v1283, %v1285
        %v1287 = vrot.slane %v1279, %v1286
        %1289 = vset.pattern.permute.xlu0 0
        %1290 = vperm.xlu0 %1289, %v509
        %v1291 = vpop.permute.xlu0 %1290
        %v1294 = vunpack.c.l.s4 839922192
        %v1295 = vunpack.c.0.s8 %v1294
        %v1296 = vlaneseq
        %v1297 = vshrl.u32 %v1296, 7
        %v1298 = vsub.s32 %v1295, %v1297
        %v1299 = vrot.slane %v1291, %v1298
        %1301 = vset.pattern.permute.xlu0 0
        %1302 = vperm.xlu0 %1301, %v510
        %v1303 = vpop.permute.xlu0 %1302
        %v1306 = vunpack.c.l.s4 839922192
        %v1307 = vunpack.c.0.s8 %v1306
        %v1308 = vlaneseq
        %v1309 = vshrl.u32 %v1308, 7
        %v1310 = vsub.s32 %v1307, %v1309
        %v1311 = vrot.slane %v1303, %v1310
        %1313 = vset.pattern.permute.xlu0 0
        %1314 = vperm.xlu0 %1313, %v511
        %v1315 = vpop.permute.xlu0 %1314
        %v1318 = vunpack.c.l.s4 839922192
        %v1319 = vunpack.c.0.s8 %v1318
        %v1320 = vlaneseq
        %v1321 = vshrl.u32 %v1320, 7
        %v1322 = vsub.s32 %v1319, %v1321
        %v1323 = vrot.slane %v1315, %v1322
        %1325 = vset.pattern.permute.xlu0 0
        %1326 = vperm.xlu0 %1325, %v512
        %v1327 = vpop.permute.xlu0 %1326
        %v1330 = vunpack.c.l.s4 839922192
        %v1331 = vunpack.c.0.s8 %v1330
        %v1332 = vlaneseq
        %v1333 = vshrl.u32 %v1332, 7
        %v1334 = vsub.s32 %v1331, %v1333
        %v1335 = vrot.slane %v1327, %v1334
        %1337 = vset.pattern.permute.xlu0 0
        %1338 = vperm.xlu0 %1337, %v513
        %v1339 = vpop.permute.xlu0 %1338
        %v1342 = vunpack.c.l.s4 839922192
        %v1343 = vunpack.c.0.s8 %v1342
        %v1344 = vlaneseq
        %v1345 = vshrl.u32 %v1344, 7
        %v1346 = vsub.s32 %v1343, %v1345
        %v1347 = vrot.slane %v1339, %v1346
        %1349 = vset.pattern.permute.xlu0 0
        %1350 = vperm.xlu0 %1349, %v514
        %v1351 = vpop.permute.xlu0 %1350
        %v1354 = vunpack.c.l.s4 839922192
        %v1355 = vunpack.c.0.s8 %v1354
        %v1356 = vlaneseq
        %v1357 = vshrl.u32 %v1356, 7
        %v1358 = vsub.s32 %v1355, %v1357
        %v1359 = vrot.slane %v1351, %v1358
        %1361 = vset.pattern.permute.xlu0 0
        %1362 = vperm.xlu0 %1361, %v515
        %v1363 = vpop.permute.xlu0 %1362
        %v1366 = vunpack.c.l.s4 839922192
        %v1367 = vunpack.c.0.s8 %v1366
        %v1368 = vlaneseq
        %v1369 = vshrl.u32 %v1368, 7
        %v1370 = vsub.s32 %v1367, %v1369
        %v1371 = vrot.slane %v1363, %v1370
        %1373 = vset.pattern.permute.xlu0 0
        %1374 = vperm.xlu0 %1373, %v516
        %v1375 = vpop.permute.xlu0 %1374
        %v1378 = vunpack.c.l.s4 839922192
        %v1379 = vunpack.c.0.s8 %v1378
        %v1380 = vlaneseq
        %v1381 = vshrl.u32 %v1380, 7
        %v1382 = vsub.s32 %v1379, %v1381
        %v1383 = vrot.slane %v1375, %v1382
        %1385 = vset.pattern.permute.xlu0 0
        %1386 = vperm.xlu0 %1385, %v517
        %v1387 = vpop.permute.xlu0 %1386
        %v1390 = vunpack.c.l.s4 839922192
        %v1391 = vunpack.c.0.s8 %v1390
        %v1392 = vlaneseq
        %v1393 = vshrl.u32 %v1392, 7
        %v1394 = vsub.s32 %v1391, %v1393
        %v1395 = vrot.slane %v1387, %v1394
        %1397 = vset.pattern.permute.xlu0 0
        %1398 = vperm.xlu0 %1397, %v518
        %v1399 = vpop.permute.xlu0 %1398
        %v1402 = vunpack.c.l.s4 839922192
        %v1403 = vunpack.c.0.s8 %v1402
        %v1404 = vlaneseq
        %v1405 = vshrl.u32 %v1404, 7
        %v1406 = vsub.s32 %v1403, %v1405
        %v1407 = vrot.slane %v1399, %v1406
        %1409 = vset.pattern.permute.xlu0 0
        %1410 = vperm.xlu0 %1409, %v519
        %v1411 = vpop.permute.xlu0 %1410
        %v1414 = vunpack.c.l.s4 839922192
        %v1415 = vunpack.c.0.s8 %v1414
        %v1416 = vlaneseq
        %v1417 = vshrl.u32 %v1416, 7
        %v1418 = vsub.s32 %v1415, %v1417
        %v1419 = vrot.slane %v1411, %v1418
        %1421 = vset.pattern.permute.xlu0 0
        %1422 = vperm.xlu0 %1421, %v520
        %v1423 = vpop.permute.xlu0 %1422
        %v1426 = vunpack.c.l.s4 839922192
        %v1427 = vunpack.c.0.s8 %v1426
        %v1428 = vlaneseq
        %v1429 = vshrl.u32 %v1428, 7
        %v1430 = vsub.s32 %v1427, %v1429
        %v1431 = vrot.slane %v1423, %v1430
        %1433 = vset.pattern.permute.xlu0 0
        %1434 = vperm.xlu0 %1433, %v521
        %v1435 = vpop.permute.xlu0 %1434
        %v1438 = vunpack.c.l.s4 839922192
        %v1439 = vunpack.c.0.s8 %v1438
        %v1440 = vlaneseq
        %v1441 = vshrl.u32 %v1440, 7
        %v1442 = vsub.s32 %v1439, %v1441
        %v1443 = vrot.slane %v1435, %v1442
        %1445 = vset.pattern.permute.xlu0 0
        %1446 = vperm.xlu0 %1445, %v522
        %v1447 = vpop.permute.xlu0 %1446
        %v1450 = vunpack.c.l.s4 839922192
        %v1451 = vunpack.c.0.s8 %v1450
        %v1452 = vlaneseq
        %v1453 = vshrl.u32 %v1452, 7
        %v1454 = vsub.s32 %v1451, %v1453
        %v1455 = vrot.slane %v1447, %v1454
        %1457 = vset.pattern.permute.xlu0 0
        %1458 = vperm.xlu0 %1457, %v523
        %v1459 = vpop.permute.xlu0 %1458
        %v1462 = vunpack.c.l.s4 839922192
        %v1463 = vunpack.c.0.s8 %v1462
        %v1464 = vlaneseq
        %v1465 = vshrl.u32 %v1464, 7
        %v1466 = vsub.s32 %v1463, %v1465
        %v1467 = vrot.slane %v1459, %v1466
        %1469 = vset.pattern.permute.xlu0 0
        %1470 = vperm.xlu0 %1469, %v524
        %v1471 = vpop.permute.xlu0 %1470
        %v1474 = vunpack.c.l.s4 839922192
        %v1475 = vunpack.c.0.s8 %v1474
        %v1476 = vlaneseq
        %v1477 = vshrl.u32 %v1476, 7
        %v1478 = vsub.s32 %v1475, %v1477
        %v1479 = vrot.slane %v1471, %v1478
        %1481 = vset.pattern.permute.xlu0 0
        %1482 = vperm.xlu0 %1481, %v525
        %v1483 = vpop.permute.xlu0 %1482
        %v1486 = vunpack.c.l.s4 839922192
        %v1487 = vunpack.c.0.s8 %v1486
        %v1488 = vlaneseq
        %v1489 = vshrl.u32 %v1488, 7
        %v1490 = vsub.s32 %v1487, %v1489
        %v1491 = vrot.slane %v1483, %v1490
        %1493 = vset.pattern.permute.xlu0 0
        %1494 = vperm.xlu0 %1493, %v526
        %v1495 = vpop.permute.xlu0 %1494
        %v1498 = vunpack.c.l.s4 839922192
        %v1499 = vunpack.c.0.s8 %v1498
        %v1500 = vlaneseq
        %v1501 = vshrl.u32 %v1500, 7
        %v1502 = vsub.s32 %v1499, %v1501
        %v1503 = vrot.slane %v1495, %v1502
        %1505 = vset.pattern.permute.xlu0 0
        %1506 = vperm.xlu0 %1505, %v527
        %v1507 = vpop.permute.xlu0 %1506
        %v1510 = vunpack.c.l.s4 839922192
        %v1511 = vunpack.c.0.s8 %v1510
        %v1512 = vlaneseq
        %v1513 = vshrl.u32 %v1512, 7
        %v1514 = vsub.s32 %v1511, %v1513
        %v1515 = vrot.slane %v1507, %v1514
        %1517 = vset.pattern.permute.xlu0 0
        %1518 = vperm.xlu0 %1517, %v528
        %v1519 = vpop.permute.xlu0 %1518
        %v1522 = vunpack.c.l.s4 839922192
        %v1523 = vunpack.c.0.s8 %v1522
        %v1524 = vlaneseq
        %v1525 = vshrl.u32 %v1524, 7
        %v1526 = vsub.s32 %v1523, %v1525
        %v1527 = vrot.slane %v1519, %v1526
        %1529 = vset.pattern.permute.xlu0 0
        %1530 = vperm.xlu0 %1529, %v529
        %v1531 = vpop.permute.xlu0 %1530
        %v1534 = vunpack.c.l.s4 839922192
        %v1535 = vunpack.c.0.s8 %v1534
        %v1536 = vlaneseq
        %v1537 = vshrl.u32 %v1536, 7
        %v1538 = vsub.s32 %v1535, %v1537
        %v1539 = vrot.slane %v1531, %v1538
        %1541 = vset.pattern.permute.xlu0 0
        %1542 = vperm.xlu0 %1541, %v530
        %v1543 = vpop.permute.xlu0 %1542
        %v1546 = vunpack.c.l.s4 839922192
        %v1547 = vunpack.c.0.s8 %v1546
        %v1548 = vlaneseq
        %v1549 = vshrl.u32 %v1548, 7
        %v1550 = vsub.s32 %v1547, %v1549
        %v1551 = vrot.slane %v1543, %v1550
        %1553 = vset.pattern.permute.xlu0 0
        %1554 = vperm.xlu0 %1553, %v531
        %v1555 = vpop.permute.xlu0 %1554
        %v1558 = vunpack.c.l.s4 839922192
        %v1559 = vunpack.c.0.s8 %v1558
        %v1560 = vlaneseq
        %v1561 = vshrl.u32 %v1560, 7
        %v1562 = vsub.s32 %v1559, %v1561
        %v1563 = vrot.slane %v1555, %v1562
        %1565 = vset.pattern.permute.xlu0 0
        %1566 = vperm.xlu0 %1565, %v532
        %v1567 = vpop.permute.xlu0 %1566
        %v1570 = vunpack.c.l.s4 839922192
        %v1571 = vunpack.c.0.s8 %v1570
        %v1572 = vlaneseq
        %v1573 = vshrl.u32 %v1572, 7
        %v1574 = vsub.s32 %v1571, %v1573
        %v1575 = vrot.slane %v1567, %v1574
        %1577 = vset.pattern.permute.xlu0 0
        %1578 = vperm.xlu0 %1577, %v533
        %v1579 = vpop.permute.xlu0 %1578
        %v1582 = vunpack.c.l.s4 839922192
        %v1583 = vunpack.c.0.s8 %v1582
        %v1584 = vlaneseq
        %v1585 = vshrl.u32 %v1584, 7
        %v1586 = vsub.s32 %v1583, %v1585
        %v1587 = vrot.slane %v1579, %v1586
        %1589 = vset.pattern.permute.xlu0 0
        %1590 = vperm.xlu0 %1589, %v534
        %v1591 = vpop.permute.xlu0 %1590
        %v1594 = vunpack.c.l.s4 839922192
        %v1595 = vunpack.c.0.s8 %v1594
        %v1596 = vlaneseq
        %v1597 = vshrl.u32 %v1596, 7
        %v1598 = vsub.s32 %v1595, %v1597
        %v1599 = vrot.slane %v1591, %v1598
        %1601 = vset.pattern.permute.xlu0 0
        %1602 = vperm.xlu0 %1601, %v535
        %v1603 = vpop.permute.xlu0 %1602
        %v1606 = vunpack.c.l.s4 839922192
        %v1607 = vunpack.c.0.s8 %v1606
        %v1608 = vlaneseq
        %v1609 = vshrl.u32 %v1608, 7
        %v1610 = vsub.s32 %v1607, %v1609
        %v1611 = vrot.slane %v1603, %v1610
        %1613 = vset.pattern.permute.xlu0 0
        %1614 = vperm.xlu0 %1613, %v536
        %v1615 = vpop.permute.xlu0 %1614
        %v1618 = vunpack.c.l.s4 839922192
        %v1619 = vunpack.c.0.s8 %v1618
        %v1620 = vlaneseq
        %v1621 = vshrl.u32 %v1620, 7
        %v1622 = vsub.s32 %v1619, %v1621
        %v1623 = vrot.slane %v1615, %v1622
        %1625 = vset.pattern.permute.xlu0 0
        %1626 = vperm.xlu0 %1625, %v537
        %v1627 = vpop.permute.xlu0 %1626
        %v1630 = vunpack.c.l.s4 839922192
        %v1631 = vunpack.c.0.s8 %v1630
        %v1632 = vlaneseq
        %v1633 = vshrl.u32 %v1632, 7
        %v1634 = vsub.s32 %v1631, %v1633
        %v1635 = vrot.slane %v1627, %v1634
        %1637 = vset.pattern.permute.xlu0 0
        %1638 = vperm.xlu0 %1637, %v538
        %v1639 = vpop.permute.xlu0 %1638
        %v1642 = vunpack.c.l.s4 839922192
        %v1643 = vunpack.c.0.s8 %v1642
        %v1644 = vlaneseq
        %v1645 = vshrl.u32 %v1644, 7
        %v1646 = vsub.s32 %v1643, %v1645
        %v1647 = vrot.slane %v1639, %v1646
        %1649 = vset.pattern.permute.xlu0 0
        %1650 = vperm.xlu0 %1649, %v539
        %v1651 = vpop.permute.xlu0 %1650
        %v1654 = vunpack.c.l.s4 839922192
        %v1655 = vunpack.c.0.s8 %v1654
        %v1656 = vlaneseq
        %v1657 = vshrl.u32 %v1656, 7
        %v1658 = vsub.s32 %v1655, %v1657
        %v1659 = vrot.slane %v1651, %v1658
        %1661 = vset.pattern.permute.xlu0 0
        %1662 = vperm.xlu0 %1661, %v540
        %v1663 = vpop.permute.xlu0 %1662
        %v1666 = vunpack.c.l.s4 839922192
        %v1667 = vunpack.c.0.s8 %v1666
        %v1668 = vlaneseq
        %v1669 = vshrl.u32 %v1668, 7
        %v1670 = vsub.s32 %v1667, %v1669
        %v1671 = vrot.slane %v1663, %v1670
        %1673 = vset.pattern.permute.xlu0 0
        %1674 = vperm.xlu0 %1673, %v541
        %v1675 = vpop.permute.xlu0 %1674
        %v1678 = vunpack.c.l.s4 839922192
        %v1679 = vunpack.c.0.s8 %v1678
        %v1680 = vlaneseq
        %v1681 = vshrl.u32 %v1680, 7
        %v1682 = vsub.s32 %v1679, %v1681
        %v1683 = vrot.slane %v1675, %v1682
        %1685 = vset.pattern.permute.xlu0 0
        %1686 = vperm.xlu0 %1685, %v542
        %v1687 = vpop.permute.xlu0 %1686
        %v1690 = vunpack.c.l.s4 839922192
        %v1691 = vunpack.c.0.s8 %v1690
        %v1692 = vlaneseq
        %v1693 = vshrl.u32 %v1692, 7
        %v1694 = vsub.s32 %v1691, %v1693
        %v1695 = vrot.slane %v1687, %v1694
        %1697 = vset.pattern.permute.xlu0 0
        %1698 = vperm.xlu0 %1697, %v543
        %v1699 = vpop.permute.xlu0 %1698
        %v1702 = vunpack.c.l.s4 839922192
        %v1703 = vunpack.c.0.s8 %v1702
        %v1704 = vlaneseq
        %v1705 = vshrl.u32 %v1704, 7
        %v1706 = vsub.s32 %v1703, %v1705
        %v1707 = vrot.slane %v1699, %v1706
        %1709 = vset.pattern.permute.xlu0 0
        %1710 = vperm.xlu0 %1709, %v544
        %v1711 = vpop.permute.xlu0 %1710
        %v1714 = vunpack.c.l.s4 839922192
        %v1715 = vunpack.c.0.s8 %v1714
        %v1716 = vlaneseq
        %v1717 = vshrl.u32 %v1716, 7
        %v1718 = vsub.s32 %v1715, %v1717
        %v1719 = vrot.slane %v1711, %v1718
        %1721 = vset.pattern.permute.xlu0 0
        %1722 = vperm.xlu0 %1721, %v545
        %v1723 = vpop.permute.xlu0 %1722
        %v1726 = vunpack.c.l.s4 839922192
        %v1727 = vunpack.c.0.s8 %v1726
        %v1728 = vlaneseq
        %v1729 = vshrl.u32 %v1728, 7
        %v1730 = vsub.s32 %v1727, %v1729
        %v1731 = vrot.slane %v1723, %v1730
        %1733 = vset.pattern.permute.xlu0 0
        %1734 = vperm.xlu0 %1733, %v546
        %v1735 = vpop.permute.xlu0 %1734
        %v1738 = vunpack.c.l.s4 839922192
        %v1739 = vunpack.c.0.s8 %v1738
        %v1740 = vlaneseq
        %v1741 = vshrl.u32 %v1740, 7
        %v1742 = vsub.s32 %v1739, %v1741
        %v1743 = vrot.slane %v1735, %v1742
        %1745 = vset.pattern.permute.xlu0 0
        %1746 = vperm.xlu0 %1745, %v547
        %v1747 = vpop.permute.xlu0 %1746
        %v1750 = vunpack.c.l.s4 839922192
        %v1751 = vunpack.c.0.s8 %v1750
        %v1752 = vlaneseq
        %v1753 = vshrl.u32 %v1752, 7
        %v1754 = vsub.s32 %v1751, %v1753
        %v1755 = vrot.slane %v1747, %v1754
        %1757 = vset.pattern.permute.xlu0 0
        %1758 = vperm.xlu0 %1757, %v548
        %v1759 = vpop.permute.xlu0 %1758
        %v1762 = vunpack.c.l.s4 839922192
        %v1763 = vunpack.c.0.s8 %v1762
        %v1764 = vlaneseq
        %v1765 = vshrl.u32 %v1764, 7
        %v1766 = vsub.s32 %v1763, %v1765
        %v1767 = vrot.slane %v1759, %v1766
        %1769 = vset.pattern.permute.xlu0 0
        %1770 = vperm.xlu0 %1769, %v549
        %v1771 = vpop.permute.xlu0 %1770
        %v1774 = vunpack.c.l.s4 839922192
        %v1775 = vunpack.c.0.s8 %v1774
        %v1776 = vlaneseq
        %v1777 = vshrl.u32 %v1776, 7
        %v1778 = vsub.s32 %v1775, %v1777
        %v1779 = vrot.slane %v1771, %v1778
        %1781 = vset.pattern.permute.xlu0 0
        %1782 = vperm.xlu0 %1781, %v550
        %v1783 = vpop.permute.xlu0 %1782
        %v1786 = vunpack.c.l.s4 839922192
        %v1787 = vunpack.c.0.s8 %v1786
        %v1788 = vlaneseq
        %v1789 = vshrl.u32 %v1788, 7
        %v1790 = vsub.s32 %v1787, %v1789
        %v1791 = vrot.slane %v1783, %v1790
        %1793 = vset.pattern.permute.xlu0 0
        %1794 = vperm.xlu0 %1793, %v551
        %v1795 = vpop.permute.xlu0 %1794
        %v1798 = vunpack.c.l.s4 839922192
        %v1799 = vunpack.c.0.s8 %v1798
        %v1800 = vlaneseq
        %v1801 = vshrl.u32 %v1800, 7
        %v1802 = vsub.s32 %v1799, %v1801
        %v1803 = vrot.slane %v1795, %v1802
        %1805 = vset.pattern.permute.xlu0 0
        %1806 = vperm.xlu0 %1805, %v552
        %v1807 = vpop.permute.xlu0 %1806
        %v1810 = vunpack.c.l.s4 839922192
        %v1811 = vunpack.c.0.s8 %v1810
        %v1812 = vlaneseq
        %v1813 = vshrl.u32 %v1812, 7
        %v1814 = vsub.s32 %v1811, %v1813
        %v1815 = vrot.slane %v1807, %v1814
        %1817 = vset.pattern.permute.xlu0 0
        %1818 = vperm.xlu0 %1817, %v553
        %v1819 = vpop.permute.xlu0 %1818
        %v1822 = vunpack.c.l.s4 839922192
        %v1823 = vunpack.c.0.s8 %v1822
        %v1824 = vlaneseq
        %v1825 = vshrl.u32 %v1824, 7
        %v1826 = vsub.s32 %v1823, %v1825
        %v1827 = vrot.slane %v1819, %v1826
        %1829 = vset.pattern.permute.xlu0 0
        %1830 = vperm.xlu0 %1829, %v554
        %v1831 = vpop.permute.xlu0 %1830
        %v1834 = vunpack.c.l.s4 839922192
        %v1835 = vunpack.c.0.s8 %v1834
        %v1836 = vlaneseq
        %v1837 = vshrl.u32 %v1836, 7
        %v1838 = vsub.s32 %v1835, %v1837
        %v1839 = vrot.slane %v1831, %v1838
        %1841 = vset.pattern.permute.xlu0 0
        %1842 = vperm.xlu0 %1841, %v555
        %v1843 = vpop.permute.xlu0 %1842
        %v1846 = vunpack.c.l.s4 839922192
        %v1847 = vunpack.c.0.s8 %v1846
        %v1848 = vlaneseq
        %v1849 = vshrl.u32 %v1848, 7
        %v1850 = vsub.s32 %v1847, %v1849
        %v1851 = vrot.slane %v1843, %v1850
        %v1852 = vmul.bf16 %v340, %v567
        %v1853 = vmul.bf16 %v341, %v579
        %v1854 = vmul.bf16 %v342, %v591
        %v1855 = vmul.bf16 %v343, %v603
        %v1856 = vmul.bf16 %v344, %v615
        %v1857 = vmul.bf16 %v345, %v627
        %v1858 = vmul.bf16 %v346, %v639
        %v1859 = vmul.bf16 %v347, %v651
        %v1860 = vmul.bf16 %v348, %v663
        %v1861 = vmul.bf16 %v349, %v675
        %v1862 = vmul.bf16 %v350, %v687
        %v1863 = vmul.bf16 %v351, %v699
        %v1864 = vmul.bf16 %v352, %v711
        %v1865 = vmul.bf16 %v353, %v723
        %v1866 = vmul.bf16 %v354, %v735
        %v1867 = vmul.bf16 %v355, %v747
        %v1868 = vmul.bf16 %v356, %v759
        %v1869 = vmul.bf16 %v357, %v771
        %v1870 = vmul.bf16 %v358, %v783
        %v1871 = vmul.bf16 %v359, %v795
        %v1872 = vmul.bf16 %v360, %v807
        %v1873 = vmul.bf16 %v361, %v819
        %v1874 = vmul.bf16 %v362, %v831
        %v1875 = vmul.bf16 %v363, %v843
        %v1876 = vmul.bf16 %v364, %v855
        %v1877 = vmul.bf16 %v365, %v867
        %v1878 = vmul.bf16 %v366, %v879
        %v1879 = vmul.bf16 %v367, %v891
        %v1880 = vmul.bf16 %v368, %v903
        %v1881 = vmul.bf16 %v369, %v915
        %v1882 = vmul.bf16 %v370, %v927
        %v1883 = vmul.bf16 %v371, %v939
        %v1884 = vmul.bf16 %v372, %v951
        %v1885 = vmul.bf16 %v373, %v963
        %v1886 = vmul.bf16 %v374, %v975
        %v1887 = vmul.bf16 %v375, %v987
        %v1888 = vmul.bf16 %v376, %v999
        %v1889 = vmul.bf16 %v377, %v1011
        %v1890 = vmul.bf16 %v378, %v1023
        %v1891 = vmul.bf16 %v379, %v1035
        %v1892 = vmul.bf16 %v380, %v1047
        %v1893 = vmul.bf16 %v381, %v1059
        %v1894 = vmul.bf16 %v382, %v1071
        %v1895 = vmul.bf16 %v383, %v1083
        %v1896 = vmul.bf16 %v384, %v1095
        %v1897 = vmul.bf16 %v385, %v1107
        %v1898 = vmul.bf16 %v386, %v1119
        %v1899 = vmul.bf16 %v387, %v1131
        %v1900 = vmul.bf16 %v388, %v1143
        %v1901 = vmul.bf16 %v389, %v1155
        %v1902 = vmul.bf16 %v390, %v1167
        %v1903 = vmul.bf16 %v391, %v1179
        %v1904 = vmul.bf16 %v392, %v1191
        %v1905 = vmul.bf16 %v393, %v1203
        %v1906 = vmul.bf16 %v394, %v1215
        %v1907 = vmul.bf16 %v395, %v1227
        %v1908 = vmul.bf16 %v396, %v1239
        %v1909 = vmul.bf16 %v397, %v1251
        %v1910 = vmul.bf16 %v398, %v1263
        %v1911 = vmul.bf16 %v399, %v1275
        %v1912 = vmul.bf16 %v400, %v1287
        %v1913 = vmul.bf16 %v401, %v1299
        %v1914 = vmul.bf16 %v402, %v1311
        %v1915 = vmul.bf16 %v403, %v1323
        %v1916 = vmul.bf16 %v404, %v1335
        %v1917 = vmul.bf16 %v405, %v1347
        %v1918 = vmul.bf16 %v406, %v1359
        %v1919 = vmul.bf16 %v407, %v1371
        %v1920 = vmul.bf16 %v408, %v1383
        %v1921 = vmul.bf16 %v409, %v1395
        %v1922 = vmul.bf16 %v410, %v1407
        %v1923 = vmul.bf16 %v411, %v1419
        %v1924 = vmul.bf16 %v412, %v1431
        %v1925 = vmul.bf16 %v413, %v1443
        %v1926 = vmul.bf16 %v414, %v1455
        %v1927 = vmul.bf16 %v415, %v1467
        %v1928 = vmul.bf16 %v416, %v1479
        %v1929 = vmul.bf16 %v417, %v1491
        %v1930 = vmul.bf16 %v418, %v1503
        %v1931 = vmul.bf16 %v419, %v1515
        %v1932 = vmul.bf16 %v420, %v1527
        %v1933 = vmul.bf16 %v421, %v1539
        %v1934 = vmul.bf16 %v422, %v1551
        %v1935 = vmul.bf16 %v423, %v1563
        %v1936 = vmul.bf16 %v424, %v1575
        %v1937 = vmul.bf16 %v425, %v1587
        %v1938 = vmul.bf16 %v426, %v1599
        %v1939 = vmul.bf16 %v427, %v1611
        %v1940 = vmul.bf16 %v428, %v1623
        %v1941 = vmul.bf16 %v429, %v1635
        %v1942 = vmul.bf16 %v430, %v1647
        %v1943 = vmul.bf16 %v431, %v1659
        %v1944 = vmul.bf16 %v432, %v1671
        %v1945 = vmul.bf16 %v433, %v1683
        %v1946 = vmul.bf16 %v434, %v1695
        %v1947 = vmul.bf16 %v435, %v1707
        %v1948 = vmul.bf16 %v436, %v1719
        %v1949 = vmul.bf16 %v437, %v1731
        %v1950 = vmul.bf16 %v438, %v1743
        %v1951 = vmul.bf16 %v439, %v1755
        %v1952 = vmul.bf16 %v440, %v1767
        %v1953 = vmul.bf16 %v441, %v1779
        %v1954 = vmul.bf16 %v442, %v1791
        %v1955 = vmul.bf16 %v443, %v1803
        %v1956 = vmul.bf16 %v444, %v1815
        %v1957 = vmul.bf16 %v445, %v1827
        %v1958 = vmul.bf16 %v446, %v1839
        %v1959 = vmul.bf16 %v447, %v1851
        %v1960 = vld [vmem:[%s298] sm:$0xff]
        %v1961 = vld [vmem:[%s298 + $0x8] sm:$0xff]
        %v1962 = vld [vmem:[%s298 + $0x10] sm:$0xff]
        %v1963 = vld [vmem:[%s298 + $0x18] sm:$0xf]
        %v1964 = vld [vmem:[%s298 + $0x1c] sm:$0xff]
        %v1965 = vld [vmem:[%s298 + $0x24] sm:$0xff]
        %v1966 = vld [vmem:[%s298 + $0x2c] sm:$0xff]
        %v1967 = vld [vmem:[%s298 + $0x34] sm:$0xf]
        %v1968 = vld [vmem:[%s298 + $0x38] sm:$0xff]
        %v1969 = vld [vmem:[%s298 + $0x40] sm:$0xff]
        %v1970 = vld [vmem:[%s298 + $0x48] sm:$0xff]
        %v1971 = vld [vmem:[%s298 + $0x50] sm:$0xf]
        %v1972 = vld [vmem:[%s298 + $0x54] sm:$0xff]
        %v1973 = vld [vmem:[%s298 + $0x5c] sm:$0xff]
        %v1974 = vld [vmem:[%s298 + $0x64] sm:$0xff]
        %v1975 = vld [vmem:[%s298 + $0x6c] sm:$0xf]
        %v1976 = vld [vmem:[%s298 + $0x70] sm:$0xff]
        %v1977 = vld [vmem:[%s298 + $0x78] sm:$0xff]
        %v1978 = vld [vmem:[%s298 + $0x80] sm:$0xff]
        %v1979 = vld [vmem:[%s298 + $0x88] sm:$0xf]
        %v1980 = vld [vmem:[%s298 + $0x8c] sm:$0xff]
        %v1981 = vld [vmem:[%s298 + $0x94] sm:$0xff]
        %v1982 = vld [vmem:[%s298 + $0x9c] sm:$0xff]
        %v1983 = vld [vmem:[%s298 + $0xa4] sm:$0xf]
        %v1984 = vld [vmem:[%s298 + $0xa8] sm:$0xff]
        %v1985 = vld [vmem:[%s298 + $0xb0] sm:$0xff]
        %v1986 = vld [vmem:[%s298 + $0xb8] sm:$0xff]
        %v1987 = vld [vmem:[%s298 + $0xc0] sm:$0xf]
        %v1988 = vld [vmem:[%s298 + $0xc4] sm:$0xff]
        %v1989 = vld [vmem:[%s298 + $0xcc] sm:$0xff]
        %v1990 = vld [vmem:[%s298 + $0xd4] sm:$0xff]
        %v1991 = vld [vmem:[%s298 + $0xdc] sm:$0xf]
        %v1992 = vld [vmem:[%s298 + $0xe0] sm:$0xff]
        %v1993 = vld [vmem:[%s298 + $0xe8] sm:$0xff]
        %v1994 = vld [vmem:[%s298 + $0xf0] sm:$0xff]
        %v1995 = vld [vmem:[%s298 + $0xf8] sm:$0xf]
        %v1996 = vld [vmem:[%s298 + $0xfc] sm:$0xff]
        %v1997 = vld [vmem:[%s298 + $0x104] sm:$0xff]
        %v1998 = vld [vmem:[%s298 + $0x10c] sm:$0xff]
        %v1999 = vld [vmem:[%s298 + $0x114] sm:$0xf]
        %v2000 = vld [vmem:[%s298 + $0x118] sm:$0xff]
        %v2001 = vld [vmem:[%s298 + $0x120] sm:$0xff]
        %v2002 = vld [vmem:[%s298 + $0x128] sm:$0xff]
        %v2003 = vld [vmem:[%s298 + $0x130] sm:$0xf]
        %v2004 = vld [vmem:[%s298 + $0x134] sm:$0xff]
        %v2005 = vld [vmem:[%s298 + $0x13c] sm:$0xff]
        %v2006 = vld [vmem:[%s298 + $0x144] sm:$0xff]
        %v2007 = vld [vmem:[%s298 + $0x14c] sm:$0xf]
        %v2008 = vld [vmem:[%s298 + $0x150] sm:$0xff]
        %v2009 = vld [vmem:[%s298 + $0x158] sm:$0xff]
        %v2010 = vld [vmem:[%s298 + $0x160] sm:$0xff]
        %v2011 = vld [vmem:[%s298 + $0x168] sm:$0xf]
        %v2012 = vld [vmem:[%s298 + $0x16c] sm:$0xff]
        %v2013 = vld [vmem:[%s298 + $0x174] sm:$0xff]
        %v2014 = vld [vmem:[%s298 + $0x17c] sm:$0xff]
        %v2015 = vld [vmem:[%s298 + $0x184] sm:$0xf]
        %v2016 = vld [vmem:[%s298 + $0x188] sm:$0xff]
        %v2017 = vld [vmem:[%s298 + $0x190] sm:$0xff]
        %v2018 = vld [vmem:[%s298 + $0x198] sm:$0xff]
        %v2019 = vld [vmem:[%s298 + $0x1a0] sm:$0xf]
        %v2020 = vld [vmem:[%s298 + $0x1a4] sm:$0xff]
        %v2021 = vld [vmem:[%s298 + $0x1ac] sm:$0xff]
        %v2022 = vld [vmem:[%s298 + $0x1b4] sm:$0xff]
        %v2023 = vld [vmem:[%s298 + $0x1bc] sm:$0xf]
        %v2088 = vunpack.c.l.b16 %v1960
        %v2089 = vunpack.c.h.b16 %v1960
        %v2090 = vunpack.c.l.b16 %v1961
        %v2091 = vunpack.c.h.b16 %v1961
        %v2092 = vunpack.c.l.b16 %v1962
        %v2093 = vunpack.c.h.b16 %v1962
        %v2094 = vunpack.c.l.b16 %v1963
        %v2095 = vunpack.c.l.b16 %v1964
        %v2096 = vunpack.c.h.b16 %v1964
        %v2097 = vunpack.c.l.b16 %v1965
        %v2098 = vunpack.c.h.b16 %v1965
        %v2099 = vunpack.c.l.b16 %v1966
        %v2100 = vunpack.c.h.b16 %v1966
        %v2101 = vunpack.c.l.b16 %v1967
        %v2102 = vunpack.c.l.b16 %v1968
        %v2103 = vunpack.c.h.b16 %v1968
        %v2104 = vunpack.c.l.b16 %v1969
        %v2105 = vunpack.c.h.b16 %v1969
        %v2106 = vunpack.c.l.b16 %v1970
        %v2107 = vunpack.c.h.b16 %v1970
        %v2108 = vunpack.c.l.b16 %v1971
        %v2109 = vunpack.c.l.b16 %v1972
        %v2110 = vunpack.c.h.b16 %v1972
        %v2111 = vunpack.c.l.b16 %v1973
        %v2112 = vunpack.c.h.b16 %v1973
        %v2113 = vunpack.c.l.b16 %v1974
        %v2114 = vunpack.c.h.b16 %v1974
        %v2115 = vunpack.c.l.b16 %v1975
        %v2116 = vunpack.c.l.b16 %v1976
        %v2117 = vunpack.c.h.b16 %v1976
        %v2118 = vunpack.c.l.b16 %v1977
        %v2119 = vunpack.c.h.b16 %v1977
        %v2120 = vunpack.c.l.b16 %v1978
        %v2121 = vunpack.c.h.b16 %v1978
        %v2122 = vunpack.c.l.b16 %v1979
        %v2123 = vunpack.c.l.b16 %v1980
        %v2124 = vunpack.c.h.b16 %v1980
        %v2125 = vunpack.c.l.b16 %v1981
        %v2126 = vunpack.c.h.b16 %v1981
        %v2127 = vunpack.c.l.b16 %v1982
        %v2128 = vunpack.c.h.b16 %v1982
        %v2129 = vunpack.c.l.b16 %v1983
        %v2130 = vunpack.c.l.b16 %v1984
        %v2131 = vunpack.c.h.b16 %v1984
        %v2132 = vunpack.c.l.b16 %v1985
        %v2133 = vunpack.c.h.b16 %v1985
        %v2134 = vunpack.c.l.b16 %v1986
        %v2135 = vunpack.c.h.b16 %v1986
        %v2136 = vunpack.c.l.b16 %v1987
        %v2137 = vunpack.c.l.b16 %v1988
        %v2138 = vunpack.c.h.b16 %v1988
        %v2139 = vunpack.c.l.b16 %v1989
        %v2140 = vunpack.c.h.b16 %v1989
        %v2141 = vunpack.c.l.b16 %v1990
        %v2142 = vunpack.c.h.b16 %v1990
        %v2143 = vunpack.c.l.b16 %v1991
        %v2144 = vunpack.c.l.b16 %v1992
        %v2145 = vunpack.c.h.b16 %v1992
        %v2146 = vunpack.c.l.b16 %v1993
        %v2147 = vunpack.c.h.b16 %v1993
        %v2148 = vunpack.c.l.b16 %v1994
        %v2149 = vunpack.c.h.b16 %v1994
        %v2150 = vunpack.c.l.b16 %v1995
        %v2151 = vunpack.c.l.b16 %v1996
        %v2152 = vunpack.c.h.b16 %v1996
        %v2153 = vunpack.c.l.b16 %v1997
        %v2154 = vunpack.c.h.b16 %v1997
        %v2155 = vunpack.c.l.b16 %v1998
        %v2156 = vunpack.c.h.b16 %v1998
        %v2157 = vunpack.c.l.b16 %v1999
        %v2158 = vunpack.c.l.b16 %v2000
        %v2159 = vunpack.c.h.b16 %v2000
        %v2160 = vunpack.c.l.b16 %v2001
        %v2161 = vunpack.c.h.b16 %v2001
        %v2162 = vunpack.c.l.b16 %v2002
        %v2163 = vunpack.c.h.b16 %v2002
        %v2164 = vunpack.c.l.b16 %v2003
        %v2165 = vunpack.c.l.b16 %v2004
        %v2166 = vunpack.c.h.b16 %v2004
        %v2167 = vunpack.c.l.b16 %v2005
        %v2168 = vunpack.c.h.b16 %v2005
        %v2169 = vunpack.c.l.b16 %v2006
        %v2170 = vunpack.c.h.b16 %v2006
        %v2171 = vunpack.c.l.b16 %v2007
        %v2172 = vunpack.c.l.b16 %v2008
        %v2173 = vunpack.c.h.b16 %v2008
        %v2174 = vunpack.c.l.b16 %v2009
        %v2175 = vunpack.c.h.b16 %v2009
        %v2176 = vunpack.c.l.b16 %v2010
        %v2177 = vunpack.c.h.b16 %v2010
        %v2178 = vunpack.c.l.b16 %v2011
        %v2179 = vunpack.c.l.b16 %v2012
        %v2180 = vunpack.c.h.b16 %v2012
        %v2181 = vunpack.c.l.b16 %v2013
        %v2182 = vunpack.c.h.b16 %v2013
        %v2183 = vunpack.c.l.b16 %v2014
        %v2184 = vunpack.c.h.b16 %v2014
        %v2185 = vunpack.c.l.b16 %v2015
        %v2186 = vunpack.c.l.b16 %v2016
        %v2187 = vunpack.c.h.b16 %v2016
        %v2188 = vunpack.c.l.b16 %v2017
        %v2189 = vunpack.c.h.b16 %v2017
        %v2190 = vunpack.c.l.b16 %v2018
        %v2191 = vunpack.c.h.b16 %v2018
        %v2192 = vunpack.c.l.b16 %v2019
        %v2193 = vunpack.c.l.b16 %v2020
        %v2194 = vunpack.c.h.b16 %v2020
        %v2195 = vunpack.c.l.b16 %v2021
        %v2196 = vunpack.c.h.b16 %v2021
        %v2197 = vunpack.c.l.b16 %v2022
        %v2198 = vunpack.c.h.b16 %v2022
        %v2199 = vunpack.c.l.b16 %v2023
        %v2200 = vpack.c.b16 %v2095, %v2088
        %v2201 = vpack.c.b16 %v2096, %v2089
        %v2202 = vpack.c.b16 %v2097, %v2090
        %v2203 = vpack.c.b16 %v2098, %v2091
        %v2204 = vpack.c.b16 %v2099, %v2092
        %v2205 = vpack.c.b16 %v2100, %v2093
        %v2206 = vpack.c.b16 %v2101, %v2094
        %v2207 = vpack.c.b16 %v2109, %v2102
        %v2208 = vpack.c.b16 %v2110, %v2103
        %v2209 = vpack.c.b16 %v2111, %v2104
        %v2210 = vpack.c.b16 %v2112, %v2105
        %v2211 = vpack.c.b16 %v2113, %v2106
        %v2212 = vpack.c.b16 %v2114, %v2107
        %v2213 = vpack.c.b16 %v2115, %v2108
        %v2214 = vpack.c.b16 %v2123, %v2116
        %v2215 = vpack.c.b16 %v2124, %v2117
        %v2216 = vpack.c.b16 %v2125, %v2118
        %v2217 = vpack.c.b16 %v2126, %v2119
        %v2218 = vpack.c.b16 %v2127, %v2120
        %v2219 = vpack.c.b16 %v2128, %v2121
        %v2220 = vpack.c.b16 %v2129, %v2122
        %v2221 = vpack.c.b16 %v2137, %v2130
        %v2222 = vpack.c.b16 %v2138, %v2131
        %v2223 = vpack.c.b16 %v2139, %v2132
        %v2224 = vpack.c.b16 %v2140, %v2133
        %v2225 = vpack.c.b16 %v2141, %v2134
        %v2226 = vpack.c.b16 %v2142, %v2135
        %v2227 = vpack.c.b16 %v2143, %v2136
        %v2228 = vpack.c.b16 %v2151, %v2144
        %v2229 = vpack.c.b16 %v2152, %v2145
        %v2230 = vpack.c.b16 %v2153, %v2146
        %v2231 = vpack.c.b16 %v2154, %v2147
        %v2232 = vpack.c.b16 %v2155, %v2148
        %v2233 = vpack.c.b16 %v2156, %v2149
        %v2234 = vpack.c.b16 %v2157, %v2150
        %v2235 = vpack.c.b16 %v2165, %v2158
        %v2236 = vpack.c.b16 %v2166, %v2159
        %v2237 = vpack.c.b16 %v2167, %v2160
        %v2238 = vpack.c.b16 %v2168, %v2161
        %v2239 = vpack.c.b16 %v2169, %v2162
        %v2240 = vpack.c.b16 %v2170, %v2163
        %v2241 = vpack.c.b16 %v2171, %v2164
        %v2242 = vpack.c.b16 %v2179, %v2172
        %v2243 = vpack.c.b16 %v2180, %v2173
        %v2244 = vpack.c.b16 %v2181, %v2174
        %v2245 = vpack.c.b16 %v2182, %v2175
        %v2246 = vpack.c.b16 %v2183, %v2176
        %v2247 = vpack.c.b16 %v2184, %v2177
        %v2248 = vpack.c.b16 %v2185, %v2178
        %v2249 = vpack.c.b16 %v2193, %v2186
        %v2250 = vpack.c.b16 %v2194, %v2187
        %v2251 = vpack.c.b16 %v2195, %v2188
        %v2252 = vpack.c.b16 %v2196, %v2189
        %v2253 = vpack.c.b16 %v2197, %v2190
        %v2254 = vpack.c.b16 %v2198, %v2191
        %v2255 = vpack.c.b16 %v2199, %v2192
        %v2412 = vunpack.c.l.b16 %v1852
        %v2413 = vunpack.c.h.b16 %v1852
        %v2414 = vunpack.c.l.b16 %v1853
        %v2415 = vunpack.c.h.b16 %v1853
        %v2416 = vunpack.c.l.b16 %v1854
        %v2417 = vunpack.c.h.b16 %v1854
        %v2418 = vunpack.c.l.b16 %v1855
        %v2419 = vunpack.c.h.b16 %v1855
        %v2420 = vunpack.c.l.b16 %v1856
        %v2421 = vunpack.c.h.b16 %v1856
        %v2422 = vunpack.c.l.b16 %v1857
        %v2423 = vunpack.c.h.b16 %v1857
        %v2424 = vunpack.c.l.b16 %v1858
        %v2425 = vunpack.c.h.b16 %v1858
        %v2426 = vunpack.c.l.b16 %v1859
        %v2427 = vunpack.c.h.b16 %v1859
        %v2428 = vunpack.c.l.b16 %v1860
        %v2429 = vunpack.c.h.b16 %v1860
        %v2430 = vunpack.c.l.b16 %v1861
        %v2431 = vunpack.c.h.b16 %v1861
        %v2432 = vunpack.c.l.b16 %v1862
        %v2433 = vunpack.c.h.b16 %v1862
        %v2434 = vunpack.c.l.b16 %v1863
        %v2435 = vunpack.c.h.b16 %v1863
        %v2436 = vunpack.c.l.b16 %v1864
        %v2437 = vunpack.c.h.b16 %v1864
        %v2438 = vunpack.c.l.b16 %v1865
        %v2439 = vunpack.c.h.b16 %v1865
        %v2440 = vunpack.c.l.b16 %v1866
        %v2441 = vunpack.c.h.b16 %v1866
        %v2442 = vunpack.c.l.b16 %v1867
        %v2443 = vunpack.c.h.b16 %v1867
        %v2444 = vunpack.c.l.b16 %v1868
        %v2445 = vunpack.c.h.b16 %v1868
        %v2446 = vunpack.c.l.b16 %v1869
        %v2447 = vunpack.c.h.b16 %v1869
        %v2448 = vunpack.c.l.b16 %v1870
        %v2449 = vunpack.c.h.b16 %v1870
        %v2450 = vunpack.c.l.b16 %v1871
        %v2451 = vunpack.c.h.b16 %v1871
        %v2452 = vunpack.c.l.b16 %v1872
        %v2453 = vunpack.c.h.b16 %v1872
        %v2454 = vunpack.c.l.b16 %v1873
        %v2455 = vunpack.c.h.b16 %v1873
        %v2456 = vunpack.c.l.b16 %v1874
        %v2457 = vunpack.c.h.b16 %v1874
        %v2458 = vunpack.c.l.b16 %v1875
        %v2459 = vunpack.c.h.b16 %v1875
        %v2460 = vunpack.c.l.b16 %v1876
        %v2461 = vunpack.c.h.b16 %v1876
        %v2462 = vunpack.c.l.b16 %v1877
        %v2463 = vunpack.c.h.b16 %v1877
        %v2464 = vunpack.c.l.b16 %v1878
        %v2465 = vunpack.c.h.b16 %v1878
        %v2466 = vunpack.c.l.b16 %v1879
        %v2467 = vunpack.c.h.b16 %v1879
        %v2468 = vunpack.c.l.b16 %v1880
        %v2469 = vunpack.c.h.b16 %v1880
        %v2470 = vunpack.c.l.b16 %v1881
        %v2471 = vunpack.c.h.b16 %v1881
        %v2472 = vunpack.c.l.b16 %v1882
        %v2473 = vunpack.c.h.b16 %v1882
        %v2474 = vunpack.c.l.b16 %v1883
        %v2475 = vunpack.c.h.b16 %v1883
        %v2476 = vunpack.c.l.b16 %v1884
        %v2477 = vunpack.c.h.b16 %v1884
        %v2478 = vunpack.c.l.b16 %v1885
        %v2479 = vunpack.c.h.b16 %v1885
        %v2480 = vunpack.c.l.b16 %v1886
        %v2481 = vunpack.c.h.b16 %v1886
        %v2482 = vunpack.c.l.b16 %v1887
        %v2483 = vunpack.c.h.b16 %v1887
        %v2484 = vunpack.c.l.b16 %v1888
        %v2485 = vunpack.c.h.b16 %v1888
        %v2486 = vunpack.c.l.b16 %v1889
        %v2487 = vunpack.c.h.b16 %v1889
        %v2488 = vunpack.c.l.b16 %v1890
        %v2489 = vunpack.c.h.b16 %v1890
        %v2490 = vunpack.c.l.b16 %v1891
        %v2491 = vunpack.c.h.b16 %v1891
        %v2492 = vunpack.c.l.b16 %v1892
        %v2493 = vunpack.c.h.b16 %v1892
        %v2494 = vunpack.c.l.b16 %v1893
        %v2495 = vunpack.c.h.b16 %v1893
        %v2496 = vunpack.c.l.b16 %v1894
        %v2497 = vunpack.c.h.b16 %v1894
        %v2498 = vunpack.c.l.b16 %v1895
        %v2499 = vunpack.c.h.b16 %v1895
        %v2500 = vunpack.c.l.b16 %v1896
        %v2501 = vunpack.c.h.b16 %v1896
        %v2502 = vunpack.c.l.b16 %v1897
        %v2503 = vunpack.c.h.b16 %v1897
        %v2504 = vunpack.c.l.b16 %v1898
        %v2505 = vunpack.c.h.b16 %v1898
        %v2506 = vunpack.c.l.b16 %v1899
        %v2507 = vunpack.c.h.b16 %v1899
        %v2508 = vunpack.c.l.b16 %v1900
        %v2509 = vunpack.c.h.b16 %v1900
        %v2510 = vunpack.c.l.b16 %v1901
        %v2511 = vunpack.c.h.b16 %v1901
        %v2512 = vunpack.c.l.b16 %v1902
        %v2513 = vunpack.c.h.b16 %v1902
        %v2514 = vunpack.c.l.b16 %v1903
        %v2515 = vunpack.c.h.b16 %v1903
        %v2516 = vunpack.c.l.b16 %v1904
        %v2517 = vunpack.c.h.b16 %v1904
        %v2518 = vunpack.c.l.b16 %v1905
        %v2519 = vunpack.c.h.b16 %v1905
        %v2520 = vunpack.c.l.b16 %v1906
        %v2521 = vunpack.c.h.b16 %v1906
        %v2522 = vunpack.c.l.b16 %v1907
        %v2523 = vunpack.c.h.b16 %v1907
        %v2524 = vunpack.c.l.b16 %v1908
        %v2525 = vunpack.c.h.b16 %v1908
        %v2526 = vunpack.c.l.b16 %v1909
        %v2527 = vunpack.c.h.b16 %v1909
        %v2528 = vunpack.c.l.b16 %v1910
        %v2529 = vunpack.c.h.b16 %v1910
        %v2530 = vunpack.c.l.b16 %v1911
        %v2531 = vunpack.c.h.b16 %v1911
        %v2532 = vunpack.c.l.b16 %v1912
        %v2533 = vunpack.c.h.b16 %v1912
        %v2534 = vunpack.c.l.b16 %v1913
        %v2535 = vunpack.c.h.b16 %v1913
        %v2536 = vunpack.c.l.b16 %v1914
        %v2537 = vunpack.c.h.b16 %v1914
        %v2538 = vunpack.c.l.b16 %v1915
        %v2539 = vunpack.c.h.b16 %v1915
        %v2540 = vunpack.c.l.b16 %v1916
        %v2541 = vunpack.c.h.b16 %v1916
        %v2542 = vunpack.c.l.b16 %v1917
        %v2543 = vunpack.c.h.b16 %v1917
        %v2544 = vunpack.c.l.b16 %v1918
        %v2545 = vunpack.c.h.b16 %v1918
        %v2546 = vunpack.c.l.b16 %v1919
        %v2547 = vunpack.c.h.b16 %v1919
        %v2548 = vunpack.c.l.b16 %v1920
        %v2549 = vunpack.c.h.b16 %v1920
        %v2550 = vunpack.c.l.b16 %v1921
        %v2551 = vunpack.c.h.b16 %v1921
        %v2552 = vunpack.c.l.b16 %v1922
        %v2553 = vunpack.c.h.b16 %v1922
        %v2554 = vunpack.c.l.b16 %v1923
        %v2555 = vunpack.c.h.b16 %v1923
        %v2556 = vunpack.c.l.b16 %v1924
        %v2557 = vunpack.c.h.b16 %v1924
        %v2558 = vunpack.c.l.b16 %v1925
        %v2559 = vunpack.c.h.b16 %v1925
        %v2560 = vunpack.c.l.b16 %v1926
        %v2561 = vunpack.c.h.b16 %v1926
        %v2562 = vunpack.c.l.b16 %v1927
        %v2563 = vunpack.c.h.b16 %v1927
        %v2564 = vunpack.c.l.b16 %v1928
        %v2565 = vunpack.c.h.b16 %v1928
        %v2566 = vunpack.c.l.b16 %v1929
        %v2567 = vunpack.c.h.b16 %v1929
        %v2568 = vunpack.c.l.b16 %v1930
        %v2569 = vunpack.c.h.b16 %v1930
        %v2570 = vunpack.c.l.b16 %v1931
        %v2571 = vunpack.c.h.b16 %v1931
        %v2572 = vunpack.c.l.b16 %v1932
        %v2573 = vunpack.c.h.b16 %v1932
        %v2574 = vunpack.c.l.b16 %v1933
        %v2575 = vunpack.c.h.b16 %v1933
        %v2576 = vunpack.c.l.b16 %v1934
        %v2577 = vunpack.c.h.b16 %v1934
        %v2578 = vunpack.c.l.b16 %v1935
        %v2579 = vunpack.c.h.b16 %v1935
        %v2580 = vunpack.c.l.b16 %v1936
        %v2581 = vunpack.c.h.b16 %v1936
        %v2582 = vunpack.c.l.b16 %v1937
        %v2583 = vunpack.c.h.b16 %v1937
        %v2584 = vunpack.c.l.b16 %v1938
        %v2585 = vunpack.c.h.b16 %v1938
        %v2586 = vunpack.c.l.b16 %v1939
        %v2587 = vunpack.c.h.b16 %v1939
        %v2588 = vunpack.c.l.b16 %v1940
        %v2589 = vunpack.c.h.b16 %v1940
        %v2590 = vunpack.c.l.b16 %v1941
        %v2591 = vunpack.c.h.b16 %v1941
        %v2592 = vunpack.c.l.b16 %v1942
        %v2593 = vunpack.c.h.b16 %v1942
        %v2594 = vunpack.c.l.b16 %v1943
        %v2595 = vunpack.c.h.b16 %v1943
        %v2596 = vunpack.c.l.b16 %v1944
        %v2597 = vunpack.c.h.b16 %v1944
        %v2598 = vunpack.c.l.b16 %v1945
        %v2599 = vunpack.c.h.b16 %v1945
        %v2600 = vunpack.c.l.b16 %v1946
        %v2601 = vunpack.c.h.b16 %v1946
        %v2602 = vunpack.c.l.b16 %v1947
        %v2603 = vunpack.c.h.b16 %v1947
        %v2604 = vunpack.c.l.b16 %v1948
        %v2605 = vunpack.c.h.b16 %v1948
        %v2606 = vunpack.c.l.b16 %v1949
        %v2607 = vunpack.c.h.b16 %v1949
        %v2608 = vunpack.c.l.b16 %v1950
        %v2609 = vunpack.c.h.b16 %v1950
        %v2610 = vunpack.c.l.b16 %v1951
        %v2611 = vunpack.c.h.b16 %v1951
        %v2612 = vunpack.c.l.b16 %v1952
        %v2613 = vunpack.c.h.b16 %v1952
        %v2614 = vunpack.c.l.b16 %v1953
        %v2615 = vunpack.c.h.b16 %v1953
        %v2616 = vunpack.c.l.b16 %v1954
        %v2617 = vunpack.c.h.b16 %v1954
        %v2618 = vunpack.c.l.b16 %v1955
        %v2619 = vunpack.c.h.b16 %v1955
        %v2620 = vunpack.c.l.b16 %v1956
        %v2621 = vunpack.c.h.b16 %v1956
        %v2622 = vunpack.c.l.b16 %v1957
        %v2623 = vunpack.c.h.b16 %v1957
        %v2624 = vunpack.c.l.b16 %v1958
        %v2625 = vunpack.c.h.b16 %v1958
        %v2626 = vunpack.c.l.b16 %v1959
        %v2627 = vunpack.c.h.b16 %v1959
        %v2628 = vpack.c.b16 %v2414, %v2412
        %v2629 = vpack.c.b16 %v2415, %v2413
        %v2630 = vpack.c.b16 %v2418, %v2416
        %v2631 = vpack.c.b16 %v2419, %v2417
        %v2632 = vpack.c.b16 %v2422, %v2420
        %v2633 = vpack.c.b16 %v2423, %v2421
        %v2634 = vpack.c.b16 %v2426, %v2424
        %v2635 = vpack.c.b16 %v2427, %v2425
        %v2636 = vpack.c.b16 %v2430, %v2428
        %v2637 = vpack.c.b16 %v2431, %v2429
        %v2638 = vpack.c.b16 %v2434, %v2432
        %v2639 = vpack.c.b16 %v2435, %v2433
        %v2640 = vpack.c.b16 %v2438, %v2436
        %v2641 = vpack.c.b16 %v2439, %v2437
        %v2642 = vpack.c.b16 %v2442, %v2440
        %v2643 = vpack.c.b16 %v2443, %v2441
        %v2644 = vpack.c.b16 %v2446, %v2444
        %v2645 = vpack.c.b16 %v2447, %v2445
        %v2646 = vpack.c.b16 %v2450, %v2448
        %v2647 = vpack.c.b16 %v2451, %v2449
        %v2648 = vpack.c.b16 %v2454, %v2452
        %v2649 = vpack.c.b16 %v2455, %v2453
        %v2650 = vpack.c.b16 %v2458, %v2456
        %v2651 = vpack.c.b16 %v2459, %v2457
        %v2652 = vpack.c.b16 %v2462, %v2460
        %v2653 = vpack.c.b16 %v2463, %v2461
        %v2654 = vpack.c.b16 %v2466, %v2464
        %v2655 = vpack.c.b16 %v2467, %v2465
        %v2656 = vpack.c.b16 %v2470, %v2468
        %v2657 = vpack.c.b16 %v2471, %v2469
        %v2658 = vpack.c.b16 %v2474, %v2472
        %v2659 = vpack.c.b16 %v2475, %v2473
        %v2660 = vpack.c.b16 %v2478, %v2476
        %v2661 = vpack.c.b16 %v2479, %v2477
        %v2662 = vpack.c.b16 %v2482, %v2480
        %v2663 = vpack.c.b16 %v2483, %v2481
        %v2664 = vpack.c.b16 %v2486, %v2484
        %v2665 = vpack.c.b16 %v2487, %v2485
        %v2666 = vpack.c.b16 %v2490, %v2488
        %v2667 = vpack.c.b16 %v2491, %v2489
        %v2668 = vpack.c.b16 %v2494, %v2492
        %v2669 = vpack.c.b16 %v2495, %v2493
        %v2670 = vpack.c.b16 %v2498, %v2496
        %v2671 = vpack.c.b16 %v2499, %v2497
        %v2672 = vpack.c.b16 %v2502, %v2500
        %v2673 = vpack.c.b16 %v2503, %v2501
        %v2674 = vpack.c.b16 %v2506, %v2504
        %v2675 = vpack.c.b16 %v2507, %v2505
        %v2676 = vpack.c.b16 %v2510, %v2508
        %v2677 = vpack.c.b16 %v2511, %v2509
        %v2678 = vpack.c.b16 %v2514, %v2512
        %v2679 = vpack.c.b16 %v2515, %v2513
        %v2680 = vpack.c.b16 %v2518, %v2516
        %v2681 = vpack.c.b16 %v2519, %v2517
        %v2682 = vpack.c.b16 %v2522, %v2520
        %v2683 = vpack.c.b16 %v2523, %v2521
        %v2684 = vpack.c.b16 %v2526, %v2524
        %v2685 = vpack.c.b16 %v2527, %v2525
        %v2686 = vpack.c.b16 %v2530, %v2528
        %v2687 = vpack.c.b16 %v2531, %v2529
        %v2688 = vpack.c.b16 %v2534, %v2532
        %v2689 = vpack.c.b16 %v2535, %v2533
        %v2690 = vpack.c.b16 %v2538, %v2536
        %v2691 = vpack.c.b16 %v2539, %v2537
        %v2692 = vpack.c.b16 %v2542, %v2540
        %v2693 = vpack.c.b16 %v2543, %v2541
        %v2694 = vpack.c.b16 %v2546, %v2544
        %v2695 = vpack.c.b16 %v2547, %v2545
        %v2696 = vpack.c.b16 %v2550, %v2548
        %v2697 = vpack.c.b16 %v2551, %v2549
        %v2698 = vpack.c.b16 %v2554, %v2552
        %v2699 = vpack.c.b16 %v2555, %v2553
        %v2700 = vpack.c.b16 %v2558, %v2556
        %v2701 = vpack.c.b16 %v2559, %v2557
        %v2702 = vpack.c.b16 %v2562, %v2560
        %v2703 = vpack.c.b16 %v2563, %v2561
        %v2704 = vpack.c.b16 %v2566, %v2564
        %v2705 = vpack.c.b16 %v2567, %v2565
        %v2706 = vpack.c.b16 %v2570, %v2568
        %v2707 = vpack.c.b16 %v2571, %v2569
        %v2708 = vpack.c.b16 %v2574, %v2572
        %v2709 = vpack.c.b16 %v2575, %v2573
        %v2710 = vpack.c.b16 %v2578, %v2576
        %v2711 = vpack.c.b16 %v2579, %v2577
        %v2712 = vpack.c.b16 %v2582, %v2580
        %v2713 = vpack.c.b16 %v2583, %v2581
        %v2714 = vpack.c.b16 %v2586, %v2584
        %v2715 = vpack.c.b16 %v2587, %v2585
        %v2716 = vpack.c.b16 %v2590, %v2588
        %v2717 = vpack.c.b16 %v2591, %v2589
        %v2718 = vpack.c.b16 %v2594, %v2592
        %v2719 = vpack.c.b16 %v2595, %v2593
        %v2720 = vpack.c.b16 %v2598, %v2596
        %v2721 = vpack.c.b16 %v2599, %v2597
        %v2722 = vpack.c.b16 %v2602, %v2600
        %v2723 = vpack.c.b16 %v2603, %v2601
        %v2724 = vpack.c.b16 %v2606, %v2604
        %v2725 = vpack.c.b16 %v2607, %v2605
        %v2726 = vpack.c.b16 %v2610, %v2608
        %v2727 = vpack.c.b16 %v2611, %v2609
        %v2728 = vpack.c.b16 %v2614, %v2612
        %v2729 = vpack.c.b16 %v2615, %v2613
        %v2730 = vpack.c.b16 %v2618, %v2616
        %v2731 = vpack.c.b16 %v2619, %v2617
        %v2732 = vpack.c.b16 %v2622, %v2620
        %v2733 = vpack.c.b16 %v2623, %v2621
        %v2734 = vpack.c.b16 %v2626, %v2624
        %v2735 = vpack.c.b16 %v2627, %v2625
        %vm2844 = vcmask 785408
        %v2846 = vsel %vm2844, %v2206, 0
        %v2849 = vsel %vm2844, %v2213, 0
        %v2852 = vsel %vm2844, %v2220, 0
        %v2855 = vsel %vm2844, %v2227, 0
        %v2858 = vsel %vm2844, %v2234, 0
        %v2861 = vsel %vm2844, %v2241, 0
        %v2864 = vsel %vm2844, %v2248, 0
        %v2867 = vsel %vm2844, %v2255, 0
        %2869 = vmatprep.subr.bf16.mxu0 %v2629
        %2870 = vmatpush1.bf16.msra.mxu0 %v2628
        %2871 = vmatprep.subr.bf16.mxu0 %v2631
        %2872 = vmatpush1.bf16.msra.mxu0 %v2630
        %2873 = vmatprep.subr.bf16.mxu0 %v2633
        %2874 = vmatpush1.bf16.msra.mxu0 %v2632
        %2875 = vmatprep.subr.bf16.mxu0 %v2635
        %2876 = vmatpush1.bf16.msra.mxu0 %v2634
        %2877 = vmatprep.subr.bf16.mxu0 %v2637
        %2878 = vmatpush1.bf16.msra.mxu0 %v2636
        %2879 = vmatprep.subr.bf16.mxu0 %v2639
        %2880 = vmatpush1.bf16.msra.mxu0 %v2638
        %2881 = vmatprep.subr.bf16.mxu0 %v2641
        %2882 = vmatpush1.bf16.msra.mxu0 %v2640
        %2883 = vmatprep.subr.bf16.mxu0 %v2643
        %2884 = vmatpush1.bf16.msra.mxu0 %v2642
        %2885 = vmatprep.subr.bf16.mxu0 %v2645
        %2886 = vmatpush1.bf16.msra.mxu0 %v2644
        %2887 = vmatprep.subr.bf16.mxu0 %v2647
        %2888 = vmatpush1.bf16.msra.mxu0 %v2646
        %2889 = vmatprep.subr.bf16.mxu0 %v2649
        %2890 = vmatpush1.bf16.msra.mxu0 %v2648
        %2891 = vmatprep.subr.bf16.mxu0 %v2651
        %2892 = vmatpush1.bf16.msra.mxu0 %v2650
        %2893 = vmatprep.subr.bf16.mxu0 %v2653
        %2894 = vmatpush1.bf16.msra.mxu0 %v2652
        %2895 = vmatprep.subr.bf16.mxu0 %v2655
        %2896 = vmatpush1.bf16.msra.mxu0 %v2654
        %2897 = vmatprep.subr.bf16.mxu0 %v2657
        %2898 = vmatpush1.bf16.msra.mxu0 %v2656
        %2899 = vmatprep.subr.bf16.mxu0 %v2659
        %2900 = vmatpush1.bf16.msra.mxu0 %v2658
        %2901 = vmatprep.mubr.bf16.mxu0 %v2201
        %2902 = vmatmul.mubr.bf16.gmra.mrb[0].mxu0 %v2200
        %v2903 = vpop.f32.mrb[0].mxu0
        %v2904 = vadd.f32 0.0, %v2903
        %v2905 = vpop.f32.mrb[0].mxu0
        %v2906 = vadd.f32 0.0, %v2905
        %v2907 = vpop.f32.mrb[0].mxu0
        %v2908 = vadd.f32 0.0, %v2907
        %v2909 = vpop.f32.mrb[0].mxu0
        %v2910 = vadd.f32 0.0, %v2909
        %2911 = vmatprep.mubr.bf16.mxu0 %v2208
        %2912 = vmatmul.mubr.bf16.gmra.mrb[0].mxu0 %v2207
        %v2913 = vpop.f32.mrb[0].mxu0
        %v2914 = vadd.f32 0.0, %v2913
        %v2915 = vpop.f32.mrb[0].mxu0
        %v2916 = vadd.f32 0.0, %v2915
        %v2917 = vpop.f32.mrb[0].mxu0
        %v2918 = vadd.f32 0.0, %v2917
        %v2919 = vpop.f32.mrb[0].mxu0
        %v2920 = vadd.f32 0.0, %v2919
        %2921 = vmatprep.mubr.bf16.mxu0 %v2215
        %2922 = vmatmul.mubr.bf16.gmra.mrb[0].mxu0 %v2214
        %v2923 = vpop.f32.mrb[0].mxu0
        %v2924 = vadd.f32 0.0, %v2923
        %v2925 = vpop.f32.mrb[0].mxu0
        %v2926 = vadd.f32 0.0, %v2925
        %v2927 = vpop.f32.mrb[0].mxu0
        %v2928 = vadd.f32 0.0, %v2927
        %v2929 = vpop.f32.mrb[0].mxu0
        %v2930 = vadd.f32 0.0, %v2929
        %2931 = vmatprep.mubr.bf16.mxu0 %v2222
        %2932 = vmatmul.mubr.bf16.gmra.mrb[0].mxu0 %v2221
        %v2933 = vpop.f32.mrb[0].mxu0
        %v2934 = vadd.f32 0.0, %v2933
        %v2935 = vpop.f32.mrb[0].mxu0
        %v2936 = vadd.f32 0.0, %v2935
        %v2937 = vpop.f32.mrb[0].mxu0
        %v2938 = vadd.f32 0.0, %v2937
        %v2939 = vpop.f32.mrb[0].mxu0
        %v2940 = vadd.f32 0.0, %v2939
        %2941 = vmatprep.mubr.bf16.mxu0 %v2229
        %2942 = vmatmul.mubr.bf16.gmra.mrb[0].mxu0 %v2228
        %v2943 = vpop.f32.mrb[0].mxu0
        %v2944 = vadd.f32 0.0, %v2943
        %v2945 = vpop.f32.mrb[0].mxu0
        %v2946 = vadd.f32 0.0, %v2945
        %v2947 = vpop.f32.mrb[0].mxu0
        %v2948 = vadd.f32 0.0, %v2947
        %v2949 = vpop.f32.mrb[0].mxu0
        %v2950 = vadd.f32 0.0, %v2949
        %2951 = vmatprep.mubr.bf16.mxu0 %v2236
        %2952 = vmatmul.mubr.bf16.gmra.mrb[0].mxu0 %v2235
        %v2953 = vpop.f32.mrb[0].mxu0
        %v2954 = vadd.f32 0.0, %v2953
        %v2955 = vpop.f32.mrb[0].mxu0
        %v2956 = vadd.f32 0.0, %v2955
        %v2957 = vpop.f32.mrb[0].mxu0
        %v2958 = vadd.f32 0.0, %v2957
        %v2959 = vpop.f32.mrb[0].mxu0
        %v2960 = vadd.f32 0.0, %v2959
        %2961 = vmatprep.mubr.bf16.mxu0 %v2243
        %2962 = vmatmul.mubr.bf16.gmra.mrb[0].mxu0 %v2242
        %v2963 = vpop.f32.mrb[0].mxu0
        %v2964 = vadd.f32 0.0, %v2963
        %v2965 = vpop.f32.mrb[0].mxu0
        %v2966 = vadd.f32 0.0, %v2965
        %v2967 = vpop.f32.mrb[0].mxu0
        %v2968 = vadd.f32 0.0, %v2967
        %v2969 = vpop.f32.mrb[0].mxu0
        %v2970 = vadd.f32 0.0, %v2969
        %2971 = vmatprep.mubr.bf16.mxu0 %v2250
        %2972 = vmatmul.mubr.bf16.gmra.mrb[0].mxu0 %v2249
        %v2973 = vpop.f32.mrb[0].mxu0
        %v2974 = vadd.f32 0.0, %v2973
        %v2975 = vpop.f32.mrb[0].mxu0
        %v2976 = vadd.f32 0.0, %v2975
        %v2977 = vpop.f32.mrb[0].mxu0
        %v2978 = vadd.f32 0.0, %v2977
        %v2979 = vpop.f32.mrb[0].mxu0
        %v2980 = vadd.f32 0.0, %v2979
        %2981 = vdwg.mxu0
        %2982 = vmatprep.subr.bf16.mxu0 %v2661
        %2983 = vmatpush1.bf16.msra.mxu0 %v2660
        %2984 = vmatprep.subr.bf16.mxu0 %v2663
        %2985 = vmatpush1.bf16.msra.mxu0 %v2662
        %2986 = vmatprep.subr.bf16.mxu0 %v2665
        %2987 = vmatpush1.bf16.msra.mxu0 %v2664
        %2988 = vmatprep.subr.bf16.mxu0 %v2667
        %2989 = vmatpush1.bf16.msra.mxu0 %v2666
        %2990 = vmatprep.subr.bf16.mxu0 %v2669
        %2991 = vmatpush1.bf16.msra.mxu0 %v2668
        %2992 = vmatprep.subr.bf16.mxu0 %v2671
        %2993 = vmatpush1.bf16.msra.mxu0 %v2670
        %2994 = vmatprep.subr.bf16.mxu0 %v2673
        %2995 = vmatpush1.bf16.msra.mxu0 %v2672
        %2996 = vmatprep.subr.bf16.mxu0 %v2675
        %2997 = vmatpush1.bf16.msra.mxu0 %v2674
        %2998 = vmatprep.subr.bf16.mxu0 %v2677
        %2999 = vmatpush1.bf16.msra.mxu0 %v2676
        %3000 = vmatprep.subr.bf16.mxu0 %v2679
        %3001 = vmatpush1.bf16.msra.mxu0 %v2678
        %3002 = vmatprep.subr.bf16.mxu0 %v2681
        %3003 = vmatpush1.bf16.msra.mxu0 %v2680
        %3004 = vmatprep.subr.bf16.mxu0 %v2683
        %3005 = vmatpush1.bf16.msra.mxu0 %v2682
        %3006 = vmatprep.subr.bf16.mxu0 %v2685
        %3007 = vmatpush1.bf16.msra.mxu0 %v2684
        %3008 = vmatprep.subr.bf16.mxu0 %v2687
        %3009 = vmatpush1.bf16.msra.mxu0 %v2686
        %3010 = vmatprep.subr.bf16.mxu0 %v2689
        %3011 = vmatpush1.bf16.msra.mxu0 %v2688
        %3012 = vmatprep.subr.bf16.mxu0 %v2691
        %3013 = vmatpush1.bf16.msra.mxu0 %v2690
        %3014 = vmatprep.mubr.bf16.mxu0 %v2203
        %3015 = vmatmul.mubr.bf16.gmra.mrb[0].mxu0 %v2202
        %v3016 = vpop.f32.mrb[0].mxu0
        %v3017 = vadd.f32 %v2904, %v3016
        %v3018 = vpop.f32.mrb[0].mxu0
        %v3019 = vadd.f32 %v2906, %v3018
        %v3020 = vpop.f32.mrb[0].mxu0
        %v3021 = vadd.f32 %v2908, %v3020
        %v3022 = vpop.f32.mrb[0].mxu0
        %v3023 = vadd.f32 %v2910, %v3022
        %3024 = vmatprep.mubr.bf16.mxu0 %v2210
        %3025 = vmatmul.mubr.bf16.gmra.mrb[0].mxu0 %v2209
        %v3026 = vpop.f32.mrb[0].mxu0
        %v3027 = vadd.f32 %v2914, %v3026
        %v3028 = vpop.f32.mrb[0].mxu0
        %v3029 = vadd.f32 %v2916, %v3028
        %v3030 = vpop.f32.mrb[0].mxu0
        %v3031 = vadd.f32 %v2918, %v3030
        %v3032 = vpop.f32.mrb[0].mxu0
        %v3033 = vadd.f32 %v2920, %v3032
        %3034 = vmatprep.mubr.bf16.mxu0 %v2217
        %3035 = vmatmul.mubr.bf16.gmra.mrb[0].mxu0 %v2216
        %v3036 = vpop.f32.mrb[0].mxu0
        %v3037 = vadd.f32 %v2924, %v3036
        %v3038 = vpop.f32.mrb[0].mxu0
        %v3039 = vadd.f32 %v2926, %v3038
        %v3040 = vpop.f32.mrb[0].mxu0
        %v3041 = vadd.f32 %v2928, %v3040
        %v3042 = vpop.f32.mrb[0].mxu0
        %v3043 = vadd.f32 %v2930, %v3042
        %3044 = vmatprep.mubr.bf16.mxu0 %v2224
        %3045 = vmatmul.mubr.bf16.gmra.mrb[0].mxu0 %v2223
        %v3046 = vpop.f32.mrb[0].mxu0
        %v3047 = vadd.f32 %v2934, %v3046
        %v3048 = vpop.f32.mrb[0].mxu0
        %v3049 = vadd.f32 %v2936, %v3048
        %v3050 = vpop.f32.mrb[0].mxu0
        %v3051 = vadd.f32 %v2938, %v3050
        %v3052 = vpop.f32.mrb[0].mxu0
        %v3053 = vadd.f32 %v2940, %v3052
        %3054 = vmatprep.mubr.bf16.mxu0 %v2231
        %3055 = vmatmul.mubr.bf16.gmra.mrb[0].mxu0 %v2230
        %v3056 = vpop.f32.mrb[0].mxu0
        %v3057 = vadd.f32 %v2944, %v3056
        %v3058 = vpop.f32.mrb[0].mxu0
        %v3059 = vadd.f32 %v2946, %v3058
        %v3060 = vpop.f32.mrb[0].mxu0
        %v3061 = vadd.f32 %v2948, %v3060
        %v3062 = vpop.f32.mrb[0].mxu0
        %v3063 = vadd.f32 %v2950, %v3062
        %3064 = vmatprep.mubr.bf16.mxu0 %v2238
        %3065 = vmatmul.mubr.bf16.gmra.mrb[0].mxu0 %v2237
        %v3066 = vpop.f32.mrb[0].mxu0
        %v3067 = vadd.f32 %v2954, %v3066
        %v3068 = vpop.f32.mrb[0].mxu0
        %v3069 = vadd.f32 %v2956, %v3068
        %v3070 = vpop.f32.mrb[0].mxu0
        %v3071 = vadd.f32 %v2958, %v3070
        %v3072 = vpop.f32.mrb[0].mxu0
        %v3073 = vadd.f32 %v2960, %v3072
        %3074 = vmatprep.mubr.bf16.mxu0 %v2245
        %3075 = vmatmul.mubr.bf16.gmra.mrb[0].mxu0 %v2244
        %v3076 = vpop.f32.mrb[0].mxu0
        %v3077 = vadd.f32 %v2964, %v3076
        %v3078 = vpop.f32.mrb[0].mxu0
        %v3079 = vadd.f32 %v2966, %v3078
        %v3080 = vpop.f32.mrb[0].mxu0
        %v3081 = vadd.f32 %v2968, %v3080
        %v3082 = vpop.f32.mrb[0].mxu0
        %v3083 = vadd.f32 %v2970, %v3082
        %3084 = vmatprep.mubr.bf16.mxu0 %v2252
        %3085 = vmatmul.mubr.bf16.gmra.mrb[0].mxu0 %v2251
        %v3086 = vpop.f32.mrb[0].mxu0
        %v3087 = vadd.f32 %v2974, %v3086
        %v3088 = vpop.f32.mrb[0].mxu0
        %v3089 = vadd.f32 %v2976, %v3088
        %v3090 = vpop.f32.mrb[0].mxu0
        %v3091 = vadd.f32 %v2978, %v3090
        %v3092 = vpop.f32.mrb[0].mxu0
        %v3093 = vadd.f32 %v2980, %v3092
        %3094 = vdwg.mxu0
        %3095 = vmatprep.subr.bf16.mxu0 %v2693
        %3096 = vmatpush1.bf16.msra.mxu0 %v2692
        %3097 = vmatprep.subr.bf16.mxu0 %v2695
        %3098 = vmatpush1.bf16.msra.mxu0 %v2694
        %3099 = vmatprep.subr.bf16.mxu0 %v2697
        %3100 = vmatpush1.bf16.msra.mxu0 %v2696
        %3101 = vmatprep.subr.bf16.mxu0 %v2699
        %3102 = vmatpush1.bf16.msra.mxu0 %v2698
        %3103 = vmatprep.subr.bf16.mxu0 %v2701
        %3104 = vmatpush1.bf16.msra.mxu0 %v2700
        %3105 = vmatprep.subr.bf16.mxu0 %v2703
        %3106 = vmatpush1.bf16.msra.mxu0 %v2702
        %3107 = vmatprep.subr.bf16.mxu0 %v2705
        %3108 = vmatpush1.bf16.msra.mxu0 %v2704
        %3109 = vmatprep.subr.bf16.mxu0 %v2707
        %3110 = vmatpush1.bf16.msra.mxu0 %v2706
        %3111 = vmatprep.subr.bf16.mxu0 %v2709
        %3112 = vmatpush1.bf16.msra.mxu0 %v2708
        %3113 = vmatprep.subr.bf16.mxu0 %v2711
        %3114 = vmatpush1.bf16.msra.mxu0 %v2710
        %3115 = vmatprep.subr.bf16.mxu0 %v2713
        %3116 = vmatpush1.bf16.msra.mxu0 %v2712
        %3117 = vmatprep.subr.bf16.mxu0 %v2715
        %3118 = vmatpush1.bf16.msra.mxu0 %v2714
        %3119 = vmatprep.subr.bf16.mxu0 %v2717
        %3120 = vmatpush1.bf16.msra.mxu0 %v2716
        %3121 = vmatprep.subr.bf16.mxu0 %v2719
        %3122 = vmatpush1.bf16.msra.mxu0 %v2718
        %3123 = vmatprep.subr.bf16.mxu0 %v2721
        %3124 = vmatpush1.bf16.msra.mxu0 %v2720
        %3125 = vmatprep.subr.bf16.mxu0 %v2723
        %3126 = vmatpush1.bf16.msra.mxu0 %v2722
        %3127 = vmatprep.mubr.bf16.mxu0 %v2205
        %3128 = vmatmul.mubr.bf16.gmra.mrb[0].mxu0 %v2204
        %v3129 = vpop.f32.mrb[0].mxu0
        %v3130 = vadd.f32 %v3017, %v3129
        %v3131 = vpop.f32.mrb[0].mxu0
        %v3132 = vadd.f32 %v3019, %v3131
        %v3133 = vpop.f32.mrb[0].mxu0
        %v3134 = vadd.f32 %v3021, %v3133
        %v3135 = vpop.f32.mrb[0].mxu0
        %v3136 = vadd.f32 %v3023, %v3135
        %3137 = vmatprep.mubr.bf16.mxu0 %v2212
        %3138 = vmatmul.mubr.bf16.gmra.mrb[0].mxu0 %v2211
        %v3139 = vpop.f32.mrb[0].mxu0
        %v3140 = vadd.f32 %v3027, %v3139
        %v3141 = vpop.f32.mrb[0].mxu0
        %v3142 = vadd.f32 %v3029, %v3141
        %v3143 = vpop.f32.mrb[0].mxu0
        %v3144 = vadd.f32 %v3031, %v3143
        %v3145 = vpop.f32.mrb[0].mxu0
        %v3146 = vadd.f32 %v3033, %v3145
        %3147 = vmatprep.mubr.bf16.mxu0 %v2219
        %3148 = vmatmul.mubr.bf16.gmra.mrb[0].mxu0 %v2218
        %v3149 = vpop.f32.mrb[0].mxu0
        %v3150 = vadd.f32 %v3037, %v3149
        %v3151 = vpop.f32.mrb[0].mxu0
        %v3152 = vadd.f32 %v3039, %v3151
        %v3153 = vpop.f32.mrb[0].mxu0
        %v3154 = vadd.f32 %v3041, %v3153
        %v3155 = vpop.f32.mrb[0].mxu0
        %v3156 = vadd.f32 %v3043, %v3155
        %3157 = vmatprep.mubr.bf16.mxu0 %v2226
        %3158 = vmatmul.mubr.bf16.gmra.mrb[0].mxu0 %v2225
        %v3159 = vpop.f32.mrb[0].mxu0
        %v3160 = vadd.f32 %v3047, %v3159
        %v3161 = vpop.f32.mrb[0].mxu0
        %v3162 = vadd.f32 %v3049, %v3161
        %v3163 = vpop.f32.mrb[0].mxu0
        %v3164 = vadd.f32 %v3051, %v3163
        %v3165 = vpop.f32.mrb[0].mxu0
        %v3166 = vadd.f32 %v3053, %v3165
        %3167 = vmatprep.mubr.bf16.mxu0 %v2233
        %3168 = vmatmul.mubr.bf16.gmra.mrb[0].mxu0 %v2232
        %v3169 = vpop.f32.mrb[0].mxu0
        %v3170 = vadd.f32 %v3057, %v3169
        %v3171 = vpop.f32.mrb[0].mxu0
        %v3172 = vadd.f32 %v3059, %v3171
        %v3173 = vpop.f32.mrb[0].mxu0
        %v3174 = vadd.f32 %v3061, %v3173
        %v3175 = vpop.f32.mrb[0].mxu0
        %v3176 = vadd.f32 %v3063, %v3175
        %3177 = vmatprep.mubr.bf16.mxu0 %v2240
        %3178 = vmatmul.mubr.bf16.gmra.mrb[0].mxu0 %v2239
        %v3179 = vpop.f32.mrb[0].mxu0
        %v3180 = vadd.f32 %v3067, %v3179
        %v3181 = vpop.f32.mrb[0].mxu0
        %v3182 = vadd.f32 %v3069, %v3181
        %v3183 = vpop.f32.mrb[0].mxu0
        %v3184 = vadd.f32 %v3071, %v3183
        %v3185 = vpop.f32.mrb[0].mxu0
        %v3186 = vadd.f32 %v3073, %v3185
        %3187 = vmatprep.mubr.bf16.mxu0 %v2247
        %3188 = vmatmul.mubr.bf16.gmra.mrb[0].mxu0 %v2246
        %v3189 = vpop.f32.mrb[0].mxu0
        %v3190 = vadd.f32 %v3077, %v3189
        %v3191 = vpop.f32.mrb[0].mxu0
        %v3192 = vadd.f32 %v3079, %v3191
        %v3193 = vpop.f32.mrb[0].mxu0
        %v3194 = vadd.f32 %v3081, %v3193
        %v3195 = vpop.f32.mrb[0].mxu0
        %v3196 = vadd.f32 %v3083, %v3195
        %3197 = vmatprep.mubr.bf16.mxu0 %v2254
        %3198 = vmatmul.mubr.bf16.gmra.mrb[0].mxu0 %v2253
        %v3199 = vpop.f32.mrb[0].mxu0
        %v3200 = vadd.f32 %v3087, %v3199
        %v3201 = vpop.f32.mrb[0].mxu0
        %v3202 = vadd.f32 %v3089, %v3201
        %v3203 = vpop.f32.mrb[0].mxu0
        %v3204 = vadd.f32 %v3091, %v3203
        %v3205 = vpop.f32.mrb[0].mxu0
        %v3206 = vadd.f32 %v3093, %v3205
        %3207 = vdwg.mxu0
        %3208 = vmatprep.subr.bf16.mxu0 %v2725
        %3209 = vmatpush1.bf16.msra.mxu0 %v2724
        %3210 = vmatprep.subr.bf16.mxu0 %v2727
        %3211 = vmatpush1.bf16.msra.mxu0 %v2726
        %3212 = vmatprep.subr.bf16.mxu0 %v2729
        %3213 = vmatpush1.bf16.msra.mxu0 %v2728
        %3214 = vmatprep.subr.bf16.mxu0 %v2731
        %3215 = vmatpush1.bf16.msra.mxu0 %v2730
        %3216 = vmatprep.subr.bf16.mxu0 %v2733
        %3217 = vmatpush1.bf16.msra.mxu0 %v2732
        %3218 = vmatprep.subr.bf16.mxu0 %v2735
        %3219 = vmatpush1.bf16.msra.mxu0 %v2734
        %3220 = vmatprep.subr.bf16.mxu0 0
        %3221 = vmatpush1.bf16.msra.mxu0 0
        %3222 = vmatprep.subr.bf16.mxu0 0
        %3223 = vmatpush1.bf16.msra.mxu0 0
        %3224 = vmatprep.subr.bf16.mxu0 0
        %3225 = vmatpush1.bf16.msra.mxu0 0
        %3226 = vmatprep.subr.bf16.mxu0 0
        %3227 = vmatpush1.bf16.msra.mxu0 0
        %3228 = vmatprep.subr.bf16.mxu0 0
        %3229 = vmatpush1.bf16.msra.mxu0 0
        %3230 = vmatprep.subr.bf16.mxu0 0
        %3231 = vmatpush1.bf16.msra.mxu0 0
        %3232 = vmatprep.subr.bf16.mxu0 0
        %3233 = vmatpush1.bf16.msra.mxu0 0
        %3234 = vmatprep.subr.bf16.mxu0 0
        %3235 = vmatpush1.bf16.msra.mxu0 0
        %3236 = vmatprep.subr.bf16.mxu0 0
        %3237 = vmatpush1.bf16.msra.mxu0 0
        %3238 = vmatprep.subr.bf16.mxu0 0
        %3239 = vmatpush1.bf16.msra.mxu0 0
        %3240 = vmatprep.mubr.bf16.mxu0 0
        %3241 = vmatmul.mubr.bf16.gmra.mrb[0].mxu0 %v2846
        %v3242 = vpop.f32.mrb[0].mxu0
        %v3243 = vadd.f32 %v3130, %v3242
        %v3244 = vpop.f32.mrb[0].mxu0
        %v3245 = vadd.f32 %v3132, %v3244
        %v3246 = vpop.f32.mrb[0].mxu0
        %v3247 = vadd.f32 %v3134, %v3246
        %v3248 = vpop.f32.mrb[0].mxu0
        %v3249 = vadd.f32 %v3136, %v3248
        %3250 = vmatprep.mubr.bf16.mxu0 0
        %3251 = vmatmul.mubr.bf16.gmra.mrb[0].mxu0 %v2849
        %v3252 = vpop.f32.mrb[0].mxu0
        %v3253 = vadd.f32 %v3140, %v3252
        %v3254 = vpop.f32.mrb[0].mxu0
        %v3255 = vadd.f32 %v3142, %v3254
        %v3256 = vpop.f32.mrb[0].mxu0
        %v3257 = vadd.f32 %v3144, %v3256
        %v3258 = vpop.f32.mrb[0].mxu0
        %v3259 = vadd.f32 %v3146, %v3258
        %3260 = vmatprep.mubr.bf16.mxu0 0
        %3261 = vmatmul.mubr.bf16.gmra.mrb[0].mxu0 %v2852
        %v3262 = vpop.f32.mrb[0].mxu0
        %v3263 = vadd.f32 %v3150, %v3262
        %v3264 = vpop.f32.mrb[0].mxu0
        %v3265 = vadd.f32 %v3152, %v3264
        %v3266 = vpop.f32.mrb[0].mxu0
        %v3267 = vadd.f32 %v3154, %v3266
        %v3268 = vpop.f32.mrb[0].mxu0
        %v3269 = vadd.f32 %v3156, %v3268
        %3270 = vmatprep.mubr.bf16.mxu0 0
        %3271 = vmatmul.mubr.bf16.gmra.mrb[0].mxu0 %v2855
        %v3272 = vpop.f32.mrb[0].mxu0
        %v3273 = vadd.f32 %v3160, %v3272
        %v3274 = vpop.f32.mrb[0].mxu0
        %v3275 = vadd.f32 %v3162, %v3274
        %v3276 = vpop.f32.mrb[0].mxu0
        %v3277 = vadd.f32 %v3164, %v3276
        %v3278 = vpop.f32.mrb[0].mxu0
        %v3279 = vadd.f32 %v3166, %v3278
        %3280 = vmatprep.mubr.bf16.mxu0 0
        %3281 = vmatmul.mubr.bf16.gmra.mrb[0].mxu0 %v2858
        %v3282 = vpop.f32.mrb[0].mxu0
        %v3283 = vadd.f32 %v3170, %v3282
        %v3284 = vpop.f32.mrb[0].mxu0
        %v3285 = vadd.f32 %v3172, %v3284
        %v3286 = vpop.f32.mrb[0].mxu0
        %v3287 = vadd.f32 %v3174, %v3286
        %v3288 = vpop.f32.mrb[0].mxu0
        %v3289 = vadd.f32 %v3176, %v3288
        %3290 = vmatprep.mubr.bf16.mxu0 0
        %3291 = vmatmul.mubr.bf16.gmra.mrb[0].mxu0 %v2861
        %v3292 = vpop.f32.mrb[0].mxu0
        %v3293 = vadd.f32 %v3180, %v3292
        %v3294 = vpop.f32.mrb[0].mxu0
        %v3295 = vadd.f32 %v3182, %v3294
        %v3296 = vpop.f32.mrb[0].mxu0
        %v3297 = vadd.f32 %v3184, %v3296
        %v3298 = vpop.f32.mrb[0].mxu0
        %v3299 = vadd.f32 %v3186, %v3298
        %3300 = vmatprep.mubr.bf16.mxu0 0
        %3301 = vmatmul.mubr.bf16.gmra.mrb[0].mxu0 %v2864
        %v3302 = vpop.f32.mrb[0].mxu0
        %v3303 = vadd.f32 %v3190, %v3302
        %v3304 = vpop.f32.mrb[0].mxu0
        %v3305 = vadd.f32 %v3192, %v3304
        %v3306 = vpop.f32.mrb[0].mxu0
        %v3307 = vadd.f32 %v3194, %v3306
        %v3308 = vpop.f32.mrb[0].mxu0
        %v3309 = vadd.f32 %v3196, %v3308
        %3310 = vmatprep.mubr.bf16.mxu0 0
        %3311 = vmatmul.mubr.bf16.gmra.mrb[0].mxu0 %v2867
        %v3312 = vpop.f32.mrb[0].mxu0
        %v3313 = vadd.f32 %v3200, %v3312
        %v3314 = vpop.f32.mrb[0].mxu0
        %v3315 = vadd.f32 %v3202, %v3314
        %v3316 = vpop.f32.mrb[0].mxu0
        %v3317 = vadd.f32 %v3204, %v3316
        %v3318 = vpop.f32.mrb[0].mxu0
        %v3319 = vadd.f32 %v3206, %v3318
        %3320 = vdwg.mxu0
        %vm3321 = vcmask 556032
        %v3322 = vsel %vm3321, %v3245, 0.0
        %v3323 = vadd.f32 %v3243, %v3322
        %3324 = vadd.xlane.f32.xlu0 %v3323
        %v3325 = vpop.xlane.xlu0 %3324
        %v3326 = vsel %vm3321, %v3249, 0.0
        %v3327 = vadd.f32 %v3247, %v3326
        %3328 = vadd.xlane.f32.xlu0 %v3327
        %v3329 = vpop.xlane.xlu0 %3328
        %v3330 = vsel %vm3321, %v3255, 0.0
        %v3331 = vadd.f32 %v3253, %v3330
        %3332 = vadd.xlane.f32.xlu0 %v3331
        %v3333 = vpop.xlane.xlu0 %3332
        %v3334 = vsel %vm3321, %v3259, 0.0
        %v3335 = vadd.f32 %v3257, %v3334
        %3336 = vadd.xlane.f32.xlu0 %v3335
        %v3337 = vpop.xlane.xlu0 %3336
        %v3338 = vsel %vm3321, %v3265, 0.0
        %v3339 = vadd.f32 %v3263, %v3338
        %3340 = vadd.xlane.f32.xlu0 %v3339
        %v3341 = vpop.xlane.xlu0 %3340
        %v3342 = vsel %vm3321, %v3269, 0.0
        %v3343 = vadd.f32 %v3267, %v3342
        %3344 = vadd.xlane.f32.xlu0 %v3343
        %v3345 = vpop.xlane.xlu0 %3344
        %v3346 = vsel %vm3321, %v3275, 0.0
        %v3347 = vadd.f32 %v3273, %v3346
        %3348 = vadd.xlane.f32.xlu0 %v3347
        %v3349 = vpop.xlane.xlu0 %3348
        %v3350 = vsel %vm3321, %v3279, 0.0
        %v3351 = vadd.f32 %v3277, %v3350
        %3352 = vadd.xlane.f32.xlu0 %v3351
        %v3353 = vpop.xlane.xlu0 %3352
        %v3354 = vsel %vm3321, %v3285, 0.0
        %v3355 = vadd.f32 %v3283, %v3354
        %3356 = vadd.xlane.f32.xlu0 %v3355
        %v3357 = vpop.xlane.xlu0 %3356
        %v3358 = vsel %vm3321, %v3289, 0.0
        %v3359 = vadd.f32 %v3287, %v3358
        %3360 = vadd.xlane.f32.xlu0 %v3359
        %v3361 = vpop.xlane.xlu0 %3360
        %v3362 = vsel %vm3321, %v3295, 0.0
        %v3363 = vadd.f32 %v3293, %v3362
        %3364 = vadd.xlane.f32.xlu0 %v3363
        %v3365 = vpop.xlane.xlu0 %3364
        %v3366 = vsel %vm3321, %v3299, 0.0
        %v3367 = vadd.f32 %v3297, %v3366
        %3368 = vadd.xlane.f32.xlu0 %v3367
        %v3369 = vpop.xlane.xlu0 %3368
        %v3370 = vsel %vm3321, %v3305, 0.0
        %v3371 = vadd.f32 %v3303, %v3370
        %3372 = vadd.xlane.f32.xlu0 %v3371
        %v3373 = vpop.xlane.xlu0 %3372
        %v3374 = vsel %vm3321, %v3309, 0.0
        %v3375 = vadd.f32 %v3307, %v3374
        %3376 = vadd.xlane.f32.xlu0 %v3375
        %v3377 = vpop.xlane.xlu0 %3376
        %v3378 = vsel %vm3321, %v3315, 0.0
        %v3379 = vadd.f32 %v3313, %v3378
        %3380 = vadd.xlane.f32.xlu0 %v3379
        %v3381 = vpop.xlane.xlu0 %3380
        %v3382 = vsel %vm3321, %v3319, 0.0
        %v3383 = vadd.f32 %v3317, %v3382
        %3384 = vadd.xlane.f32.xlu0 %v3383
        %v3385 = vpop.xlane.xlu0 %3384
        %v3386 = vmul.f32 %v3325, 0.0051020407
        %v3387 = vmul.f32 %v3329, 0.0051020407
        %v3388 = vmul.f32 %v3333, 0.0051020407
        %v3389 = vmul.f32 %v3337, 0.0051020407
        %v3390 = vmul.f32 %v3341, 0.0051020407
        %v3391 = vmul.f32 %v3345, 0.0051020407
        %v3392 = vmul.f32 %v3349, 0.0051020407
        %v3393 = vmul.f32 %v3353, 0.0051020407
        %v3394 = vmul.f32 %v3357, 0.0051020407
        %v3395 = vmul.f32 %v3361, 0.0051020407
        %v3396 = vmul.f32 %v3365, 0.0051020407
        %v3397 = vmul.f32 %v3369, 0.0051020407
        %v3398 = vmul.f32 %v3373, 0.0051020407
        %v3399 = vmul.f32 %v3377, 0.0051020407
        %v3400 = vmul.f32 %v3381, 0.0051020407
        %v3401 = vmul.f32 %v3385, 0.0051020407
        %v3402 = vmul.f32 %v3243, %v3243
        %v3403 = vmul.f32 %v3245, %v3245
        %v3404 = vmul.f32 %v3247, %v3247
        %v3405 = vmul.f32 %v3249, %v3249
        %v3406 = vmul.f32 %v3253, %v3253
        %v3407 = vmul.f32 %v3255, %v3255
        %v3408 = vmul.f32 %v3257, %v3257
        %v3409 = vmul.f32 %v3259, %v3259
        %v3410 = vmul.f32 %v3263, %v3263
        %v3411 = vmul.f32 %v3265, %v3265
        %v3412 = vmul.f32 %v3267, %v3267
        %v3413 = vmul.f32 %v3269, %v3269
        %v3414 = vmul.f32 %v3273, %v3273
        %v3415 = vmul.f32 %v3275, %v3275
        %v3416 = vmul.f32 %v3277, %v3277
        %v3417 = vmul.f32 %v3279, %v3279
        %v3418 = vmul.f32 %v3283, %v3283
        %v3419 = vmul.f32 %v3285, %v3285
        %v3420 = vmul.f32 %v3287, %v3287
        %v3421 = vmul.f32 %v3289, %v3289
        %v3422 = vmul.f32 %v3293, %v3293
        %v3423 = vmul.f32 %v3295, %v3295
        %v3424 = vmul.f32 %v3297, %v3297
        %v3425 = vmul.f32 %v3299, %v3299
        %v3426 = vmul.f32 %v3303, %v3303
        %v3427 = vmul.f32 %v3305, %v3305
        %v3428 = vmul.f32 %v3307, %v3307
        %v3429 = vmul.f32 %v3309, %v3309
        %v3430 = vmul.f32 %v3313, %v3313
        %v3431 = vmul.f32 %v3315, %v3315
        %v3432 = vmul.f32 %v3317, %v3317
        %v3433 = vmul.f32 %v3319, %v3319
        %v3434 = vsel %vm3321, %v3403, 0.0
        %v3435 = vadd.f32 %v3402, %v3434
        %3436 = vadd.xlane.f32.xlu0 %v3435
        %v3437 = vpop.xlane.xlu0 %3436
        %v3438 = vsel %vm3321, %v3405, 0.0
        %v3439 = vadd.f32 %v3404, %v3438
        %3440 = vadd.xlane.f32.xlu0 %v3439
        %v3441 = vpop.xlane.xlu0 %3440
        %v3442 = vsel %vm3321, %v3407, 0.0
        %v3443 = vadd.f32 %v3406, %v3442
        %3444 = vadd.xlane.f32.xlu0 %v3443
        %v3445 = vpop.xlane.xlu0 %3444
        %v3446 = vsel %vm3321, %v3409, 0.0
        %v3447 = vadd.f32 %v3408, %v3446
        %3448 = vadd.xlane.f32.xlu0 %v3447
        %v3449 = vpop.xlane.xlu0 %3448
        %v3450 = vsel %vm3321, %v3411, 0.0
        %v3451 = vadd.f32 %v3410, %v3450
        %3452 = vadd.xlane.f32.xlu0 %v3451
        %v3453 = vpop.xlane.xlu0 %3452
        %v3454 = vsel %vm3321, %v3413, 0.0
        %v3455 = vadd.f32 %v3412, %v3454
        %3456 = vadd.xlane.f32.xlu0 %v3455
        %v3457 = vpop.xlane.xlu0 %3456
        %v3458 = vsel %vm3321, %v3415, 0.0
        %v3459 = vadd.f32 %v3414, %v3458
        %3460 = vadd.xlane.f32.xlu0 %v3459
        %v3461 = vpop.xlane.xlu0 %3460
        %v3462 = vsel %vm3321, %v3417, 0.0
        %v3463 = vadd.f32 %v3416, %v3462
        %3464 = vadd.xlane.f32.xlu0 %v3463
        %v3465 = vpop.xlane.xlu0 %3464
        %v3466 = vsel %vm3321, %v3419, 0.0
        %v3467 = vadd.f32 %v3418, %v3466
        %3468 = vadd.xlane.f32.xlu0 %v3467
        %v3469 = vpop.xlane.xlu0 %3468
        %v3470 = vsel %vm3321, %v3421, 0.0
        %v3471 = vadd.f32 %v3420, %v3470
        %3472 = vadd.xlane.f32.xlu0 %v3471
        %v3473 = vpop.xlane.xlu0 %3472
        %v3474 = vsel %vm3321, %v3423, 0.0
        %v3475 = vadd.f32 %v3422, %v3474
        %3476 = vadd.xlane.f32.xlu0 %v3475
        %v3477 = vpop.xlane.xlu0 %3476
        %v3478 = vsel %vm3321, %v3425, 0.0
        %v3479 = vadd.f32 %v3424, %v3478
        %3480 = vadd.xlane.f32.xlu0 %v3479
        %v3481 = vpop.xlane.xlu0 %3480
        %v3482 = vsel %vm3321, %v3427, 0.0
        %v3483 = vadd.f32 %v3426, %v3482
        %3484 = vadd.xlane.f32.xlu0 %v3483
        %v3485 = vpop.xlane.xlu0 %3484
        %v3486 = vsel %vm3321, %v3429, 0.0
        %v3487 = vadd.f32 %v3428, %v3486
        %3488 = vadd.xlane.f32.xlu0 %v3487
        %v3489 = vpop.xlane.xlu0 %3488
        %v3490 = vsel %vm3321, %v3431, 0.0
        %v3491 = vadd.f32 %v3430, %v3490
        %3492 = vadd.xlane.f32.xlu0 %v3491
        %v3493 = vpop.xlane.xlu0 %3492
        %v3494 = vsel %vm3321, %v3433, 0.0
        %v3495 = vadd.f32 %v3432, %v3494
        %3496 = vadd.xlane.f32.xlu0 %v3495
        %v3497 = vpop.xlane.xlu0 %3496
        %v3498 = vmul.f32 %v3437, 0.0051020407
        %v3499 = vmul.f32 %v3441, 0.0051020407
        %v3500 = vmul.f32 %v3445, 0.0051020407
        %v3501 = vmul.f32 %v3449, 0.0051020407
        %v3502 = vmul.f32 %v3453, 0.0051020407
        %v3503 = vmul.f32 %v3457, 0.0051020407
        %v3504 = vmul.f32 %v3461, 0.0051020407
        %v3505 = vmul.f32 %v3465, 0.0051020407
        %v3506 = vmul.f32 %v3469, 0.0051020407
        %v3507 = vmul.f32 %v3473, 0.0051020407
        %v3508 = vmul.f32 %v3477, 0.0051020407
        %v3509 = vmul.f32 %v3481, 0.0051020407
        %v3510 = vmul.f32 %v3485, 0.0051020407
        %v3511 = vmul.f32 %v3489, 0.0051020407
        %v3512 = vmul.f32 %v3493, 0.0051020407
        %v3513 = vmul.f32 %v3497, 0.0051020407
        %v3514 = vmul.f32 %v3386, %v3386
        %v3515 = vmul.f32 %v3387, %v3387
        %v3516 = vmul.f32 %v3388, %v3388
        %v3517 = vmul.f32 %v3389, %v3389
        %v3518 = vmul.f32 %v3390, %v3390
        %v3519 = vmul.f32 %v3391, %v3391
        %v3520 = vmul.f32 %v3392, %v3392
        %v3521 = vmul.f32 %v3393, %v3393
        %v3522 = vmul.f32 %v3394, %v3394
        %v3523 = vmul.f32 %v3395, %v3395
        %v3524 = vmul.f32 %v3396, %v3396
        %v3525 = vmul.f32 %v3397, %v3397
        %v3526 = vmul.f32 %v3398, %v3398
        %v3527 = vmul.f32 %v3399, %v3399
        %v3528 = vmul.f32 %v3400, %v3400
        %v3529 = vmul.f32 %v3401, %v3401
        %v3530 = vsub.f32 %v3498, %v3514
        %v3531 = vsub.f32 %v3499, %v3515
        %v3532 = vsub.f32 %v3500, %v3516
        %v3533 = vsub.f32 %v3501, %v3517
        %v3534 = vsub.f32 %v3502, %v3518
        %v3535 = vsub.f32 %v3503, %v3519
        %v3536 = vsub.f32 %v3504, %v3520
        %v3537 = vsub.f32 %v3505, %v3521
        %v3538 = vsub.f32 %v3506, %v3522
        %v3539 = vsub.f32 %v3507, %v3523
        %v3540 = vsub.f32 %v3508, %v3524
        %v3541 = vsub.f32 %v3509, %v3525
        %v3542 = vsub.f32 %v3510, %v3526
        %v3543 = vsub.f32 %v3511, %v3527
        %v3544 = vsub.f32 %v3512, %v3528
        %v3545 = vsub.f32 %v3513, %v3529
        %v3546 = vadd.f32 %v3530, 1e-05
        %v3547 = vadd.f32 %v3531, 1e-05
        %v3548 = vadd.f32 %v3532, 1e-05
        %v3549 = vadd.f32 %v3533, 1e-05
        %v3550 = vadd.f32 %v3534, 1e-05
        %v3551 = vadd.f32 %v3535, 1e-05
        %v3552 = vadd.f32 %v3536, 1e-05
        %v3553 = vadd.f32 %v3537, 1e-05
        %v3554 = vadd.f32 %v3538, 1e-05
        %v3555 = vadd.f32 %v3539, 1e-05
        %v3556 = vadd.f32 %v3540, 1e-05
        %v3557 = vadd.f32 %v3541, 1e-05
        %v3558 = vadd.f32 %v3542, 1e-05
        %v3559 = vadd.f32 %v3543, 1e-05
        %v3560 = vadd.f32 %v3544, 1e-05
        %v3561 = vadd.f32 %v3545, 1e-05
        %v3562 = vrsqrt.pop %v3546
        %v3563 = vrsqrt.pop %v3547
        %v3564 = vrsqrt.pop %v3548
        %v3565 = vrsqrt.pop %v3549
        %v3566 = vrsqrt.pop %v3550
        %v3567 = vrsqrt.pop %v3551
        %v3568 = vrsqrt.pop %v3552
        %v3569 = vrsqrt.pop %v3553
        %v3570 = vrsqrt.pop %v3554
        %v3571 = vrsqrt.pop %v3555
        %v3572 = vrsqrt.pop %v3556
        %v3573 = vrsqrt.pop %v3557
        %v3574 = vrsqrt.pop %v3558
        %v3575 = vrsqrt.pop %v3559
        %v3576 = vrsqrt.pop %v3560
        %v3577 = vrsqrt.pop %v3561
        %v3578 = vld [vmem:[%s313] sm:$0xff]
        %v3579 = vld [vmem:[%s313 + $0x8] sm:$0xff]
        %v3580 = vld [vmem:[%s313 + $0x10] sm:$0xff]
        %v3581 = vld [vmem:[%s313 + $0x18] sm:$0xff]
        %v3582 = vld [vmem:[%s313 + $0x20] sm:$0xff]
        %v3583 = vld [vmem:[%s313 + $0x28] sm:$0xff]
        %v3584 = vld [vmem:[%s313 + $0x30] sm:$0xff]
        %v3585 = vld [vmem:[%s313 + $0x38] sm:$0xff]
        %v3586 = vld [vmem:[%s313 + $0x40] sm:$0xff]
        %v3587 = vld [vmem:[%s313 + $0x48] sm:$0xff]
        %v3588 = vld [vmem:[%s313 + $0x50] sm:$0xff]
        %v3589 = vld [vmem:[%s313 + $0x58] sm:$0xff]
        %v3590 = vld [vmem:[%s313 + $0x60] sm:$0xff]
        %v3591 = vld [vmem:[%s313 + $0x68] sm:$0xff]
        %v3592 = vld [vmem:[%s313 + $0x70] sm:$0xff]
        %v3593 = vld [vmem:[%s313 + $0x78] sm:$0xff]
        %v3594 = vmul.f32 %v3562, %v3578
        %v3595 = vmul.f32 %v3563, %v3579
        %v3596 = vmul.f32 %v3564, %v3580
        %v3597 = vmul.f32 %v3565, %v3581
        %v3598 = vmul.f32 %v3566, %v3582
        %v3599 = vmul.f32 %v3567, %v3583
        %v3600 = vmul.f32 %v3568, %v3584
        %v3601 = vmul.f32 %v3569, %v3585
        %v3602 = vmul.f32 %v3570, %v3586
        %v3603 = vmul.f32 %v3571, %v3587
        %v3604 = vmul.f32 %v3572, %v3588
        %v3605 = vmul.f32 %v3573, %v3589
        %v3606 = vmul.f32 %v3574, %v3590
        %v3607 = vmul.f32 %v3575, %v3591
        %v3608 = vmul.f32 %v3576, %v3592
        %v3609 = vmul.f32 %v3577, %v3593
        %v3610 = vld [vmem:[%s327] sm:$0xff]
        %v3611 = vld [vmem:[%s327 + $0x8] sm:$0xff]
        %v3612 = vld [vmem:[%s327 + $0x10] sm:$0xff]
        %v3613 = vld [vmem:[%s327 + $0x18] sm:$0xff]
        %v3614 = vld [vmem:[%s327 + $0x20] sm:$0xff]
        %v3615 = vld [vmem:[%s327 + $0x28] sm:$0xff]
        %v3616 = vld [vmem:[%s327 + $0x30] sm:$0xff]
        %v3617 = vld [vmem:[%s327 + $0x38] sm:$0xff]
        %v3618 = vld [vmem:[%s327 + $0x40] sm:$0xff]
        %v3619 = vld [vmem:[%s327 + $0x48] sm:$0xff]
        %v3620 = vld [vmem:[%s327 + $0x50] sm:$0xff]
        %v3621 = vld [vmem:[%s327 + $0x58] sm:$0xff]
        %v3622 = vld [vmem:[%s327 + $0x60] sm:$0xff]
        %v3623 = vld [vmem:[%s327 + $0x68] sm:$0xff]
        %v3624 = vld [vmem:[%s327 + $0x70] sm:$0xff]
        %v3625 = vld [vmem:[%s327 + $0x78] sm:$0xff]
        %v3626 = vmul.f32 %v3386, %v3594
        %v3627 = vmul.f32 %v3387, %v3595
        %v3628 = vmul.f32 %v3388, %v3596
        %v3629 = vmul.f32 %v3389, %v3597
        %v3630 = vmul.f32 %v3390, %v3598
        %v3631 = vmul.f32 %v3391, %v3599
        %v3632 = vmul.f32 %v3392, %v3600
        %v3633 = vmul.f32 %v3393, %v3601
        %v3634 = vmul.f32 %v3394, %v3602
        %v3635 = vmul.f32 %v3395, %v3603
        %v3636 = vmul.f32 %v3396, %v3604
        %v3637 = vmul.f32 %v3397, %v3605
        %v3638 = vmul.f32 %v3398, %v3606
        %v3639 = vmul.f32 %v3399, %v3607
        %v3640 = vmul.f32 %v3400, %v3608
        %v3641 = vmul.f32 %v3401, %v3609
        %v3642 = vsub.f32 %v3610, %v3626
        %v3643 = vsub.f32 %v3611, %v3627
        %v3644 = vsub.f32 %v3612, %v3628
        %v3645 = vsub.f32 %v3613, %v3629
        %v3646 = vsub.f32 %v3614, %v3630
        %v3647 = vsub.f32 %v3615, %v3631
        %v3648 = vsub.f32 %v3616, %v3632
        %v3649 = vsub.f32 %v3617, %v3633
        %v3650 = vsub.f32 %v3618, %v3634
        %v3651 = vsub.f32 %v3619, %v3635
        %v3652 = vsub.f32 %v3620, %v3636
        %v3653 = vsub.f32 %v3621, %v3637
        %v3654 = vsub.f32 %v3622, %v3638
        %v3655 = vsub.f32 %v3623, %v3639
        %v3656 = vsub.f32 %v3624, %v3640
        %v3657 = vsub.f32 %v3625, %v3641
        %3659 = vset.pattern.permute.xlu0 0
        %3660 = vperm.xlu0 %3659, %v3594
        %v3661 = vpop.permute.xlu0 %3660
        %3664 = vset.pattern.permute.xlu0 0
        %3665 = vperm.xlu0 %3664, %v3595
        %v3666 = vpop.permute.xlu0 %3665
        %3669 = vset.pattern.permute.xlu0 0
        %3670 = vperm.xlu0 %3669, %v3596
        %v3671 = vpop.permute.xlu0 %3670
        %3674 = vset.pattern.permute.xlu0 0
        %3675 = vperm.xlu0 %3674, %v3597
        %v3676 = vpop.permute.xlu0 %3675
        %3679 = vset.pattern.permute.xlu0 0
        %3680 = vperm.xlu0 %3679, %v3598
        %v3681 = vpop.permute.xlu0 %3680
        %3684 = vset.pattern.permute.xlu0 0
        %3685 = vperm.xlu0 %3684, %v3599
        %v3686 = vpop.permute.xlu0 %3685
        %3689 = vset.pattern.permute.xlu0 0
        %3690 = vperm.xlu0 %3689, %v3600
        %v3691 = vpop.permute.xlu0 %3690
        %3694 = vset.pattern.permute.xlu0 0
        %3695 = vperm.xlu0 %3694, %v3601
        %v3696 = vpop.permute.xlu0 %3695
        %3699 = vset.pattern.permute.xlu0 0
        %3700 = vperm.xlu0 %3699, %v3602
        %v3701 = vpop.permute.xlu0 %3700
        %3704 = vset.pattern.permute.xlu0 0
        %3705 = vperm.xlu0 %3704, %v3603
        %v3706 = vpop.permute.xlu0 %3705
        %3709 = vset.pattern.permute.xlu0 0
        %3710 = vperm.xlu0 %3709, %v3604
        %v3711 = vpop.permute.xlu0 %3710
        %3714 = vset.pattern.permute.xlu0 0
        %3715 = vperm.xlu0 %3714, %v3605
        %v3716 = vpop.permute.xlu0 %3715
        %3719 = vset.pattern.permute.xlu0 0
        %3720 = vperm.xlu0 %3719, %v3606
        %v3721 = vpop.permute.xlu0 %3720
        %3724 = vset.pattern.permute.xlu0 0
        %3725 = vperm.xlu0 %3724, %v3607
        %v3726 = vpop.permute.xlu0 %3725
        %3729 = vset.pattern.permute.xlu0 0
        %3730 = vperm.xlu0 %3729, %v3608
        %v3731 = vpop.permute.xlu0 %3730
        %3734 = vset.pattern.permute.xlu0 0
        %3735 = vperm.xlu0 %3734, %v3609
        %v3736 = vpop.permute.xlu0 %3735
        %v3738 = vmul.f32 %v3243, %v3661
        %v3739 = vmul.f32 %v3245, %v3661
        %v3740 = vmul.f32 %v3247, %v3666
        %v3741 = vmul.f32 %v3249, %v3666
        %v3742 = vmul.f32 %v3253, %v3671
        %v3743 = vmul.f32 %v3255, %v3671
        %v3744 = vmul.f32 %v3257, %v3676
        %v3745 = vmul.f32 %v3259, %v3676
        %v3746 = vmul.f32 %v3263, %v3681
        %v3747 = vmul.f32 %v3265, %v3681
        %v3748 = vmul.f32 %v3267, %v3686
        %v3749 = vmul.f32 %v3269, %v3686
        %v3750 = vmul.f32 %v3273, %v3691
        %v3751 = vmul.f32 %v3275, %v3691
        %v3752 = vmul.f32 %v3277, %v3696
        %v3753 = vmul.f32 %v3279, %v3696
        %v3754 = vmul.f32 %v3283, %v3701
        %v3755 = vmul.f32 %v3285, %v3701
        %v3756 = vmul.f32 %v3287, %v3706
        %v3757 = vmul.f32 %v3289, %v3706
        %v3758 = vmul.f32 %v3293, %v3711
        %v3759 = vmul.f32 %v3295, %v3711
        %v3760 = vmul.f32 %v3297, %v3716
        %v3761 = vmul.f32 %v3299, %v3716
        %v3762 = vmul.f32 %v3303, %v3721
        %v3763 = vmul.f32 %v3305, %v3721
        %v3764 = vmul.f32 %v3307, %v3726
        %v3765 = vmul.f32 %v3309, %v3726
        %v3766 = vmul.f32 %v3313, %v3731
        %v3767 = vmul.f32 %v3315, %v3731
        %v3768 = vmul.f32 %v3317, %v3736
        %v3769 = vmul.f32 %v3319, %v3736
        %3771 = vset.pattern.permute.xlu0 0
        %3772 = vperm.xlu0 %3771, %v3642
        %v3773 = vpop.permute.xlu0 %3772
        %3776 = vset.pattern.permute.xlu0 0
        %3777 = vperm.xlu0 %3776, %v3643
        %v3778 = vpop.permute.xlu0 %3777
        %3781 = vset.pattern.permute.xlu0 0
        %3782 = vperm.xlu0 %3781, %v3644
        %v3783 = vpop.permute.xlu0 %3782
        %3786 = vset.pattern.permute.xlu0 0
        %3787 = vperm.xlu0 %3786, %v3645
        %v3788 = vpop.permute.xlu0 %3787
        %3791 = vset.pattern.permute.xlu0 0
        %3792 = vperm.xlu0 %3791, %v3646
        %v3793 = vpop.permute.xlu0 %3792
        %3796 = vset.pattern.permute.xlu0 0
        %3797 = vperm.xlu0 %3796, %v3647
        %v3798 = vpop.permute.xlu0 %3797
        %3801 = vset.pattern.permute.xlu0 0
        %3802 = vperm.xlu0 %3801, %v3648
        %v3803 = vpop.permute.xlu0 %3802
        %3806 = vset.pattern.permute.xlu0 0
        %3807 = vperm.xlu0 %3806, %v3649
        %v3808 = vpop.permute.xlu0 %3807
        %3811 = vset.pattern.permute.xlu0 0
        %3812 = vperm.xlu0 %3811, %v3650
        %v3813 = vpop.permute.xlu0 %3812
        %3816 = vset.pattern.permute.xlu0 0
        %3817 = vperm.xlu0 %3816, %v3651
        %v3818 = vpop.permute.xlu0 %3817
        %3821 = vset.pattern.permute.xlu0 0
        %3822 = vperm.xlu0 %3821, %v3652
        %v3823 = vpop.permute.xlu0 %3822
        %3826 = vset.pattern.permute.xlu0 0
        %3827 = vperm.xlu0 %3826, %v3653
        %v3828 = vpop.permute.xlu0 %3827
        %3831 = vset.pattern.permute.xlu0 0
        %3832 = vperm.xlu0 %3831, %v3654
        %v3833 = vpop.permute.xlu0 %3832
        %3836 = vset.pattern.permute.xlu0 0
        %3837 = vperm.xlu0 %3836, %v3655
        %v3838 = vpop.permute.xlu0 %3837
        %3841 = vset.pattern.permute.xlu0 0
        %3842 = vperm.xlu0 %3841, %v3656
        %v3843 = vpop.permute.xlu0 %3842
        %3846 = vset.pattern.permute.xlu0 0
        %3847 = vperm.xlu0 %3846, %v3657
        %v3848 = vpop.permute.xlu0 %3847
        %v3850 = vadd.f32 %v3738, %v3773
        %v3851 = vadd.f32 %v3739, %v3773
        %v3852 = vadd.f32 %v3740, %v3778
        %v3853 = vadd.f32 %v3741, %v3778
        %v3854 = vadd.f32 %v3742, %v3783
        %v3855 = vadd.f32 %v3743, %v3783
        %v3856 = vadd.f32 %v3744, %v3788
        %v3857 = vadd.f32 %v3745, %v3788
        %v3858 = vadd.f32 %v3746, %v3793
        %v3859 = vadd.f32 %v3747, %v3793
        %v3860 = vadd.f32 %v3748, %v3798
        %v3861 = vadd.f32 %v3749, %v3798
        %v3862 = vadd.f32 %v3750, %v3803
        %v3863 = vadd.f32 %v3751, %v3803
        %v3864 = vadd.f32 %v3752, %v3808
        %v3865 = vadd.f32 %v3753, %v3808
        %v3866 = vadd.f32 %v3754, %v3813
        %v3867 = vadd.f32 %v3755, %v3813
        %v3868 = vadd.f32 %v3756, %v3818
        %v3869 = vadd.f32 %v3757, %v3818
        %v3870 = vadd.f32 %v3758, %v3823
        %v3871 = vadd.f32 %v3759, %v3823
        %v3872 = vadd.f32 %v3760, %v3828
        %v3873 = vadd.f32 %v3761, %v3828
        %v3874 = vadd.f32 %v3762, %v3833
        %v3875 = vadd.f32 %v3763, %v3833
        %v3876 = vadd.f32 %v3764, %v3838
        %v3877 = vadd.f32 %v3765, %v3838
        %v3878 = vadd.f32 %v3766, %v3843
        %v3879 = vadd.f32 %v3767, %v3843
        %v3880 = vadd.f32 %v3768, %v3848
        %v3881 = vadd.f32 %v3769, %v3848
        %3882 = vst [vmem:[%s287] sm:$0xff] %v3850
        %3883 = vst.msk [vmem:[%s287 + $0x8] sm:$0xff] %vm3321, %v3851
        %3884 = vst [vmem:[%s287 + $0x10] sm:$0xff] %v3852
        %3885 = vst.msk [vmem:[%s287 + $0x18] sm:$0xff] %vm3321, %v3853
        %3886 = vst [vmem:[%s287 + $0x20] sm:$0xff] %v3854
        %3887 = vst.msk [vmem:[%s287 + $0x28] sm:$0xff] %vm3321, %v3855
        %3888 = vst [vmem:[%s287 + $0x30] sm:$0xff] %v3856
        %3889 = vst.msk [vmem:[%s287 + $0x38] sm:$0xff] %vm3321, %v3857
        %3890 = vst [vmem:[%s287 + $0x40] sm:$0xff] %v3858
        %3891 = vst.msk [vmem:[%s287 + $0x48] sm:$0xff] %vm3321, %v3859
        %3892 = vst [vmem:[%s287 + $0x50] sm:$0xff] %v3860
        %3893 = vst.msk [vmem:[%s287 + $0x58] sm:$0xff] %vm3321, %v3861
        %3894 = vst [vmem:[%s287 + $0x60] sm:$0xff] %v3862
        %3895 = vst.msk [vmem:[%s287 + $0x68] sm:$0xff] %vm3321, %v3863
        %3896 = vst [vmem:[%s287 + $0x70] sm:$0xff] %v3864
        %3897 = vst.msk [vmem:[%s287 + $0x78] sm:$0xff] %vm3321, %v3865
        %3898 = vst [vmem:[%s287 + $0x80] sm:$0xff] %v3866
        %3899 = vst.msk [vmem:[%s287 + $0x88] sm:$0xff] %vm3321, %v3867
        %3900 = vst [vmem:[%s287 + $0x90] sm:$0xff] %v3868
        %3901 = vst.msk [vmem:[%s287 + $0x98] sm:$0xff] %vm3321, %v3869
        %3902 = vst [vmem:[%s287 + $0xa0] sm:$0xff] %v3870
        %3903 = vst.msk [vmem:[%s287 + $0xa8] sm:$0xff] %vm3321, %v3871
        %3904 = vst [vmem:[%s287 + $0xb0] sm:$0xff] %v3872
        %3905 = vst.msk [vmem:[%s287 + $0xb8] sm:$0xff] %vm3321, %v3873
        %3906 = vst [vmem:[%s287 + $0xc0] sm:$0xff] %v3874
        %3907 = vst.msk [vmem:[%s287 + $0xc8] sm:$0xff] %vm3321, %v3875
        %3908 = vst [vmem:[%s287 + $0xd0] sm:$0xff] %v3876
        %3909 = vst.msk [vmem:[%s287 + $0xd8] sm:$0xff] %vm3321, %v3877
        %3910 = vst [vmem:[%s287 + $0xe0] sm:$0xff] %v3878
        %3911 = vst.msk [vmem:[%s287 + $0xe8] sm:$0xff] %vm3321, %v3879
        %3912 = vst [vmem:[%s287 + $0xf0] sm:$0xff] %v3880
        %3913 = vst.msk [vmem:[%s287 + $0xf8] sm:$0xff] %vm3321, %v3881
        %s3914 = sand.u32 %s144, 1
        %s3915 = sand.u32 %s144, 1
        %s3916 = smul.addr %s3915, 256
        %s3917 = scalar_lea.vmem [#allocation2], %s3916
        // Predicated region
        $region41: #{mul_conv1x1_bn.1} parent=39 // pred_check
          %p3918 = pneg %p154
        $region42: #{mul_conv1x1_bn.1} parent=39 // pred_check_branch
          %3920 = sbr.rel (%p3918) target = $region44
        $region43: #{mul_conv1x1_bn.1} parent=39 // pred_region
          %s3921 = smul.u32 16, %s16
          %s3922 = ssub.s32 25, %s3921
          %p3923 = scmp.lt.s32.totalorder %s3922, 16
          %s3924 = scalar_select %p3923, %s3922, 16
          %s3925 = smul.u32 128, %s3924
          %s3926 = smul.u32 %s3925, 2
          %p3927 = scmp.ne.s32.totalorder 0, %s3926
          %s3928 = smul.addr %s3921, 2
          %s3929 = smul.addr %s3928, 8
          %s3930 = scalar_lea.vmem %s5, %s3929
          // Predicated region
          $region45: #{mul_conv1x1_bn.1} parent=43 // pred_check
            %p3931 = pneg %p3927
          $region46: #{mul_conv1x1_bn.1} parent=43 // pred_check_branch
            %3933 = sbr.rel (%p3931) target = $region48
          $region47: #{mul_conv1x1_bn.1} parent=43 // pred_region
            // Predicated region
            $region49: #{mul_conv1x1_bn.1} parent=47 // pred_check
              _
            $region50: #{mul_conv1x1_bn.1} parent=47 // pred_check_branch
              %3935 = sbr.rel (0) target = $region52
            $region51: #{mul_conv1x1_bn.1} parent=47 // pred_region
              %s3936 = sshrl.u32 %s3924, 4
              // While loop
              $region53: #{mul_conv1x1_bn.1} parent=51 // loop_pre_header
                _
              $region54: #{mul_conv1x1_bn.1} parent=51 // loop_header
                %s3938 = sphi 0, %s3940
                %p3939 = scmp.ge.s32.totalorder %s3938, %s3936
                %s3943 = sphi 0, %s4012
                %s3944 = sphi %s3917, %s4015
                %s3945 = sphi %s3930, %s4016
              $region55: #{mul_conv1x1_bn.1} parent=51 // loop_header_branch
                %3942 = sbr.rel (%p3939) target = $region59
              $region56: #{mul_conv1x1_bn.1} parent=51 // loop_body
                %v3946 = vld [vmem:[%s3944] sm:$0xff]
                %3947 = vst [vmem:[%s3945] sm:$0xff] %v3946
                %v3948 = vld [vmem:[%s3944 + $0x10] sm:$0xff]
                %3949 = vst [vmem:[%s3945 + $0x10] sm:$0xff] %v3948
                %v3950 = vld [vmem:[%s3944 + $0x20] sm:$0xff]
                %3951 = vst [vmem:[%s3945 + $0x20] sm:$0xff] %v3950
                %v3952 = vld [vmem:[%s3944 + $0x30] sm:$0xff]
                %3953 = vst [vmem:[%s3945 + $0x30] sm:$0xff] %v3952
                %v3954 = vld [vmem:[%s3944 + $0x40] sm:$0xff]
                %3955 = vst [vmem:[%s3945 + $0x40] sm:$0xff] %v3954
                %v3956 = vld [vmem:[%s3944 + $0x50] sm:$0xff]
                %3957 = vst [vmem:[%s3945 + $0x50] sm:$0xff] %v3956
                %v3958 = vld [vmem:[%s3944 + $0x60] sm:$0xff]
                %3959 = vst [vmem:[%s3945 + $0x60] sm:$0xff] %v3958
                %v3960 = vld [vmem:[%s3944 + $0x70] sm:$0xff]
                %3961 = vst [vmem:[%s3945 + $0x70] sm:$0xff] %v3960
                %v3962 = vld [vmem:[%s3944 + $0x80] sm:$0xff]
                %3963 = vst [vmem:[%s3945 + $0x80] sm:$0xff] %v3962
                %v3964 = vld [vmem:[%s3944 + $0x90] sm:$0xff]
                %3965 = vst [vmem:[%s3945 + $0x90] sm:$0xff] %v3964
                %v3966 = vld [vmem:[%s3944 + $0xa0] sm:$0xff]
                %3967 = vst [vmem:[%s3945 + $0xa0] sm:$0xff] %v3966
                %v3968 = vld [vmem:[%s3944 + $0xb0] sm:$0xff]
                %3969 = vst [vmem:[%s3945 + $0xb0] sm:$0xff] %v3968
                %v3970 = vld [vmem:[%s3944 + $0xc0] sm:$0xff]
                %3971 = vst [vmem:[%s3945 + $0xc0] sm:$0xff] %v3970
                %v3972 = vld [vmem:[%s3944 + $0xd0] sm:$0xff]
                %3973 = vst [vmem:[%s3945 + $0xd0] sm:$0xff] %v3972
                %v3974 = vld [vmem:[%s3944 + $0xe0] sm:$0xff]
                %3975 = vst [vmem:[%s3945 + $0xe0] sm:$0xff] %v3974
                %v3976 = vld [vmem:[%s3944 + $0xf0] sm:$0xff]
                %3977 = vst [vmem:[%s3945 + $0xf0] sm:$0xff] %v3976
                %v3978 = vld [vmem:[%s3944 + $0x8] sm:$0xff]
                %3979 = vst [vmem:[%s3945 + $0x8] sm:$0xff] %v3978
                %v3980 = vld [vmem:[%s3944 + $0x18] sm:$0xff]
                %3981 = vst [vmem:[%s3945 + $0x18] sm:$0xff] %v3980
                %v3982 = vld [vmem:[%s3944 + $0x28] sm:$0xff]
                %3983 = vst [vmem:[%s3945 + $0x28] sm:$0xff] %v3982
                %v3984 = vld [vmem:[%s3944 + $0x38] sm:$0xff]
                %3985 = vst [vmem:[%s3945 + $0x38] sm:$0xff] %v3984
                %v3986 = vld [vmem:[%s3944 + $0x48] sm:$0xff]
                %3987 = vst [vmem:[%s3945 + $0x48] sm:$0xff] %v3986
                %v3988 = vld [vmem:[%s3944 + $0x58] sm:$0xff]
                %3989 = vst [vmem:[%s3945 + $0x58] sm:$0xff] %v3988
                %v3990 = vld [vmem:[%s3944 + $0x68] sm:$0xff]
                %3991 = vst [vmem:[%s3945 + $0x68] sm:$0xff] %v3990
                %v3992 = vld [vmem:[%s3944 + $0x78] sm:$0xff]
                %3993 = vst [vmem:[%s3945 + $0x78] sm:$0xff] %v3992
                %v3994 = vld [vmem:[%s3944 + $0x88] sm:$0xff]
                %3995 = vst [vmem:[%s3945 + $0x88] sm:$0xff] %v3994
                %v3996 = vld [vmem:[%s3944 + $0x98] sm:$0xff]
                %3997 = vst [vmem:[%s3945 + $0x98] sm:$0xff] %v3996
                %v3998 = vld [vmem:[%s3944 + $0xa8] sm:$0xff]
                %3999 = vst [vmem:[%s3945 + $0xa8] sm:$0xff] %v3998
                %v4000 = vld [vmem:[%s3944 + $0xb8] sm:$0xff]
                %4001 = vst [vmem:[%s3945 + $0xb8] sm:$0xff] %v4000
                %v4002 = vld [vmem:[%s3944 + $0xc8] sm:$0xff]
                %4003 = vst [vmem:[%s3945 + $0xc8] sm:$0xff] %v4002
                %v4004 = vld [vmem:[%s3944 + $0xd8] sm:$0xff]
                %4005 = vst [vmem:[%s3945 + $0xd8] sm:$0xff] %v4004
                %v4006 = vld [vmem:[%s3944 + $0xe8] sm:$0xff]
                %4007 = vst [vmem:[%s3945 + $0xe8] sm:$0xff] %v4006
                %v4008 = vld [vmem:[%s3944 + $0xf8] sm:$0xff]
                %4009 = vst [vmem:[%s3945 + $0xf8] sm:$0xff] %v4008
                %s4010 = sadd.s32 1, %s3943
                %p4011 = scmp.ge.s32.totalorder %s4010, %s3936
                %s4012 = scalar_select %p4011, 0, %s4010
                %s4013 = smul.u32 %s4012, 256
                %s4014 = smul.u32 %s4012, 256
                %s4015 = scalar_lea.vmem %s3917, %s4013 [#allocation2]
                %s4016 = scalar_lea.vmem %s3930, %s4014
              $region57: #{mul_conv1x1_bn.1} parent=51 // loop_footer
                %s3940 = sadd.s32 %s3938, 1
              $region58: #{mul_conv1x1_bn.1} parent=51 // loop_footer_branch
                %3937 = sbr.rel target = $region54
              $region59: #{mul_conv1x1_bn.1} parent=51 // loop_exit
                _
              %s4017 = sshrl.u32 %s3924, 4
              %s4018 = sand.u32 %s3924, 15
              %s4019 = smul.u32 %s4017, 16
              %s4020 = smul.u32 16, %s4019
              %s4021 = scalar_lea.vmem %s3917, %s4020 [#allocation2]
              %s4022 = smul.u32 16, %s4019
              %s4023 = scalar_lea.vmem %s3930, %s4022
              // While loop
              $region60: #{mul_conv1x1_bn.1} parent=51 // loop_pre_header
                _
              $region61: #{mul_conv1x1_bn.1} parent=51 // loop_header
                %s4025 = sphi 0, %s4027
                %p4026 = scmp.ge.s32.totalorder %s4025, %s4018
                %s4030 = sphi 0, %s4039
                %s4031 = sphi %s4021, %s4042
                %s4032 = sphi %s4023, %s4043
              $region62: #{mul_conv1x1_bn.1} parent=51 // loop_header_branch
                %4029 = sbr.rel (%p4026) target = $region66
              $region63: #{mul_conv1x1_bn.1} parent=51 // loop_body
                %v4033 = vld [vmem:[%s4031] sm:$0xff]
                %4034 = vst [vmem:[%s4032] sm:$0xff] %v4033
                %v4035 = vld [vmem:[%s4031 + $0x8] sm:$0xff]
                %4036 = vst [vmem:[%s4032 + $0x8] sm:$0xff] %v4035
                %s4037 = sadd.s32 1, %s4030
                %p4038 = scmp.ge.s32.totalorder %s4037, %s4018
                %s4039 = scalar_select %p4038, 0, %s4037
                %s4040 = smul.u32 %s4039, 16
                %s4041 = smul.u32 %s4039, 16
                %s4042 = scalar_lea.vmem %s4021, %s4040 [#allocation2]
                %s4043 = scalar_lea.vmem %s4023, %s4041
              $region64: #{mul_conv1x1_bn.1} parent=51 // loop_footer
                %s4027 = sadd.s32 %s4025, 1
              $region65: #{mul_conv1x1_bn.1} parent=51 // loop_footer_branch
                %4024 = sbr.rel target = $region61
              $region66: #{mul_conv1x1_bn.1} parent=51 // loop_exit
                _
            $region52: #{mul_conv1x1_bn.1} parent=47 // pred_fallthru
              _
            // Predicated region
            $region67: #{mul_conv1x1_bn.1} parent=47 // pred_check
              _
            $region68: #{mul_conv1x1_bn.1} parent=47 // pred_check_branch
              %4045 = sbr.rel target = $region70
            $region69: #{mul_conv1x1_bn.1} parent=47 // pred_region
              _
            $region70: #{mul_conv1x1_bn.1} parent=47 // pred_fallthru
              _
          $region48: #{mul_conv1x1_bn.1} parent=43 // pred_fallthru
            _
          %4046 = vnop
        $region44: #{mul_conv1x1_bn.1} parent=39 // pred_fallthru
          _
      $region40: #{mul_conv1x1_bn.1} parent=5 // pred_fallthru
        _
      %p4047 = scmp.le.s32.totalorder 2, %s11
      // Predicated region
      $region71: #{mul_conv1x1_bn.1} parent=5 // pred_check
        %p4048 = pneg %p4047
      $region72: #{mul_conv1x1_bn.1} parent=5 // pred_check_branch
        %4050 = sbr.rel (%p4048) target = $region74
      $region73: #{mul_conv1x1_bn.1} parent=5 // pred_region
        %s4051 = ssub.s32 %s11, 2
        // Predicated region
        $region75: #{mul_conv1x1_bn.1} parent=73 // pred_check
          %p4052 = pneg %p160
        $region76: #{mul_conv1x1_bn.1} parent=73 // pred_check_branch
          %4054 = sbr.rel (%p4052) target = $region78
        $region77: #{mul_conv1x1_bn.1} parent=73 // pred_region
          %s4055 = sand.u32 %s145, 1
          %s4056 = sand.u32 %s145, 1
          %s4057 = smul.addr %s4056, 256
          %s4058 = scalar_lea.vmem [#allocation2], %s4057
        $region78: #{mul_conv1x1_bn.1} parent=73 // pred_fallthru
          _
      $region74: #{mul_conv1x1_bn.1} parent=5 // pred_fallthru
        _
    $region6: #{mul_conv1x1_bn.1} parent=1 // loop_footer
      %s15 = sadd.s32 1, %s11
    $region7: #{mul_conv1x1_bn.1} parent=1 // loop_footer_branch
      %10 = sbr.rel target = $region3
    $region8: #{mul_conv1x1_bn.1} parent=1 // loop_exit
      _

</llo_original>
